<compile_context>
chip_gen: v7x
topology: tpu7x:2x2x1
jax: 0.10.0
libtpu: 0.0.40
codegen_flags: <defaults>
</compile_context>

<pallas_src>
import functools

import jax
import jax.numpy as jnp
from jax import lax
from jax.experimental import pallas as pl
from jax.experimental.pallas import tpu as pltpu

CIN = 64               # fixed by the module: SingleHead(64, ...)
COUT_FUSED = 2 * CIN   # cls features (64) | reg features (64)
N_OUT = 3              # [cls, reg_x, reg_y]


def _pick_tile_h(H, W, acc_budget_bytes=2 * 1024 * 1024):
    """Largest row-tile that divides H, keeps the f32 accumulator under budget and
    keeps tile_h*W a sublane multiple; prefers >=2 tiles so the grid has enough
    parallel entries for megacore even at batch=1."""
    cands = [t for t in range(1, H + 1)
             if H % t == 0
             and (t * W) % 8 == 0
             and COUT_FUSED * 4 * t * W <= acc_budget_bytes]
    if not cands:
        return H
    smaller = [t for t in cands if t < H]
    return max(smaller) if smaller else max(cands)


def _centernet_head_kernel(
    xp_ref,      # (1, (H+2)*W + 2, CIN) f32: H-padded, flattened NHWC input (+1 guard elem/side)
    colid_ref,   # (tile_h*W, 1) int32:  (flattened spatial index) % W for this tile
    w3_ref,      # (3, 3, CIN, 128)      fused 3x3 weights (compute dtype)
    b3_ref,      # (1, 128) f32          fused 3x3 bias
    w1_ref,      # (128, 3) f32          fused 1x1 weights  [cls | reg_x | reg_y]
    b1_ref,      # (1, 3)   f32          fused 1x1 bias
    out_ref,     # (1, tile_h*W, 3) f32  output tile: [sigmoid(cls), reg_x, reg_y]
    acc_ref,     # (tile_h*W, 128) f32   VMEM scratch accumulator
    *, W, tile_h, compute_dtype,
):
    h = pl.program_id(1)
    HW = tile_h * W
    row0 = h * HW
    if HW % 8 == 0:
        row0 = pl.multiple_of(row0, 8)

    col = colid_ref[...]             # (HW, 1)
    at_left = col == 0               # output col 0   -> its left neighbour is W-padding
    at_right = col == W - 1          # output col W-1 -> its right neighbour is W-padding

    # 3x3 conv for both heads at once: 9 (HW,64)x(64,128) MXU matmuls accumulated
    # into a VMEM f32 scratch.  dy walks the H-padded rows; dx walks the flattened
    # spatial axis (the row wrap-around it introduces is exactly what the
    # at_left/at_right masks zero out).
    for dy in range(3):
        for dx in range(3):
            xt = xp_ref[0, pl.ds(row0 + dy * W + dx, HW), :]    # (HW, 64) f32
            if dx == 0:
                xt = jnp.where(at_left, 0.0, xt)
            elif dx == 2:
                xt = jnp.where(at_right, 0.0, xt)
            contrib = jnp.dot(xt.astype(compute_dtype), w3_ref[dy, dx],
                              preferred_element_type=jnp.float32)
            if dy == 0 and dx == 0:
                acc_ref[...] = contrib
            else:
                acc_ref[...] += contrib

    feat = jnp.maximum(acc_ref[...] + b3_ref[...], 0.0)         # (HW, 128) f32

    # Fused 1x1 convs: one (HW,128)x(128,3) matmul; sigmoid only on the cls column.
    out3 = jnp.dot(feat, w1_ref[...], preferred_element_type=jnp.float32) + b1_ref[...]
    lane = lax.broadcasted_iota(jnp.int32, (HW, N_OUT), 1)
    out3 = jnp.where(lane == 0, jax.nn.sigmoid(out3), out3)
    out_ref[...] = out3.reshape(1, HW, N_OUT)


def centernet_head_pallas(x_nchw, params, *, compute_dtype=jnp.bfloat16,
                          acc_budget_bytes=2 * 1024 * 1024):
    """x_nchw: (N, 64, H, W) float32. Returns {'cls': (N,1,H,W), 'reg': (N,2,H,W)}."""
    N, C, H, W = x_nchw.shape
    assert C == CIN
    (w3c, b3c, w1c, b1c, w3r, b3r, w1r, b1r) = params

    # ---- fuse cls/reg parameters once (tiny, outside the kernel) ----
    w3f = jnp.concatenate([w3c, w3r], axis=3).astype(compute_dtype)            # (3,3,64,128)
    b3f = jnp.concatenate([b3c.reshape(1, CIN), b3r.reshape(1, CIN)], axis=1)  # (1,128)
    w1f = jnp.concatenate([
        jnp.concatenate([w1c, jnp.zeros((CIN, 2), jnp.float32)], axis=1),  # cls feats -> col 0
        jnp.concatenate([jnp.zeros((CIN, 1), jnp.float32), w1r], axis=1),  # reg feats -> cols 1:3
    ], axis=0)                                                             # (128,3)
    b1f = jnp.concatenate([b1c.reshape(1, 1), b1r.reshape(1, 2)], axis=1)  # (1,3)

    # ---- layout: NCHW -> flattened NHWC, H halo + 1 guard element per side.
    # The W-direction "same" padding is handled in-kernel (masks), so only H is padded.
    # TODO(synk): pull this transpose+pad HBM pass into the kernel (halo DMA straight
    # from the raw NCHW array) to make the head a single pass over HBM.
    x = jnp.transpose(x_nchw, (0, 2, 3, 1)).reshape(N, H * W, CIN)
    xp = jnp.pad(x, ((0, 0), (W + 1, W + 1), (0, 0)))           # (N, (H+2)*W + 2, 64)

    tile_h = _pick_tile_h(H, W, acc_budget_bytes)
    n_h = H // tile_h
    HW = tile_h * W

    colid = (jnp.arange(H * W, dtype=jnp.int32) % W).reshape(H * W, 1)

    kernel = functools.partial(_centernet_head_kernel,
                               W=W, tile_h=tile_h, compute_dtype=compute_dtype)

    # constant index maps -> weights are not re-DMA'd across grid steps
    # (pipeline_mode=pl.Buffered(1) would also drop the second weight buffer).
    const = lambda shape: pl.BlockSpec(shape, lambda b, h: (0,) * len(shape))

    out = pl.pallas_call(
        kernel,
        out_shape=jax.ShapeDtypeStruct((N, H * W, N_OUT), jnp.float32),
        grid_spec=pltpu.PrefetchScalarGridSpec(
            num_scalar_prefetch=0,
            grid=(N, n_h),
            in_specs=[
                # full padded image; block index is constant in h -> fetched once per batch elem
                pl.BlockSpec((1, (H + 2) * W + 2, CIN), lambda b, h: (b, 0, 0)),
                pl.BlockSpec((HW, 1), lambda b, h: (h, 0)),
                const((3, 3, CIN, COUT_FUSED)),
                const((1, COUT_FUSED)),
                const((COUT_FUSED, N_OUT)),
                const((1, N_OUT)),
            ],
            out_specs=pl.BlockSpec((1, HW, N_OUT), lambda b, h: (b, h, 0)),
            scratch_shapes=[pltpu.VMEM((HW, COUT_FUSED), jnp.float32)],
        ),
        compiler_params=pltpu.CompilerParams(
            dimension_semantics=("parallel", "parallel"),
            vmem_limit_bytes=32 * 1024 * 1024,
        ),
    )(xp, colid, w3f, b3f, w1f, b1f)

    # out: (N, H*W, 3) = [sigmoid(cls), reg_x, reg_y] in NHWC-flattened order.
    # TODO(synk): emit fully lane-dense NCHW-layout stores from the kernel (needs a
    # spatial-on-lanes formulation); the channel-minor store here is still 3 lanes wide.
    cls = out[:, :, 0].reshape(N, 1, H, W)
    reg = jnp.transpose(out[:, :, 1:3], (0, 2, 1)).reshape(N, 2, H, W)
    return {"cls": cls, "reg": reg}


def init_params(key):
    """Deterministic synthetic weights matching the PyTorch module's shapes.

    3x3 conv weights are stored HWIO (kh, kw, cin, cout), 1x1 weights as (cin, cout);
    PyTorch's OIHW layout is just a transpose of this.
    """
    ks = jax.random.split(key, 8)
    scale3 = 1.0 / (3 * 3 * CIN) ** 0.5
    scale1 = 1.0 / CIN ** 0.5
    w3c = jax.random.normal(ks[0], (3, 3, CIN, CIN), jnp.float32) * scale3
    b3c = jax.random.normal(ks[1], (CIN,), jnp.float32) * scale3
    w1c = jax.random.normal(ks[2], (CIN, 1), jnp.float32) * scale1
    b1c = jnp.full((1,), -2.19, jnp.float32)     # bias_fill=True, bias_value=-2.19
    w3r = jax.random.normal(ks[3], (3, 3, CIN, CIN), jnp.float32) * scale3
    b3r = jax.random.normal(ks[4], (CIN,), jnp.float32) * scale3
    w1r = jax.random.normal(ks[5], (CIN, 2), jnp.float32) * scale1
    b1r = jax.random.normal(ks[6], (2,), jnp.float32) * scale1
    return (w3c, b3c, w1c, b1c, w3r, b3r, w1r, b1r)


def _reference(x_nchw, params):
    """Pure-JAX reference (lax.conv) for verification."""
    (w3c, b3c, w1c, b1c, w3r, b3r, w1r, b1r) = params
    x = jnp.transpose(x_nchw, (0, 2, 3, 1))
    dn = lax.conv_dimension_numbers(x.shape, (3, 3, CIN, CIN),
                                    ("NHWC", "HWIO", "NHWC"))

    def head(w3, b3, w1, b1):
        f = lax.conv_general_dilated(x, w3, (1, 1), "SAME", dimension_numbers=dn)
        f = jnp.maximum(f + b3.reshape(1, 1, 1, CIN), 0.0)
        return jnp.einsum("nhwc,co->nhwo", f, w1) + b1.reshape(1, 1, 1, -1)

    cls = jax.nn.sigmoid(head(w3c, b3c, w1c, b1c))
    reg = head(w3r, b3r, w1r, b1r)
    return {"cls": jnp.transpose(cls, (0, 3, 1, 2)),
            "reg": jnp.transpose(reg, (0, 3, 1, 2))}


if __name__ == "__main__":
    key = jax.random.PRNGKey(0)
    kx, kp = jax.random.split(key)
    N, H, W = 2, 16, 16
    x = jax.random.normal(kx, (N, CIN, H, W), jnp.float32)   # NCHW, like PyTorch
    params = init_params(kp)

    ref = _reference(x, params)

    # exact-dtype path: closely matches the f32 module numerics
    out_f32 = centernet_head_pallas(x, params, compute_dtype=jnp.float32)
    jax.block_until_ready(out_f32)
    assert out_f32["cls"].shape == (N, 1, H, W)
    assert out_f32["reg"].shape == (N, 2, H, W)
    assert jnp.max(jnp.abs(out_f32["cls"] - ref["cls"])) < 2e-3
    assert jnp.max(jnp.abs(out_f32["reg"] - ref["reg"])) < 2e-3

    # default optimized path: bf16 MXU operands, f32 accumulation
    out = centernet_head_pallas(x, params)
    jax.block_until_ready(out)
    assert out["cls"].shape == (N, 1, H, W)
    assert out["reg"].shape == (N, 2, H, W)
    assert jnp.max(jnp.abs(out["cls"] - ref["cls"])) < 1.5e-1
    assert jnp.max(jnp.abs(out["reg"] - ref["reg"])) < 1.5e-1
    assert jnp.mean(jnp.abs(out["reg"] - ref["reg"])) < 2e-2

    print("KERNEL_OK")
</pallas_src>

<mosaic_0001>
module attributes {stable_mosaic.version = 11 : i64} {
  func.func @_centernet_head_kernel(%arg0: i32, %arg1: i32, %arg2: memref<1x290x64xf32, #tpu.memory_space<vmem>>, %arg3: memref<128x1xi32, #tpu.memory_space<vmem>>, %arg4: memref<3x3x64x128xf32, #tpu.memory_space<vmem>>, %arg5: memref<1x128xf32, #tpu.memory_space<vmem>>, %arg6: memref<128x3xf32, #tpu.memory_space<vmem>>, %arg7: memref<1x3xf32, #tpu.memory_space<vmem>>, %arg8: memref<1x128x3xf32, #tpu.memory_space<vmem>>, %arg9: memref<128x128xf32, #tpu.memory_space<vmem>>) attributes {dimension_semantics = [#tpu.dimension_semantics<parallel>, #tpu.dimension_semantics<parallel>], iteration_bounds = array<i64: 2, 2>, scalar_prefetch = 0 : i64, scratch_operands = 1 : i64, tpu.core_type = #tpu.core_type<tc>, window_params = [{transform_indices = @transform_0, window_bounds = array<i64: 1, 290, 64>}, {transform_indices = @transform_1, window_bounds = array<i64: 128, 1>}, {pipeline_mode = #tpu.pipeline_mode<synchronous>, transform_indices = @transform_2, window_bounds = array<i64: 3, 3, 64, 128>}, {pipeline_mode = #tpu.pipeline_mode<synchronous>, transform_indices = @transform_3, window_bounds = array<i64: 1, 128>}, {pipeline_mode = #tpu.pipeline_mode<synchronous>, transform_indices = @transform_4, window_bounds = array<i64: 128, 3>}, {pipeline_mode = #tpu.pipeline_mode<synchronous>, transform_indices = @transform_5, window_bounds = array<i64: 1, 3>}, {transform_indices = @transform_6, window_bounds = array<i64: 1, 128, 3>}]} {
    %c128_i32 = arith.constant 128 : i32
    %0 = arith.muli %arg1, %c128_i32 : i32
    %1 = tpu.assume_multiple %0, 8 : i32
    %c0 = arith.constant 0 : index
    %c0_0 = arith.constant 0 : index
    %2 = vector.load %arg3[%c0, %c0_0] : memref<128x1xi32, #tpu.memory_space<vmem>>, vector<128x1xi32>
    %c0_i32 = arith.constant 0 : i32
    %3 = vector.broadcast %c0_i32 : i32 to vector<128x1xi32>
    %4 = arith.cmpi eq, %2, %3 : vector<128x1xi32>
    %c15_i32 = arith.constant 15 : i32
    %5 = vector.broadcast %c15_i32 : i32 to vector<128x1xi32>
    %6 = arith.cmpi eq, %2, %5 : vector<128x1xi32>
    %c0_i32_1 = arith.constant 0 : i32
    %7 = arith.addi %1, %c0_i32_1 : i32
    %c0_i32_2 = arith.constant 0 : i32
    %8 = arith.addi %7, %c0_i32_2 : i32
    %c0_3 = arith.constant 0 : index
    %9 = arith.index_cast %8 : i32 to index
    %c0_4 = arith.constant 0 : index
    %10 = vector.load %arg2[%c0_3, %9, %c0_4] : memref<1x290x64xf32, #tpu.memory_space<vmem>>, vector<1x128x64xf32>
    %11 = vector.shape_cast %10 : vector<1x128x64xf32> to vector<128x64xf32>
    %cst = arith.constant 0.000000e+00 : f32
    %12 = vector.shape_cast %4 : vector<128x1xi1> to vector<128x1xi1>
    %13 = vector.broadcast %12 : vector<128x1xi1> to vector<128x64xi1>
    %14 = vector.broadcast %cst : f32 to vector<128x64xf32>
    %15 = arith.select %13, %14, %11 : vector<128x64xi1>, vector<128x64xf32>
    %c0_5 = arith.constant 0 : index
    %c0_6 = arith.constant 0 : index
    %c0_7 = arith.constant 0 : index
    %c0_8 = arith.constant 0 : index
    %16 = vector.load %arg4[%c0_5, %c0_6, %c0_7, %c0_8] : memref<3x3x64x128xf32, #tpu.memory_space<vmem>>, vector<1x1x64x128xf32>
    %17 = vector.shape_cast %16 : vector<1x1x64x128xf32> to vector<64x128xf32>
    %cst_9 = arith.constant dense<0.000000e+00> : vector<128x128xf32>
    %18 = tpu.matmul %15, %17, %cst_9 {dimension_numbers = #tpu.dot_dimension_numbers<[1], [0], [0], [1], [0, 0, 1, 1], [], []>} : vector<128x64xf32>, vector<64x128xf32>, vector<128x128xf32> -> vector<128x128xf32>
    %c0_10 = arith.constant 0 : index
    %c0_11 = arith.constant 0 : index
    %19 = vector.load %arg9[%c0_10, %c0_11] : memref<128x128xf32, #tpu.memory_space<vmem>>, vector<128x128xf32>
    tpu.vector_store %arg9[%c0_10, %c0_11], %18 {strides = array<i32>} : memref<128x128xf32, #tpu.memory_space<vmem>>, vector<128x128xf32>,
    %c0_i32_12 = arith.constant 0 : i32
    %20 = arith.addi %1, %c0_i32_12 : i32
    %c1_i32 = arith.constant 1 : i32
    %21 = arith.addi %20, %c1_i32 : i32
    %c0_13 = arith.constant 0 : index
    %22 = arith.index_cast %21 : i32 to index
    %c0_14 = arith.constant 0 : index
    %23 = vector.load %arg2[%c0_13, %22, %c0_14] : memref<1x290x64xf32, #tpu.memory_space<vmem>>, vector<1x128x64xf32>
    %24 = vector.shape_cast %23 : vector<1x128x64xf32> to vector<128x64xf32>
    %c0_15 = arith.constant 0 : index
    %c1 = arith.constant 1 : index
    %c0_16 = arith.constant 0 : index
    %c0_17 = arith.constant 0 : index
    %25 = vector.load %arg4[%c0_15, %c1, %c0_16, %c0_17] : memref<3x3x64x128xf32, #tpu.memory_space<vmem>>, vector<1x1x64x128xf32>
    %26 = vector.shape_cast %25 : vector<1x1x64x128xf32> to vector<64x128xf32>
    %cst_18 = arith.constant dense<0.000000e+00> : vector<128x128xf32>
    %27 = tpu.matmul %24, %26, %cst_18 {dimension_numbers = #tpu.dot_dimension_numbers<[1], [0], [0], [1], [0, 0, 1, 1], [], []>} : vector<128x64xf32>, vector<64x128xf32>, vector<128x128xf32> -> vector<128x128xf32>
    %c0_19 = arith.constant 0 : index
    %c0_20 = arith.constant 0 : index
    %28 = vector.load %arg9[%c0_19, %c0_20] : memref<128x128xf32, #tpu.memory_space<vmem>>, vector<128x128xf32>
    %29 = arith.addf %28, %27 : vector<128x128xf32>
    %c0_21 = arith.constant 0 : index
    %c0_22 = arith.constant 0 : index
    %30 = vector.load %arg9[%c0_21, %c0_22] : memref<128x128xf32, #tpu.memory_space<vmem>>, vector<128x128xf32>
    tpu.vector_store %arg9[%c0_21, %c0_22], %29 {strides = array<i32>} : memref<128x128xf32, #tpu.memory_space<vmem>>, vector<128x128xf32>,
    %c0_i32_23 = arith.constant 0 : i32
    %31 = arith.addi %1, %c0_i32_23 : i32
    %c2_i32 = arith.constant 2 : i32
    %32 = arith.addi %31, %c2_i32 : i32
    %c0_24 = arith.constant 0 : index
    %33 = arith.index_cast %32 : i32 to index
    %c0_25 = arith.constant 0 : index
    %34 = vector.load %arg2[%c0_24, %33, %c0_25] : memref<1x290x64xf32, #tpu.memory_space<vmem>>, vector<1x128x64xf32>
    %35 = vector.shape_cast %34 : vector<1x128x64xf32> to vector<128x64xf32>
    %cst_26 = arith.constant 0.000000e+00 : f32
    %36 = vector.shape_cast %6 : vector<128x1xi1> to vector<128x1xi1>
    %37 = vector.broadcast %36 : vector<128x1xi1> to vector<128x64xi1>
    %38 = vector.broadcast %cst_26 : f32 to vector<128x64xf32>
    %39 = arith.select %37, %38, %35 : vector<128x64xi1>, vector<128x64xf32>
    %c0_27 = arith.constant 0 : index
    %c2 = arith.constant 2 : index
    %c0_28 = arith.constant 0 : index
    %c0_29 = arith.constant 0 : index
    %40 = vector.load %arg4[%c0_27, %c2, %c0_28, %c0_29] : memref<3x3x64x128xf32, #tpu.memory_space<vmem>>, vector<1x1x64x128xf32>
    %41 = vector.shape_cast %40 : vector<1x1x64x128xf32> to vector<64x128xf32>
    %cst_30 = arith.constant dense<0.000000e+00> : vector<128x128xf32>
    %42 = tpu.matmul %39, %41, %cst_30 {dimension_numbers = #tpu.dot_dimension_numbers<[1], [0], [0], [1], [0, 0, 1, 1], [], []>} : vector<128x64xf32>, vector<64x128xf32>, vector<128x128xf32> -> vector<128x128xf32>
    %c0_31 = arith.constant 0 : index
    %c0_32 = arith.constant 0 : index
    %43 = vector.load %arg9[%c0_31, %c0_32] : memref<128x128xf32, #tpu.memory_space<vmem>>, vector<128x128xf32>
    %44 = arith.addf %43, %42 : vector<128x128xf32>
    %c0_33 = arith.constant 0 : index
    %c0_34 = arith.constant 0 : index
    %45 = vector.load %arg9[%c0_33, %c0_34] : memref<128x128xf32, #tpu.memory_space<vmem>>, vector<128x128xf32>
    tpu.vector_store %arg9[%c0_33, %c0_34], %44 {strides = array<i32>} : memref<128x128xf32, #tpu.memory_space<vmem>>, vector<128x128xf32>,
    %c16_i32 = arith.constant 16 : i32
    %46 = arith.addi %1, %c16_i32 : i32
    %c0_i32_35 = arith.constant 0 : i32
    %47 = arith.addi %46, %c0_i32_35 : i32
    %c0_36 = arith.constant 0 : index
    %48 = arith.index_cast %47 : i32 to index
    %c0_37 = arith.constant 0 : index
    %49 = vector.load %arg2[%c0_36, %48, %c0_37] : memref<1x290x64xf32, #tpu.memory_space<vmem>>, vector<1x128x64xf32>
    %50 = vector.shape_cast %49 : vector<1x128x64xf32> to vector<128x64xf32>
    %cst_38 = arith.constant 0.000000e+00 : f32
    %51 = vector.shape_cast %4 : vector<128x1xi1> to vector<128x1xi1>
    %52 = vector.broadcast %51 : vector<128x1xi1> to vector<128x64xi1>
    %53 = vector.broadcast %cst_38 : f32 to vector<128x64xf32>
    %54 = arith.select %52, %53, %50 : vector<128x64xi1>, vector<128x64xf32>
    %c1_39 = arith.constant 1 : index
    %c0_40 = arith.constant 0 : index
    %c0_41 = arith.constant 0 : index
    %c0_42 = arith.constant 0 : index
    %55 = vector.load %arg4[%c1_39, %c0_40, %c0_41, %c0_42] : memref<3x3x64x128xf32, #tpu.memory_space<vmem>>, vector<1x1x64x128xf32>
    %56 = vector.shape_cast %55 : vector<1x1x64x128xf32> to vector<64x128xf32>
    %cst_43 = arith.constant dense<0.000000e+00> : vector<128x128xf32>
    %57 = tpu.matmul %54, %56, %cst_43 {dimension_numbers = #tpu.dot_dimension_numbers<[1], [0], [0], [1], [0, 0, 1, 1], [], []>} : vector<128x64xf32>, vector<64x128xf32>, vector<128x128xf32> -> vector<128x128xf32>
    %c0_44 = arith.constant 0 : index
    %c0_45 = arith.constant 0 : index
    %58 = vector.load %arg9[%c0_44, %c0_45] : memref<128x128xf32, #tpu.memory_space<vmem>>, vector<128x128xf32>
    %59 = arith.addf %58, %57 : vector<128x128xf32>
    %c0_46 = arith.constant 0 : index
    %c0_47 = arith.constant 0 : index
    %60 = vector.load %arg9[%c0_46, %c0_47] : memref<128x128xf32, #tpu.memory_space<vmem>>, vector<128x128xf32>
    tpu.vector_store %arg9[%c0_46, %c0_47], %59 {strides = array<i32>} : memref<128x128xf32, #tpu.memory_space<vmem>>, vector<128x128xf32>,
    %c16_i32_48 = arith.constant 16 : i32
    %61 = arith.addi %1, %c16_i32_48 : i32
    %c1_i32_49 = arith.constant 1 : i32
    %62 = arith.addi %61, %c1_i32_49 : i32
    %c0_50 = arith.constant 0 : index
    %63 = arith.index_cast %62 : i32 to index
    %c0_51 = arith.constant 0 : index
    %64 = vector.load %arg2[%c0_50, %63, %c0_51] : memref<1x290x64xf32, #tpu.memory_space<vmem>>, vector<1x128x64xf32>
    %65 = vector.shape_cast %64 : vector<1x128x64xf32> to vector<128x64xf32>
    %c1_52 = arith.constant 1 : index
    %c1_53 = arith.constant 1 : index
    %c0_54 = arith.constant 0 : index
    %c0_55 = arith.constant 0 : index
    %66 = vector.load %arg4[%c1_52, %c1_53, %c0_54, %c0_55] : memref<3x3x64x128xf32, #tpu.memory_space<vmem>>, vector<1x1x64x128xf32>
    %67 = vector.shape_cast %66 : vector<1x1x64x128xf32> to vector<64x128xf32>
    %cst_56 = arith.constant dense<0.000000e+00> : vector<128x128xf32>
    %68 = tpu.matmul %65, %67, %cst_56 {dimension_numbers = #tpu.dot_dimension_numbers<[1], [0], [0], [1], [0, 0, 1, 1], [], []>} : vector<128x64xf32>, vector<64x128xf32>, vector<128x128xf32> -> vector<128x128xf32>
    %c0_57 = arith.constant 0 : index
    %c0_58 = arith.constant 0 : index
    %69 = vector.load %arg9[%c0_57, %c0_58] : memref<128x128xf32, #tpu.memory_space<vmem>>, vector<128x128xf32>
    %70 = arith.addf %69, %68 : vector<128x128xf32>
    %c0_59 = arith.constant 0 : index
    %c0_60 = arith.constant 0 : index
    %71 = vector.load %arg9[%c0_59, %c0_60] : memref<128x128xf32, #tpu.memory_space<vmem>>, vector<128x128xf32>
    tpu.vector_store %arg9[%c0_59, %c0_60], %70 {strides = array<i32>} : memref<128x128xf32, #tpu.memory_space<vmem>>, vector<128x128xf32>,
    %c16_i32_61 = arith.constant 16 : i32
    %72 = arith.addi %1, %c16_i32_61 : i32
    %c2_i32_62 = arith.constant 2 : i32
    %73 = arith.addi %72, %c2_i32_62 : i32
    %c0_63 = arith.constant 0 : index
    %74 = arith.index_cast %73 : i32 to index
    %c0_64 = arith.constant 0 : index
    %75 = vector.load %arg2[%c0_63, %74, %c0_64] : memref<1x290x64xf32, #tpu.memory_space<vmem>>, vector<1x128x64xf32>
    %76 = vector.shape_cast %75 : vector<1x128x64xf32> to vector<128x64xf32>
    %cst_65 = arith.constant 0.000000e+00 : f32
    %77 = vector.shape_cast %6 : vector<128x1xi1> to vector<128x1xi1>
    %78 = vector.broadcast %77 : vector<128x1xi1> to vector<128x64xi1>
    %79 = vector.broadcast %cst_65 : f32 to vector<128x64xf32>
    %80 = arith.select %78, %79, %76 : vector<128x64xi1>, vector<128x64xf32>
    %c1_66 = arith.constant 1 : index
    %c2_67 = arith.constant 2 : index
    %c0_68 = arith.constant 0 : index
    %c0_69 = arith.constant 0 : index
    %81 = vector.load %arg4[%c1_66, %c2_67, %c0_68, %c0_69] : memref<3x3x64x128xf32, #tpu.memory_space<vmem>>, vector<1x1x64x128xf32>
    %82 = vector.shape_cast %81 : vector<1x1x64x128xf32> to vector<64x128xf32>
    %cst_70 = arith.constant dense<0.000000e+00> : vector<128x128xf32>
    %83 = tpu.matmul %80, %82, %cst_70 {dimension_numbers = #tpu.dot_dimension_numbers<[1], [0], [0], [1], [0, 0, 1, 1], [], []>} : vector<128x64xf32>, vector<64x128xf32>, vector<128x128xf32> -> vector<128x128xf32>
    %c0_71 = arith.constant 0 : index
    %c0_72 = arith.constant 0 : index
    %84 = vector.load %arg9[%c0_71, %c0_72] : memref<128x128xf32, #tpu.memory_space<vmem>>, vector<128x128xf32>
    %85 = arith.addf %84, %83 : vector<128x128xf32>
    %c0_73 = arith.constant 0 : index
    %c0_74 = arith.constant 0 : index
    %86 = vector.load %arg9[%c0_73, %c0_74] : memref<128x128xf32, #tpu.memory_space<vmem>>, vector<128x128xf32>
    tpu.vector_store %arg9[%c0_73, %c0_74], %85 {strides = array<i32>} : memref<128x128xf32, #tpu.memory_space<vmem>>, vector<128x128xf32>,
    %c32_i32 = arith.constant 32 : i32
    %87 = arith.addi %1, %c32_i32 : i32
    %c0_i32_75 = arith.constant 0 : i32
    %88 = arith.addi %87, %c0_i32_75 : i32
    %c0_76 = arith.constant 0 : index
    %89 = arith.index_cast %88 : i32 to index
    %c0_77 = arith.constant 0 : index
    %90 = vector.load %arg2[%c0_76, %89, %c0_77] : memref<1x290x64xf32, #tpu.memory_space<vmem>>, vector<1x128x64xf32>
    %91 = vector.shape_cast %90 : vector<1x128x64xf32> to vector<128x64xf32>
    %cst_78 = arith.constant 0.000000e+00 : f32
    %92 = vector.shape_cast %4 : vector<128x1xi1> to vector<128x1xi1>
    %93 = vector.broadcast %92 : vector<128x1xi1> to vector<128x64xi1>
    %94 = vector.broadcast %cst_78 : f32 to vector<128x64xf32>
    %95 = arith.select %93, %94, %91 : vector<128x64xi1>, vector<128x64xf32>
    %c2_79 = arith.constant 2 : index
    %c0_80 = arith.constant 0 : index
    %c0_81 = arith.constant 0 : index
    %c0_82 = arith.constant 0 : index
    %96 = vector.load %arg4[%c2_79, %c0_80, %c0_81, %c0_82] : memref<3x3x64x128xf32, #tpu.memory_space<vmem>>, vector<1x1x64x128xf32>
    %97 = vector.shape_cast %96 : vector<1x1x64x128xf32> to vector<64x128xf32>
    %cst_83 = arith.constant dense<0.000000e+00> : vector<128x128xf32>
    %98 = tpu.matmul %95, %97, %cst_83 {dimension_numbers = #tpu.dot_dimension_numbers<[1], [0], [0], [1], [0, 0, 1, 1], [], []>} : vector<128x64xf32>, vector<64x128xf32>, vector<128x128xf32> -> vector<128x128xf32>
    %c0_84 = arith.constant 0 : index
    %c0_85 = arith.constant 0 : index
    %99 = vector.load %arg9[%c0_84, %c0_85] : memref<128x128xf32, #tpu.memory_space<vmem>>, vector<128x128xf32>
    %100 = arith.addf %99, %98 : vector<128x128xf32>
    %c0_86 = arith.constant 0 : index
    %c0_87 = arith.constant 0 : index
    %101 = vector.load %arg9[%c0_86, %c0_87] : memref<128x128xf32, #tpu.memory_space<vmem>>, vector<128x128xf32>
    tpu.vector_store %arg9[%c0_86, %c0_87], %100 {strides = array<i32>} : memref<128x128xf32, #tpu.memory_space<vmem>>, vector<128x128xf32>,
    %c32_i32_88 = arith.constant 32 : i32
    %102 = arith.addi %1, %c32_i32_88 : i32
    %c1_i32_89 = arith.constant 1 : i32
    %103 = arith.addi %102, %c1_i32_89 : i32
    %c0_90 = arith.constant 0 : index
    %104 = arith.index_cast %103 : i32 to index
    %c0_91 = arith.constant 0 : index
    %105 = vector.load %arg2[%c0_90, %104, %c0_91] : memref<1x290x64xf32, #tpu.memory_space<vmem>>, vector<1x128x64xf32>
    %106 = vector.shape_cast %105 : vector<1x128x64xf32> to vector<128x64xf32>
    %c2_92 = arith.constant 2 : index
    %c1_93 = arith.constant 1 : index
    %c0_94 = arith.constant 0 : index
    %c0_95 = arith.constant 0 : index
    %107 = vector.load %arg4[%c2_92, %c1_93, %c0_94, %c0_95] : memref<3x3x64x128xf32, #tpu.memory_space<vmem>>, vector<1x1x64x128xf32>
    %108 = vector.shape_cast %107 : vector<1x1x64x128xf32> to vector<64x128xf32>
    %cst_96 = arith.constant dense<0.000000e+00> : vector<128x128xf32>
    %109 = tpu.matmul %106, %108, %cst_96 {dimension_numbers = #tpu.dot_dimension_numbers<[1], [0], [0], [1], [0, 0, 1, 1], [], []>} : vector<128x64xf32>, vector<64x128xf32>, vector<128x128xf32> -> vector<128x128xf32>
    %c0_97 = arith.constant 0 : index
    %c0_98 = arith.constant 0 : index
    %110 = vector.load %arg9[%c0_97, %c0_98] : memref<128x128xf32, #tpu.memory_space<vmem>>, vector<128x128xf32>
    %111 = arith.addf %110, %109 : vector<128x128xf32>
    %c0_99 = arith.constant 0 : index
    %c0_100 = arith.constant 0 : index
    %112 = vector.load %arg9[%c0_99, %c0_100] : memref<128x128xf32, #tpu.memory_space<vmem>>, vector<128x128xf32>
    tpu.vector_store %arg9[%c0_99, %c0_100], %111 {strides = array<i32>} : memref<128x128xf32, #tpu.memory_space<vmem>>, vector<128x128xf32>,
    %c32_i32_101 = arith.constant 32 : i32
    %113 = arith.addi %1, %c32_i32_101 : i32
    %c2_i32_102 = arith.constant 2 : i32
    %114 = arith.addi %113, %c2_i32_102 : i32
    %c0_103 = arith.constant 0 : index
    %115 = arith.index_cast %114 : i32 to index
    %c0_104 = arith.constant 0 : index
    %116 = vector.load %arg2[%c0_103, %115, %c0_104] : memref<1x290x64xf32, #tpu.memory_space<vmem>>, vector<1x128x64xf32>
    %117 = vector.shape_cast %116 : vector<1x128x64xf32> to vector<128x64xf32>
    %cst_105 = arith.constant 0.000000e+00 : f32
    %118 = vector.shape_cast %6 : vector<128x1xi1> to vector<128x1xi1>
    %119 = vector.broadcast %118 : vector<128x1xi1> to vector<128x64xi1>
    %120 = vector.broadcast %cst_105 : f32 to vector<128x64xf32>
    %121 = arith.select %119, %120, %117 : vector<128x64xi1>, vector<128x64xf32>
    %c2_106 = arith.constant 2 : index
    %c2_107 = arith.constant 2 : index
    %c0_108 = arith.constant 0 : index
    %c0_109 = arith.constant 0 : index
    %122 = vector.load %arg4[%c2_106, %c2_107, %c0_108, %c0_109] : memref<3x3x64x128xf32, #tpu.memory_space<vmem>>, vector<1x1x64x128xf32>
    %123 = vector.shape_cast %122 : vector<1x1x64x128xf32> to vector<64x128xf32>
    %cst_110 = arith.constant dense<0.000000e+00> : vector<128x128xf32>
    %124 = tpu.matmul %121, %123, %cst_110 {dimension_numbers = #tpu.dot_dimension_numbers<[1], [0], [0], [1], [0, 0, 1, 1], [], []>} : vector<128x64xf32>, vector<64x128xf32>, vector<128x128xf32> -> vector<128x128xf32>
    %c0_111 = arith.constant 0 : index
    %c0_112 = arith.constant 0 : index
    %125 = vector.load %arg9[%c0_111, %c0_112] : memref<128x128xf32, #tpu.memory_space<vmem>>, vector<128x128xf32>
    %126 = arith.addf %125, %124 : vector<128x128xf32>
    %c0_113 = arith.constant 0 : index
    %c0_114 = arith.constant 0 : index
    %127 = vector.load %arg9[%c0_113, %c0_114] : memref<128x128xf32, #tpu.memory_space<vmem>>, vector<128x128xf32>
    tpu.vector_store %arg9[%c0_113, %c0_114], %126 {strides = array<i32>} : memref<128x128xf32, #tpu.memory_space<vmem>>, vector<128x128xf32>,
    %c0_115 = arith.constant 0 : index
    %c0_116 = arith.constant 0 : index
    %128 = vector.load %arg9[%c0_115, %c0_116] : memref<128x128xf32, #tpu.memory_space<vmem>>, vector<128x128xf32>
    %c0_117 = arith.constant 0 : index
    %c0_118 = arith.constant 0 : index
    %129 = vector.load %arg5[%c0_117, %c0_118] : memref<1x128xf32, #tpu.memory_space<vmem>>, vector<1x128xf32>
    %130 = vector.broadcast %129 : vector<1x128xf32> to vector<128x128xf32>
    %131 = arith.addf %128, %130 : vector<128x128xf32>
    %cst_119 = arith.constant 0.000000e+00 : f32
    %132 = vector.broadcast %cst_119 : f32 to vector<128x128xf32>
    %133 = arith.maximumf %131, %132 : vector<128x128xf32>
    %c0_120 = arith.constant 0 : index
    %c0_121 = arith.constant 0 : index
    %134 = vector.load %arg6[%c0_120, %c0_121] : memref<128x3xf32, #tpu.memory_space<vmem>>, vector<128x3xf32>
    %cst_122 = arith.constant dense<0.000000e+00> : vector<128x3xf32>
    %135 = tpu.matmul %133, %134, %cst_122 {dimension_numbers = #tpu.dot_dimension_numbers<[1], [0], [0], [1], [0, 0, 1, 1], [], []>} : vector<128x128xf32>, vector<128x3xf32>, vector<128x3xf32> -> vector<128x3xf32>
    %c0_123 = arith.constant 0 : index
    %c0_124 = arith.constant 0 : index
    %136 = vector.load %arg7[%c0_123, %c0_124] : memref<1x3xf32, #tpu.memory_space<vmem>>, vector<1x3xf32>
    %137 = vector.broadcast %136 : vector<1x3xf32> to vector<128x3xf32>
    %138 = arith.addf %135, %137 : vector<128x3xf32>
    %139 = tpu.iota {dimensions = array<i32: 1>} : vector<128x3xi32>
    %c0_i32_125 = arith.constant 0 : i32
    %140 = vector.broadcast %c0_i32_125 : i32 to vector<128x3xi32>
    %141 = arith.cmpi eq, %139, %140 : vector<128x3xi32>
    %142 = arith.negf %138 : vector<128x3xf32>
    %143 = math.exp %142 : vector<128x3xf32>
    %cst_126 = arith.constant 1.000000e+00 : f32
    %144 = vector.broadcast %cst_126 : f32 to vector<128x3xf32>
    %145 = arith.addf %144, %143 : vector<128x3xf32>
    %146 = arith.divf %144, %145 : vector<128x3xf32>
    %147 = arith.select %141, %146, %138 : vector<128x3xi1>, vector<128x3xf32>
    %148 = vector.shape_cast %147 : vector<128x3xf32> to vector<1x128x3xf32>
    %c0_127 = arith.constant 0 : index
    %c0_128 = arith.constant 0 : index
    %c0_129 = arith.constant 0 : index
    %149 = vector.load %arg8[%c0_127, %c0_128, %c0_129] : memref<1x128x3xf32, #tpu.memory_space<vmem>>, vector<1x128x3xf32>
    tpu.vector_store %arg8[%c0_127, %c0_128, %c0_129], %148 {strides = array<i32>} : memref<1x128x3xf32, #tpu.memory_space<vmem>>, vector<1x128x3xf32>,
    return
  }
  func.func @transform_0(%arg0: i32, %arg1: i32) -> (i32, i32, i32) {
    %c0_i32 = arith.constant 0 : i32
    %c0_i32_0 = arith.constant 0 : i32
    %c0_i32_1 = arith.constant 0 : i32
    return %arg0, %c0_i32, %c0_i32_0 : i32, i32, i32
  }
  func.func @transform_1(%arg0: i32, %arg1: i32) -> (i32, i32) {
    %c0_i32 = arith.constant 0 : i32
    %c0_i32_0 = arith.constant 0 : i32
    return %arg1, %c0_i32 : i32, i32
  }
  func.func @transform_2(%arg0: i32, %arg1: i32) -> (i32, i32, i32, i32) {
    %c0_i32 = arith.constant 0 : i32
    %c0_i32_0 = arith.constant 0 : i32
    %c0_i32_1 = arith.constant 0 : i32
    %c0_i32_2 = arith.constant 0 : i32
    %c0_i32_3 = arith.constant 0 : i32
    return %c0_i32, %c0_i32_0, %c0_i32_1, %c0_i32_2 : i32, i32, i32, i32
  }
  func.func @transform_3(%arg0: i32, %arg1: i32) -> (i32, i32) {
    %c0_i32 = arith.constant 0 : i32
    %c0_i32_0 = arith.constant 0 : i32
    %c0_i32_1 = arith.constant 0 : i32
    return %c0_i32, %c0_i32_0 : i32, i32
  }
  func.func @transform_4(%arg0: i32, %arg1: i32) -> (i32, i32) {
    %c0_i32 = arith.constant 0 : i32
    %c0_i32_0 = arith.constant 0 : i32
    %c0_i32_1 = arith.constant 0 : i32
    return %c0_i32, %c0_i32_0 : i32, i32
  }
  func.func @transform_5(%arg0: i32, %arg1: i32) -> (i32, i32) {
    %c0_i32 = arith.constant 0 : i32
    %c0_i32_0 = arith.constant 0 : i32
    %c0_i32_1 = arith.constant 0 : i32
    return %c0_i32, %c0_i32_0 : i32, i32
  }
  func.func @transform_6(%arg0: i32, %arg1: i32) -> (i32, i32, i32) {
    %c0_i32 = arith.constant 0 : i32
    %c0_i32_0 = arith.constant 0 : i32
    return %arg0, %arg1, %c0_i32 : i32, i32, i32
  }
}

</mosaic_0001>

<llo_original>
// kernel: tpu_custom_call.1
$region0: #{tpu_custom_call.1}
  #allocation0 [shape = 'u32[]', space=smem, size = 0x4, offset = 0x4, fixed_abs, tag = 'smem constant byte address 0x4 - core index']
  #allocation1 [shape = 'u32[144,128]{1,0:T(1,128)}', space=vmem, size = 0x12000, scoped, tag = 'internal scratch']
  #allocation2 [shape = 'f32[128,128]{1,0:T(8,128)}', space=vmem, size = 0x10000, scoped, tag = 'scratch operand']
  %s0 = inlined_call_operand.vmem [shape: f32[2,290,64], index: 0, kind: input, shape index: {}]
  %s1 = inlined_call_operand.vmem [shape: s32[256,1], index: 1, kind: input, shape index: {}]
  %s2 = inlined_call_operand.vmem [shape: f32[3,3,64,128], index: 2, kind: input, shape index: {}]
  %s3 = inlined_call_operand.vmem [shape: f32[1,128], index: 3, kind: input, shape index: {}]
  %s4 = inlined_call_operand.vmem [shape: f32[128,3], index: 4, kind: input, shape index: {}]
  %s5 = inlined_call_operand.vmem [shape: f32[1,3], index: 5, kind: input, shape index: {}]
  %s6 = inlined_call_operand.vmem [shape: f32[2,256,3], index: 6, kind: output, shape index: {}]
  %s7 = sld [smem:[#allocation0]]
  $region57: #{tpu_custom_call.1} parent=0
    _
  %s9 = ssub.s32 1, %s7
  %s10 = scalar_select 0, %s9, %s7
  loop: start=0, step=1, limit=6
  $region2: #{tpu_custom_call.1} parent=0 // loop_pre_header
    _
  $region3: #{tpu_custom_call.1} parent=0 // loop_header
    %s12 = sphi 0, %s16
    %p13 = scmp.ge.s32.totalorder %s12, 6
    %s19 = sphi 0, %s31
    %s20 = sphi 0, %s27
    %s21 = sphi 0, %s19
    %s22 = sphi 0, %s20
    %s23 = sphi 0, %s21
    %s24 = sphi 0, %s22
    %s34 = sphi 0, %s36
    %s37 = sphi 0, %s34
    %s38 = sphi 0, %s37
    %s54 = sphi 0, %s38
    %s60 = sphi 0, %s62
    %s63 = sphi 0, %s60
    %s64 = sphi 0, %s63
    %s80 = sphi 0, %s64
    %s84 = sphi 0, %s84
    %s86 = sphi 0, %s84
    %s87 = sphi 0, %s86
    %s101 = sphi 0, %s87
    %s105 = sphi 0, %s105
    %s107 = sphi 0, %s105
    %s108 = sphi 0, %s107
    %s122 = sphi 0, %s108
    %s126 = sphi 0, %s126
    %s128 = sphi 0, %s126
    %s129 = sphi 0, %s128
    %s143 = sphi 0, %s129
    %s147 = sphi 0, %s147
    %s149 = sphi 0, %s147
    %s150 = sphi 0, %s149
    %s164 = sphi 0, %s150
    %s172 = sphi 0, %s174
    %s175 = sphi 0, %s172
    %s176 = sphi 0, %s175
    %s192 = sphi 0, %s176
  $region4: #{tpu_custom_call.1} parent=0 // loop_header_branch
    %15 = sbr.rel (%p13) target = $region8
  $region5: #{tpu_custom_call.1} parent=0 // loop_body
    %s17 = ssub.s32 %s12, 1
    %s18 = ssub.s32 %s12, 2
    %s25 = sadd.s32 1, %s20
    %p26 = scmp.ge.s32.totalorder %s25, 2
    %s27 = scalar_select %p26, 0, %s25
    %s28 = sadd.s32 1, %s19
    %s29 = scalar_select %p26, %s28, %s19
    %p30 = scmp.ge.s32.totalorder %s29, 2
    %s31 = scalar_select %p30, 0, %s29
    %s32 = ssub.s32 %s19, %s31
    %p33 = scmp.eq.s32.totalorder %s32, 0
    %s35 = sadd.s32 %s34, 1
    %s36 = scalar_select %p33, %s34, %s35
    %p39 = pneg %p33
    %p40 = scmp.eq.s32.totalorder %s12, 3
    %p41 = por %p39, %p40
    %p42 = scmp.ne.s32.totalorder %s34, %s37
    %p43 = scmp.eq.s32.totalorder %s12, 0
    %p44 = por %p42, %p43
    %p45 = scmp.ne.s32.totalorder %s34, %s37
    %p46 = scmp.eq.s32.totalorder %s17, 3
    %p47 = por %p45, %p46
    %p48 = scmp.ne.s32.totalorder %s37, %s38
    %p49 = scmp.eq.s32.totalorder %s17, 0
    %p50 = por %p48, %p49
    %p51 = scmp.ne.s32.totalorder %s37, %s38
    %p52 = scmp.eq.s32.totalorder %s18, 3
    %p53 = por %p51, %p52
    %p55 = scmp.ne.s32.totalorder %s38, %s54
    %p56 = scmp.eq.s32.totalorder %s18, 0
    %p57 = por %p55, %p56
    %s58 = ssub.s32 %s20, %s27
    %p59 = scmp.eq.s32.totalorder %s58, 0
    %s61 = sadd.s32 %s60, 1
    %s62 = scalar_select %p59, %s60, %s61
    %p65 = pneg %p59
    %p66 = scmp.eq.s32.totalorder %s12, 3
    %p67 = por %p65, %p66
    %p68 = scmp.ne.s32.totalorder %s60, %s63
    %p69 = scmp.eq.s32.totalorder %s12, 0
    %p70 = por %p68, %p69
    %p71 = scmp.ne.s32.totalorder %s60, %s63
    %p72 = scmp.eq.s32.totalorder %s17, 3
    %p73 = por %p71, %p72
    %p74 = scmp.ne.s32.totalorder %s63, %s64
    %p75 = scmp.eq.s32.totalorder %s17, 0
    %p76 = por %p74, %p75
    %p77 = scmp.ne.s32.totalorder %s63, %s64
    %p78 = scmp.eq.s32.totalorder %s18, 3
    %p79 = por %p77, %p78
    %p81 = scmp.ne.s32.totalorder %s64, %s80
    %p82 = scmp.eq.s32.totalorder %s18, 0
    %p83 = por %p81, %p82
    %s85 = sadd.s32 %s84, 1
    %p88 = scmp.eq.s32.totalorder %s12, 3
    %p89 = scmp.ne.s32.totalorder %s84, %s86
    %p90 = scmp.eq.s32.totalorder %s12, 0
    %p91 = por %p89, %p90
    %p92 = scmp.ne.s32.totalorder %s84, %s86
    %p93 = scmp.eq.s32.totalorder %s17, 3
    %p94 = por %p92, %p93
    %p95 = scmp.ne.s32.totalorder %s86, %s87
    %p96 = scmp.eq.s32.totalorder %s17, 0
    %p97 = por %p95, %p96
    %p98 = scmp.ne.s32.totalorder %s86, %s87
    %p99 = scmp.eq.s32.totalorder %s18, 3
    %p100 = por %p98, %p99
    %p102 = scmp.ne.s32.totalorder %s87, %s101
    %p103 = scmp.eq.s32.totalorder %s18, 0
    %p104 = por %p102, %p103
    %s106 = sadd.s32 %s105, 1
    %p109 = scmp.eq.s32.totalorder %s12, 3
    %p110 = scmp.ne.s32.totalorder %s105, %s107
    %p111 = scmp.eq.s32.totalorder %s12, 0
    %p112 = por %p110, %p111
    %p113 = scmp.ne.s32.totalorder %s105, %s107
    %p114 = scmp.eq.s32.totalorder %s17, 3
    %p115 = por %p113, %p114
    %p116 = scmp.ne.s32.totalorder %s107, %s108
    %p117 = scmp.eq.s32.totalorder %s17, 0
    %p118 = por %p116, %p117
    %p119 = scmp.ne.s32.totalorder %s107, %s108
    %p120 = scmp.eq.s32.totalorder %s18, 3
    %p121 = por %p119, %p120
    %p123 = scmp.ne.s32.totalorder %s108, %s122
    %p124 = scmp.eq.s32.totalorder %s18, 0
    %p125 = por %p123, %p124
    %s127 = sadd.s32 %s126, 1
    %p130 = scmp.eq.s32.totalorder %s12, 3
    %p131 = scmp.ne.s32.totalorder %s126, %s128
    %p132 = scmp.eq.s32.totalorder %s12, 0
    %p133 = por %p131, %p132
    %p134 = scmp.ne.s32.totalorder %s126, %s128
    %p135 = scmp.eq.s32.totalorder %s17, 3
    %p136 = por %p134, %p135
    %p137 = scmp.ne.s32.totalorder %s128, %s129
    %p138 = scmp.eq.s32.totalorder %s17, 0
    %p139 = por %p137, %p138
    %p140 = scmp.ne.s32.totalorder %s128, %s129
    %p141 = scmp.eq.s32.totalorder %s18, 3
    %p142 = por %p140, %p141
    %p144 = scmp.ne.s32.totalorder %s129, %s143
    %p145 = scmp.eq.s32.totalorder %s18, 0
    %p146 = por %p144, %p145
    %s148 = sadd.s32 %s147, 1
    %p151 = scmp.eq.s32.totalorder %s12, 3
    %p152 = scmp.ne.s32.totalorder %s147, %s149
    %p153 = scmp.eq.s32.totalorder %s12, 0
    %p154 = por %p152, %p153
    %p155 = scmp.ne.s32.totalorder %s147, %s149
    %p156 = scmp.eq.s32.totalorder %s17, 3
    %p157 = por %p155, %p156
    %p158 = scmp.ne.s32.totalorder %s149, %s150
    %p159 = scmp.eq.s32.totalorder %s17, 0
    %p160 = por %p158, %p159
    %p161 = scmp.ne.s32.totalorder %s149, %s150
    %p162 = scmp.eq.s32.totalorder %s18, 3
    %p163 = por %p161, %p162
    %p165 = scmp.ne.s32.totalorder %s150, %s164
    %p166 = scmp.eq.s32.totalorder %s18, 0
    %p167 = por %p165, %p166
    %s168 = ssub.s32 %s19, %s31
    %s169 = ssub.s32 %s20, %s27
    %s170 = sor.u32 %s168, %s169
    %p171 = scmp.eq.s32.totalorder %s170, 0
    %s173 = sadd.s32 %s172, 1
    %s174 = scalar_select %p171, %s172, %s173
    %p177 = pneg %p171
    %p178 = scmp.eq.s32.totalorder %s12, 3
    %p179 = por %p177, %p178
    %p180 = scmp.ne.s32.totalorder %s172, %s175
    %p181 = scmp.eq.s32.totalorder %s12, 0
    %p182 = por %p180, %p181
    %p183 = scmp.ne.s32.totalorder %s172, %s175
    %p184 = scmp.eq.s32.totalorder %s17, 3
    %p185 = por %p183, %p184
    %p186 = scmp.ne.s32.totalorder %s175, %s176
    %p187 = scmp.eq.s32.totalorder %s17, 0
    %p188 = por %p186, %p187
    %p189 = scmp.ne.s32.totalorder %s175, %s176
    %p190 = scmp.eq.s32.totalorder %s18, 3
    %p191 = por %p189, %p190
    %p193 = scmp.ne.s32.totalorder %s176, %s192
    %p194 = scmp.eq.s32.totalorder %s18, 0
    %p195 = por %p193, %p194
    %p196 = scmp.le.s32.totalorder 1, %s12
    %p197 = scmp.lt.s32.totalorder %s12, 5
    %p198 = pnand %p196, %p197
    %p199 = pneg %p198
    // Predicated region
    $region9: #{tpu_custom_call.1} parent=5 // pred_check
      _
    $region10: #{tpu_custom_call.1} parent=5 // pred_check_branch
      %201 = sbr.rel (%p198) target = $region12
    $region11: #{tpu_custom_call.1} parent=5 // pred_region
      %s202 = ssub.s32 %s12, 1
      // Predicated region
      $region13: #{tpu_custom_call.1} parent=11 // pred_check
        %p203 = pneg %p97
      $region14: #{tpu_custom_call.1} parent=11 // pred_check_branch
        %205 = sbr.rel (%p203) target = $region16
      $region15: #{tpu_custom_call.1} parent=11 // pred_region
        _
      $region16: #{tpu_custom_call.1} parent=11 // pred_fallthru
        _
      // Predicated region
      $region17: #{tpu_custom_call.1} parent=11 // pred_check
        %p206 = pneg %p118
      $region18: #{tpu_custom_call.1} parent=11 // pred_check_branch
        %208 = sbr.rel (%p206) target = $region20
      $region19: #{tpu_custom_call.1} parent=11 // pred_region
        _
      $region20: #{tpu_custom_call.1} parent=11 // pred_fallthru
        _
      // Predicated region
      $region21: #{tpu_custom_call.1} parent=11 // pred_check
        %p209 = pneg %p139
      $region22: #{tpu_custom_call.1} parent=11 // pred_check_branch
        %211 = sbr.rel (%p209) target = $region24
      $region23: #{tpu_custom_call.1} parent=11 // pred_region
        _
      $region24: #{tpu_custom_call.1} parent=11 // pred_fallthru
        _
      // Predicated region
      $region25: #{tpu_custom_call.1} parent=11 // pred_check
        %p212 = pneg %p160
      $region26: #{tpu_custom_call.1} parent=11 // pred_check_branch
        %214 = sbr.rel (%p212) target = $region28
      $region27: #{tpu_custom_call.1} parent=11 // pred_region
        _
      $region28: #{tpu_custom_call.1} parent=11 // pred_fallthru
        _
    $region12: #{tpu_custom_call.1} parent=5 // pred_fallthru
      _
    %p215 = scmp.lt.s32.totalorder %s12, 4
    // Predicated region
    $region29: #{tpu_custom_call.1} parent=5 // pred_check
      %p216 = pneg %p215
    $region30: #{tpu_custom_call.1} parent=5 // pred_check_branch
      %218 = sbr.rel (%p216) target = $region32
    $region31: #{tpu_custom_call.1} parent=5 // pred_region
      // Predicated region
      $region33: #{tpu_custom_call.1} parent=31 // pred_check
        %p219 = pneg %p44
      $region34: #{tpu_custom_call.1} parent=31 // pred_check_branch
        %221 = sbr.rel (%p219) target = $region36
      $region35: #{tpu_custom_call.1} parent=31 // pred_region
        %p222 = scmp.lt.s32.totalorder %s19, 1
        %s223 = scalar_select %p222, %s19, 1
        %s224 = smul.addr %s223, 37
        %s225 = smul.addr %s224, 8
        %s226 = scalar_lea.vmem %s0, %s225
      $region36: #{tpu_custom_call.1} parent=31 // pred_fallthru
        _
      // Predicated region
      $region37: #{tpu_custom_call.1} parent=31 // pred_check
        %p227 = pneg %p70
      $region38: #{tpu_custom_call.1} parent=31 // pred_check_branch
        %229 = sbr.rel (%p227) target = $region40
      $region39: #{tpu_custom_call.1} parent=31 // pred_region
        %s230 = smul.u32 16, %s20
        %p231 = scmp.lt.s32.totalorder %s230, 31
        %s232 = scalar_select %p231, %s230, 31
        %s233 = smul.addr %s232, 8
        %s234 = scalar_lea.vmem %s1, %s233
        %s235 = smul.u32 16, %s20
      $region40: #{tpu_custom_call.1} parent=31 // pred_fallthru
        _
    $region32: #{tpu_custom_call.1} parent=5 // pred_fallthru
      _
    %p236 = scmp.le.s32.totalorder 1, %s12
    %p237 = scmp.lt.s32.totalorder %s12, 5
    %p238 = pnand %p236, %p237
    %p239 = pneg %p238
    // Predicated region
    $region41: #{tpu_custom_call.1} parent=5 // pred_check
      _
    $region42: #{tpu_custom_call.1} parent=5 // pred_check_branch
      %241 = sbr.rel (%p238) target = $region44
    $region43: #{tpu_custom_call.1} parent=5 // pred_region
      %s242 = ssub.s32 %s12, 1
      %p243 = scmp.lt.s32.totalorder %s21, 1
      %s244 = scalar_select %p243, %s21, 1
      %s245 = smul.addr %s244, 37
      %s246 = smul.addr %s245, 8
      %s247 = scalar_lea.vmem %s0, %s246
      %p248 = pneg %p50
      %p249 = pneg %p47
      %s250 = smul.u32 16, %s22
      %p251 = scmp.lt.s32.totalorder %s250, 31
      %s252 = scalar_select %p251, %s250, 31
      %s253 = smul.addr %s252, 8
      %s254 = scalar_lea.vmem %s1, %s253
      %p255 = pneg %p76
      %p256 = pneg %p73
      %p257 = pneg %p97
      %p258 = pneg %p94
      %p259 = pneg %p118
      %p260 = pneg %p115
      %p261 = pneg %p139
      %p262 = pneg %p136
      %p263 = pneg %p160
      %p264 = pneg %p157
      %p265 = pneg %p188
      %p266 = pneg %p185
      %s267 = smul.u32 16, %s22
      %p268 = scmp.lt.s32.totalorder %s21, 1
      %s269 = scalar_select %p268, %s21, 1
      %p270 = scmp.lt.s32.totalorder %s267, 31
      %s271 = scalar_select %p270, %s267, 31
      %s272 = smul.addr %s269, 32
      %s273 = sadd.s32 %s271, %s272
      %s274 = smul.addr %s273, 8
      %s275 = scalar_lea.vmem %s6, %s274
      %p276 = scmp.lt.s32.totalorder %s21, 1
      %s277 = scalar_select %p276, %s21, 1
      %s278 = smul.addr %s277, 37
      %s279 = smul.addr %s278, 8
      %s280 = scalar_lea.vmem %s0, %s279
      %s281 = smul.u32 16, %s22
      %p282 = scmp.lt.s32.totalorder %s281, 31
      %s283 = scalar_select %p282, %s281, 31
      %s284 = smul.addr %s283, 8
      %s285 = scalar_lea.vmem %s1, %s284
      %s286 = smul.u32 16, %s22
      %s287 = smul.u32 16, %s22
      %p288 = scmp.lt.s32.totalorder %s21, 1
      %s289 = scalar_select %p288, %s21, 1
      %p290 = scmp.lt.s32.totalorder %s287, 31
      %s291 = scalar_select %p290, %s287, 31
      %s292 = smul.addr %s289, 32
      %s293 = sadd.s32 %s291, %s292
      %s294 = smul.addr %s293, 8
      %s295 = scalar_lea.vmem %s6, %s294
      %s296 = smul.u32 16, %s22
      %s297 = smul.u32 %s22, 128
      %v298 = vld [vmem:[%s285] sm:$0xff]
      %v299 = vld [vmem:[%s285 + $0x8] sm:$0xff]
      %v300 = vld [vmem:[%s285 + $0x10] sm:$0xff]
      %v301 = vld [vmem:[%s285 + $0x18] sm:$0xff]
      %v302 = vld [vmem:[%s285 + $0x20] sm:$0xff]
      %v303 = vld [vmem:[%s285 + $0x28] sm:$0xff]
      %v304 = vld [vmem:[%s285 + $0x30] sm:$0xff]
      %v305 = vld [vmem:[%s285 + $0x38] sm:$0xff]
      %v306 = vld [vmem:[%s285 + $0x40] sm:$0xff]
      %v307 = vld [vmem:[%s285 + $0x48] sm:$0xff]
      %v308 = vld [vmem:[%s285 + $0x50] sm:$0xff]
      %v309 = vld [vmem:[%s285 + $0x58] sm:$0xff]
      %v310 = vld [vmem:[%s285 + $0x60] sm:$0xff]
      %v311 = vld [vmem:[%s285 + $0x68] sm:$0xff]
      %v312 = vld [vmem:[%s285 + $0x70] sm:$0xff]
      %v313 = vld [vmem:[%s285 + $0x78] sm:$0xff]
      %vm314 = vcmp.eq.s32.totalorder %v298, 0
      %vm315 = vcmp.eq.s32.totalorder %v299, 0
      %vm316 = vcmp.eq.s32.totalorder %v300, 0
      %vm317 = vcmp.eq.s32.totalorder %v301, 0
      %vm318 = vcmp.eq.s32.totalorder %v302, 0
      %vm319 = vcmp.eq.s32.totalorder %v303, 0
      %vm320 = vcmp.eq.s32.totalorder %v304, 0
      %vm321 = vcmp.eq.s32.totalorder %v305, 0
      %vm322 = vcmp.eq.s32.totalorder %v306, 0
      %vm323 = vcmp.eq.s32.totalorder %v307, 0
      %vm324 = vcmp.eq.s32.totalorder %v308, 0
      %vm325 = vcmp.eq.s32.totalorder %v309, 0
      %vm326 = vcmp.eq.s32.totalorder %v310, 0
      %vm327 = vcmp.eq.s32.totalorder %v311, 0
      %vm328 = vcmp.eq.s32.totalorder %v312, 0
      %vm329 = vcmp.eq.s32.totalorder %v313, 0
      %vm330 = vcmp.eq.s32.totalorder %v298, 15
      %vm331 = vcmp.eq.s32.totalorder %v299, 15
      %vm332 = vcmp.eq.s32.totalorder %v300, 15
      %vm333 = vcmp.eq.s32.totalorder %v301, 15
      %vm334 = vcmp.eq.s32.totalorder %v302, 15
      %vm335 = vcmp.eq.s32.totalorder %v303, 15
      %vm336 = vcmp.eq.s32.totalorder %v304, 15
      %vm337 = vcmp.eq.s32.totalorder %v305, 15
      %vm338 = vcmp.eq.s32.totalorder %v306, 15
      %vm339 = vcmp.eq.s32.totalorder %v307, 15
      %vm340 = vcmp.eq.s32.totalorder %v308, 15
      %vm341 = vcmp.eq.s32.totalorder %v309, 15
      %vm342 = vcmp.eq.s32.totalorder %v310, 15
      %vm343 = vcmp.eq.s32.totalorder %v311, 15
      %vm344 = vcmp.eq.s32.totalorder %v312, 15
      %vm345 = vcmp.eq.s32.totalorder %v313, 15
      %s346 = scalar_lea.vmem %s280, %s297
      %v347 = vld [vmem:[%s346] sm:$0xff]
      %v348 = vld [vmem:[%s346 + $0x8] sm:$0xff]
      %v349 = vld [vmem:[%s346 + $0x10] sm:$0xff]
      %v350 = vld [vmem:[%s346 + $0x18] sm:$0xff]
      %v351 = vld [vmem:[%s346 + $0x20] sm:$0xff]
      %v352 = vld [vmem:[%s346 + $0x28] sm:$0xff]
      %v353 = vld [vmem:[%s346 + $0x30] sm:$0xff]
      %v354 = vld [vmem:[%s346 + $0x38] sm:$0xff]
      %v355 = vld [vmem:[%s346 + $0x40] sm:$0xff]
      %v356 = vld [vmem:[%s346 + $0x48] sm:$0xff]
      %v357 = vld [vmem:[%s346 + $0x50] sm:$0xff]
      %v358 = vld [vmem:[%s346 + $0x58] sm:$0xff]
      %v359 = vld [vmem:[%s346 + $0x60] sm:$0xff]
      %v360 = vld [vmem:[%s346 + $0x68] sm:$0xff]
      %v361 = vld [vmem:[%s346 + $0x70] sm:$0xff]
      %v362 = vld [vmem:[%s346 + $0x78] sm:$0xff]
      %v363 = vsel %vm314, 1, 0
      %v364 = vsel %vm315, 1, 0
      %v365 = vsel %vm316, 1, 0
      %v366 = vsel %vm317, 1, 0
      %v367 = vsel %vm318, 1, 0
      %v368 = vsel %vm319, 1, 0
      %v369 = vsel %vm320, 1, 0
      %v370 = vsel %vm321, 1, 0
      %v371 = vsel %vm322, 1, 0
      %v372 = vsel %vm323, 1, 0
      %v373 = vsel %vm324, 1, 0
      %v374 = vsel %vm325, 1, 0
      %v375 = vsel %vm326, 1, 0
      %v376 = vsel %vm327, 1, 0
      %v377 = vsel %vm328, 1, 0
      %v378 = vsel %vm329, 1, 0
      %379 = vset.pattern.permute.xlu0 0
      %380 = vperm.xlu0 %379, %v363
      %v381 = vpop.permute.xlu0 %380
      %382 = vset.pattern.permute.xlu0 0
      %383 = vperm.xlu0 %382, %v364
      %v384 = vpop.permute.xlu0 %383
      %385 = vset.pattern.permute.xlu0 0
      %386 = vperm.xlu0 %385, %v365
      %v387 = vpop.permute.xlu0 %386
      %388 = vset.pattern.permute.xlu0 0
      %389 = vperm.xlu0 %388, %v366
      %v390 = vpop.permute.xlu0 %389
      %391 = vset.pattern.permute.xlu0 0
      %392 = vperm.xlu0 %391, %v367
      %v393 = vpop.permute.xlu0 %392
      %394 = vset.pattern.permute.xlu0 0
      %395 = vperm.xlu0 %394, %v368
      %v396 = vpop.permute.xlu0 %395
      %397 = vset.pattern.permute.xlu0 0
      %398 = vperm.xlu0 %397, %v369
      %v399 = vpop.permute.xlu0 %398
      %400 = vset.pattern.permute.xlu0 0
      %401 = vperm.xlu0 %400, %v370
      %v402 = vpop.permute.xlu0 %401
      %403 = vset.pattern.permute.xlu0 0
      %404 = vperm.xlu0 %403, %v371
      %v405 = vpop.permute.xlu0 %404
      %406 = vset.pattern.permute.xlu0 0
      %407 = vperm.xlu0 %406, %v372
      %v408 = vpop.permute.xlu0 %407
      %409 = vset.pattern.permute.xlu0 0
      %410 = vperm.xlu0 %409, %v373
      %v411 = vpop.permute.xlu0 %410
      %412 = vset.pattern.permute.xlu0 0
      %413 = vperm.xlu0 %412, %v374
      %v414 = vpop.permute.xlu0 %413
      %415 = vset.pattern.permute.xlu0 0
      %416 = vperm.xlu0 %415, %v375
      %v417 = vpop.permute.xlu0 %416
      %418 = vset.pattern.permute.xlu0 0
      %419 = vperm.xlu0 %418, %v376
      %v420 = vpop.permute.xlu0 %419
      %421 = vset.pattern.permute.xlu0 0
      %422 = vperm.xlu0 %421, %v377
      %v423 = vpop.permute.xlu0 %422
      %424 = vset.pattern.permute.xlu0 0
      %425 = vperm.xlu0 %424, %v378
      %v426 = vpop.permute.xlu0 %425
      %vm427 = vcmp.eq.s32.totalorder %v381, 1
      %vm428 = vcmp.eq.s32.totalorder %v384, 1
      %vm429 = vcmp.eq.s32.totalorder %v387, 1
      %vm430 = vcmp.eq.s32.totalorder %v390, 1
      %vm431 = vcmp.eq.s32.totalorder %v393, 1
      %vm432 = vcmp.eq.s32.totalorder %v396, 1
      %vm433 = vcmp.eq.s32.totalorder %v399, 1
      %vm434 = vcmp.eq.s32.totalorder %v402, 1
      %vm435 = vcmp.eq.s32.totalorder %v405, 1
      %vm436 = vcmp.eq.s32.totalorder %v408, 1
      %vm437 = vcmp.eq.s32.totalorder %v411, 1
      %vm438 = vcmp.eq.s32.totalorder %v414, 1
      %vm439 = vcmp.eq.s32.totalorder %v417, 1
      %vm440 = vcmp.eq.s32.totalorder %v420, 1
      %vm441 = vcmp.eq.s32.totalorder %v423, 1
      %vm442 = vcmp.eq.s32.totalorder %v426, 1
      %v443 = vsel %vm427, 0.0, %v347
      %v444 = vsel %vm428, 0.0, %v348
      %v445 = vsel %vm429, 0.0, %v349
      %v446 = vsel %vm430, 0.0, %v350
      %v447 = vsel %vm431, 0.0, %v351
      %v448 = vsel %vm432, 0.0, %v352
      %v449 = vsel %vm433, 0.0, %v353
      %v450 = vsel %vm434, 0.0, %v354
      %v451 = vsel %vm435, 0.0, %v355
      %v452 = vsel %vm436, 0.0, %v356
      %v453 = vsel %vm437, 0.0, %v357
      %v454 = vsel %vm438, 0.0, %v358
      %v455 = vsel %vm439, 0.0, %v359
      %v456 = vsel %vm440, 0.0, %v360
      %v457 = vsel %vm441, 0.0, %v361
      %v458 = vsel %vm442, 0.0, %v362
      %v459 = vld [vmem:[%s2] sm:$0xff]
      %v460 = vld [vmem:[%s2 + $0x8] sm:$0xff]
      %v461 = vld [vmem:[%s2 + $0x10] sm:$0xff]
      %v462 = vld [vmem:[%s2 + $0x18] sm:$0xff]
      %v463 = vld [vmem:[%s2 + $0x20] sm:$0xff]
      %v464 = vld [vmem:[%s2 + $0x28] sm:$0xff]
      %v465 = vld [vmem:[%s2 + $0x30] sm:$0xff]
      %v466 = vld [vmem:[%s2 + $0x38] sm:$0xff]
      %vm467 = vcmask 523264
      %v469 = vsel %vm467, %v443, 0
      %v472 = vsel %vm467, %v444, 0
      %v475 = vsel %vm467, %v445, 0
      %v478 = vsel %vm467, %v446, 0
      %v481 = vsel %vm467, %v447, 0
      %v484 = vsel %vm467, %v448, 0
      %v487 = vsel %vm467, %v449, 0
      %v490 = vsel %vm467, %v450, 0
      %v493 = vsel %vm467, %v451, 0
      %v496 = vsel %vm467, %v452, 0
      %v499 = vsel %vm467, %v453, 0
      %v502 = vsel %vm467, %v454, 0
      %v505 = vsel %vm467, %v455, 0
      %v508 = vsel %vm467, %v456, 0
      %v511 = vsel %vm467, %v457, 0
      %v514 = vsel %vm467, %v458, 0
      %516 = vmatprep.subr.mxu0 0.0
      %517 = vmatpush1.msra.mxu0 %v459
      %518 = vmatprep.subr.mxu0 0.0
      %519 = vmatpush1.msra.mxu0 %v460
      %520 = vmatprep.subr.mxu0 0.0
      %521 = vmatpush1.msra.mxu0 %v461
      %522 = vmatprep.subr.mxu0 0.0
      %523 = vmatpush1.msra.mxu0 %v462
      %524 = vmatprep.subr.mxu0 0.0
      %525 = vmatpush1.msra.mxu0 %v463
      %526 = vmatprep.subr.mxu0 0.0
      %527 = vmatpush1.msra.mxu0 %v464
      %528 = vmatprep.subr.mxu0 0.0
      %529 = vmatpush1.msra.mxu0 %v465
      %530 = vmatprep.subr.mxu0 0.0
      %531 = vmatpush1.msra.mxu0 %v466
      %532 = vmatprep.subr.mxu0 0.0
      %533 = vmatpush1.msra.mxu0 0.0
      %534 = vmatprep.subr.mxu0 0.0
      %535 = vmatpush1.msra.mxu0 0.0
      %536 = vmatprep.subr.mxu0 0.0
      %537 = vmatpush1.msra.mxu0 0.0
      %538 = vmatprep.subr.mxu0 0.0
      %539 = vmatpush1.msra.mxu0 0.0
      %540 = vmatprep.subr.mxu0 0.0
      %541 = vmatpush1.msra.mxu0 0.0
      %542 = vmatprep.subr.mxu0 0.0
      %543 = vmatpush1.msra.mxu0 0.0
      %544 = vmatprep.subr.mxu0 0.0
      %545 = vmatpush1.msra.mxu0 0.0
      %546 = vmatprep.subr.mxu0 0.0
      %547 = vmatpush1.msra.mxu0 0.0
      %548 = vmatprep.subr.mxu0 0.0
      %549 = vmatpush1.msra.mxu0 0.0
      %550 = vmatprep.subr.mxu0 0.0
      %551 = vmatpush1.msra.mxu0 0.0
      %552 = vmatprep.subr.mxu0 0.0
      %553 = vmatpush1.msra.mxu0 0.0
      %554 = vmatprep.subr.mxu0 0.0
      %555 = vmatpush1.msra.mxu0 0.0
      %556 = vmatprep.subr.mxu0 0.0
      %557 = vmatpush1.msra.mxu0 0.0
      %558 = vmatprep.subr.mxu0 0.0
      %559 = vmatpush1.msra.mxu0 0.0
      %560 = vmatprep.subr.mxu0 0.0
      %561 = vmatpush1.msra.mxu0 0.0
      %562 = vmatprep.subr.mxu0 0.0
      %563 = vmatpush1.msra.mxu0 0.0
      %564 = vmatprep.subr.mxu0 0.0
      %565 = vmatpush1.msra.mxu0 0.0
      %566 = vmatprep.subr.mxu0 0.0
      %567 = vmatpush1.msra.mxu0 0.0
      %568 = vmatprep.subr.mxu0 0.0
      %569 = vmatpush1.msra.mxu0 0.0
      %570 = vmatprep.subr.mxu0 0.0
      %571 = vmatpush1.msra.mxu0 0.0
      %572 = vmatprep.subr.mxu0 0.0
      %573 = vmatpush1.msra.mxu0 0.0
      %574 = vmatprep.subr.mxu0 0.0
      %575 = vmatpush1.msra.mxu0 0.0
      %576 = vmatprep.subr.mxu0 0.0
      %577 = vmatpush1.msra.mxu0 0.0
      %578 = vmatprep.subr.mxu0 0.0
      %579 = vmatpush1.msra.mxu0 0.0
      %580 = vmatprep.mubr.f32.mxu0 0.0
      %581 = vmatmul.mubr.f32.gmra.mrb[0].mxu0 %v469
      %v582 = vpop.f32.mrb[0].mxu0
      %v583 = vadd.f32 0.0, %v582
      %v584 = vpop.f32.mrb[0].mxu0
      %585 = vmatprep.mubr.f32.mxu0 0.0
      %586 = vmatmul.mubr.f32.gmra.mrb[0].mxu0 %v472
      %v587 = vpop.f32.mrb[0].mxu0
      %v588 = vadd.f32 0.0, %v587
      %v589 = vpop.f32.mrb[0].mxu0
      %590 = vmatprep.mubr.f32.mxu0 0.0
      %591 = vmatmul.mubr.f32.gmra.mrb[0].mxu0 %v475
      %v592 = vpop.f32.mrb[0].mxu0
      %v593 = vadd.f32 0.0, %v592
      %v594 = vpop.f32.mrb[0].mxu0
      %595 = vmatprep.mubr.f32.mxu0 0.0
      %596 = vmatmul.mubr.f32.gmra.mrb[0].mxu0 %v478
      %v597 = vpop.f32.mrb[0].mxu0
      %v598 = vadd.f32 0.0, %v597
      %v599 = vpop.f32.mrb[0].mxu0
      %600 = vmatprep.mubr.f32.mxu0 0.0
      %601 = vmatmul.mubr.f32.gmra.mrb[0].mxu0 %v481
      %v602 = vpop.f32.mrb[0].mxu0
      %v603 = vadd.f32 0.0, %v602
      %v604 = vpop.f32.mrb[0].mxu0
      %605 = vmatprep.mubr.f32.mxu0 0.0
      %606 = vmatmul.mubr.f32.gmra.mrb[0].mxu0 %v484
      %v607 = vpop.f32.mrb[0].mxu0
      %v608 = vadd.f32 0.0, %v607
      %v609 = vpop.f32.mrb[0].mxu0
      %610 = vmatprep.mubr.f32.mxu0 0.0
      %611 = vmatmul.mubr.f32.gmra.mrb[0].mxu0 %v487
      %v612 = vpop.f32.mrb[0].mxu0
      %v613 = vadd.f32 0.0, %v612
      %v614 = vpop.f32.mrb[0].mxu0
      %615 = vmatprep.mubr.f32.mxu0 0.0
      %616 = vmatmul.mubr.f32.gmra.mrb[0].mxu0 %v490
      %v617 = vpop.f32.mrb[0].mxu0
      %v618 = vadd.f32 0.0, %v617
      %v619 = vpop.f32.mrb[0].mxu0
      %620 = vmatprep.mubr.f32.mxu0 0.0
      %621 = vmatmul.mubr.f32.gmra.mrb[0].mxu0 %v493
      %v622 = vpop.f32.mrb[0].mxu0
      %v623 = vadd.f32 0.0, %v622
      %v624 = vpop.f32.mrb[0].mxu0
      %625 = vmatprep.mubr.f32.mxu0 0.0
      %626 = vmatmul.mubr.f32.gmra.mrb[0].mxu0 %v496
      %v627 = vpop.f32.mrb[0].mxu0
      %v628 = vadd.f32 0.0, %v627
      %v629 = vpop.f32.mrb[0].mxu0
      %630 = vmatprep.mubr.f32.mxu0 0.0
      %631 = vmatmul.mubr.f32.gmra.mrb[0].mxu0 %v499
      %v632 = vpop.f32.mrb[0].mxu0
      %v633 = vadd.f32 0.0, %v632
      %v634 = vpop.f32.mrb[0].mxu0
      %635 = vmatprep.mubr.f32.mxu0 0.0
      %636 = vmatmul.mubr.f32.gmra.mrb[0].mxu0 %v502
      %v637 = vpop.f32.mrb[0].mxu0
      %v638 = vadd.f32 0.0, %v637
      %v639 = vpop.f32.mrb[0].mxu0
      %640 = vmatprep.mubr.f32.mxu0 0.0
      %641 = vmatmul.mubr.f32.gmra.mrb[0].mxu0 %v505
      %v642 = vpop.f32.mrb[0].mxu0
      %v643 = vadd.f32 0.0, %v642
      %v644 = vpop.f32.mrb[0].mxu0
      %645 = vmatprep.mubr.f32.mxu0 0.0
      %646 = vmatmul.mubr.f32.gmra.mrb[0].mxu0 %v508
      %v647 = vpop.f32.mrb[0].mxu0
      %v648 = vadd.f32 0.0, %v647
      %v649 = vpop.f32.mrb[0].mxu0
      %650 = vmatprep.mubr.f32.mxu0 0.0
      %651 = vmatmul.mubr.f32.gmra.mrb[0].mxu0 %v511
      %v652 = vpop.f32.mrb[0].mxu0
      %v653 = vadd.f32 0.0, %v652
      %v654 = vpop.f32.mrb[0].mxu0
      %655 = vmatprep.mubr.f32.mxu0 0.0
      %656 = vmatmul.mubr.f32.gmra.mrb[0].mxu0 %v514
      %v657 = vpop.f32.mrb[0].mxu0
      %v658 = vadd.f32 0.0, %v657
      %v659 = vpop.f32.mrb[0].mxu0
      %660 = vdwg.mxu0
      %661 = vst [vmem:[#allocation2] sm:$0xff] %v583
      %662 = vst [vmem:[#allocation2 + $0x8] sm:$0xff] %v588
      %663 = vst [vmem:[#allocation2 + $0x10] sm:$0xff] %v593
      %664 = vst [vmem:[#allocation2 + $0x18] sm:$0xff] %v598
      %665 = vst [vmem:[#allocation2 + $0x20] sm:$0xff] %v603
      %666 = vst [vmem:[#allocation2 + $0x28] sm:$0xff] %v608
      %667 = vst [vmem:[#allocation2 + $0x30] sm:$0xff] %v613
      %668 = vst [vmem:[#allocation2 + $0x38] sm:$0xff] %v618
      %669 = vst [vmem:[#allocation2 + $0x40] sm:$0xff] %v623
      %670 = vst [vmem:[#allocation2 + $0x48] sm:$0xff] %v628
      %671 = vst [vmem:[#allocation2 + $0x50] sm:$0xff] %v633
      %672 = vst [vmem:[#allocation2 + $0x58] sm:$0xff] %v638
      %673 = vst [vmem:[#allocation2 + $0x60] sm:$0xff] %v643
      %674 = vst [vmem:[#allocation2 + $0x68] sm:$0xff] %v648
      %675 = vst [vmem:[#allocation2 + $0x70] sm:$0xff] %v653
      %676 = vst [vmem:[#allocation2 + $0x78] sm:$0xff] %v658
      %s677 = sadd.s32 %s297, 1
      %s678 = scalar_lea.vmem %s280, %s677
      %v679 = vld [vmem:[%s678] sm:$0xff]
      %v680 = vld [vmem:[%s678 + $0x8] sm:$0xff]
      %v681 = vld [vmem:[%s678 + $0x10] sm:$0xff]
      %v682 = vld [vmem:[%s678 + $0x18] sm:$0xff]
      %v683 = vld [vmem:[%s678 + $0x20] sm:$0xff]
      %v684 = vld [vmem:[%s678 + $0x28] sm:$0xff]
      %v685 = vld [vmem:[%s678 + $0x30] sm:$0xff]
      %v686 = vld [vmem:[%s678 + $0x38] sm:$0xff]
      %v687 = vld [vmem:[%s678 + $0x40] sm:$0xff]
      %v688 = vld [vmem:[%s678 + $0x48] sm:$0xff]
      %v689 = vld [vmem:[%s678 + $0x50] sm:$0xff]
      %v690 = vld [vmem:[%s678 + $0x58] sm:$0xff]
      %v691 = vld [vmem:[%s678 + $0x60] sm:$0xff]
      %v692 = vld [vmem:[%s678 + $0x68] sm:$0xff]
      %v693 = vld [vmem:[%s678 + $0x70] sm:$0xff]
      %v694 = vld [vmem:[%s678 + $0x78] sm:$0xff]
      %s695 = scalar_lea.vmem %s2, 64
      %v696 = vld [vmem:[%s695] sm:$0xff]
      %v697 = vld [vmem:[%s695 + $0x8] sm:$0xff]
      %v698 = vld [vmem:[%s695 + $0x10] sm:$0xff]
      %v699 = vld [vmem:[%s695 + $0x18] sm:$0xff]
      %v700 = vld [vmem:[%s695 + $0x20] sm:$0xff]
      %v701 = vld [vmem:[%s695 + $0x28] sm:$0xff]
      %v702 = vld [vmem:[%s695 + $0x30] sm:$0xff]
      %v703 = vld [vmem:[%s695 + $0x38] sm:$0xff]
      %v705 = vsel %vm467, %v679, 0
      %v708 = vsel %vm467, %v680, 0
      %v711 = vsel %vm467, %v681, 0
      %v714 = vsel %vm467, %v682, 0
      %v717 = vsel %vm467, %v683, 0
      %v720 = vsel %vm467, %v684, 0
      %v723 = vsel %vm467, %v685, 0
      %v726 = vsel %vm467, %v686, 0
      %v729 = vsel %vm467, %v687, 0
      %v732 = vsel %vm467, %v688, 0
      %v735 = vsel %vm467, %v689, 0
      %v738 = vsel %vm467, %v690, 0
      %v741 = vsel %vm467, %v691, 0
      %v744 = vsel %vm467, %v692, 0
      %v747 = vsel %vm467, %v693, 0
      %v750 = vsel %vm467, %v694, 0
      %752 = vmatprep.subr.mxu0 0.0
      %753 = vmatpush1.msra.mxu0 %v696
      %754 = vmatprep.subr.mxu0 0.0
      %755 = vmatpush1.msra.mxu0 %v697
      %756 = vmatprep.subr.mxu0 0.0
      %757 = vmatpush1.msra.mxu0 %v698
      %758 = vmatprep.subr.mxu0 0.0
      %759 = vmatpush1.msra.mxu0 %v699
      %760 = vmatprep.subr.mxu0 0.0
      %761 = vmatpush1.msra.mxu0 %v700
      %762 = vmatprep.subr.mxu0 0.0
      %763 = vmatpush1.msra.mxu0 %v701
      %764 = vmatprep.subr.mxu0 0.0
      %765 = vmatpush1.msra.mxu0 %v702
      %766 = vmatprep.subr.mxu0 0.0
      %767 = vmatpush1.msra.mxu0 %v703
      %768 = vmatprep.subr.mxu0 0.0
      %769 = vmatpush1.msra.mxu0 0.0
      %770 = vmatprep.subr.mxu0 0.0
      %771 = vmatpush1.msra.mxu0 0.0
      %772 = vmatprep.subr.mxu0 0.0
      %773 = vmatpush1.msra.mxu0 0.0
      %774 = vmatprep.subr.mxu0 0.0
      %775 = vmatpush1.msra.mxu0 0.0
      %776 = vmatprep.subr.mxu0 0.0
      %777 = vmatpush1.msra.mxu0 0.0
      %778 = vmatprep.subr.mxu0 0.0
      %779 = vmatpush1.msra.mxu0 0.0
      %780 = vmatprep.subr.mxu0 0.0
      %781 = vmatpush1.msra.mxu0 0.0
      %782 = vmatprep.subr.mxu0 0.0
      %783 = vmatpush1.msra.mxu0 0.0
      %784 = vmatprep.subr.mxu0 0.0
      %785 = vmatpush1.msra.mxu0 0.0
      %786 = vmatprep.subr.mxu0 0.0
      %787 = vmatpush1.msra.mxu0 0.0
      %788 = vmatprep.subr.mxu0 0.0
      %789 = vmatpush1.msra.mxu0 0.0
      %790 = vmatprep.subr.mxu0 0.0
      %791 = vmatpush1.msra.mxu0 0.0
      %792 = vmatprep.subr.mxu0 0.0
      %793 = vmatpush1.msra.mxu0 0.0
      %794 = vmatprep.subr.mxu0 0.0
      %795 = vmatpush1.msra.mxu0 0.0
      %796 = vmatprep.subr.mxu0 0.0
      %797 = vmatpush1.msra.mxu0 0.0
      %798 = vmatprep.subr.mxu0 0.0
      %799 = vmatpush1.msra.mxu0 0.0
      %800 = vmatprep.subr.mxu0 0.0
      %801 = vmatpush1.msra.mxu0 0.0
      %802 = vmatprep.subr.mxu0 0.0
      %803 = vmatpush1.msra.mxu0 0.0
      %804 = vmatprep.subr.mxu0 0.0
      %805 = vmatpush1.msra.mxu0 0.0
      %806 = vmatprep.subr.mxu0 0.0
      %807 = vmatpush1.msra.mxu0 0.0
      %808 = vmatprep.subr.mxu0 0.0
      %809 = vmatpush1.msra.mxu0 0.0
      %810 = vmatprep.subr.mxu0 0.0
      %811 = vmatpush1.msra.mxu0 0.0
      %812 = vmatprep.subr.mxu0 0.0
      %813 = vmatpush1.msra.mxu0 0.0
      %814 = vmatprep.subr.mxu0 0.0
      %815 = vmatpush1.msra.mxu0 0.0
      %816 = vmatprep.mubr.f32.mxu0 0.0
      %817 = vmatmul.mubr.f32.gmra.mrb[0].mxu0 %v705
      %v818 = vpop.f32.mrb[0].mxu0
      %v819 = vadd.f32 0.0, %v818
      %v820 = vpop.f32.mrb[0].mxu0
      %821 = vmatprep.mubr.f32.mxu0 0.0
      %822 = vmatmul.mubr.f32.gmra.mrb[0].mxu0 %v708
      %v823 = vpop.f32.mrb[0].mxu0
      %v824 = vadd.f32 0.0, %v823
      %v825 = vpop.f32.mrb[0].mxu0
      %826 = vmatprep.mubr.f32.mxu0 0.0
      %827 = vmatmul.mubr.f32.gmra.mrb[0].mxu0 %v711
      %v828 = vpop.f32.mrb[0].mxu0
      %v829 = vadd.f32 0.0, %v828
      %v830 = vpop.f32.mrb[0].mxu0
      %831 = vmatprep.mubr.f32.mxu0 0.0
      %832 = vmatmul.mubr.f32.gmra.mrb[0].mxu0 %v714
      %v833 = vpop.f32.mrb[0].mxu0
      %v834 = vadd.f32 0.0, %v833
      %v835 = vpop.f32.mrb[0].mxu0
      %836 = vmatprep.mubr.f32.mxu0 0.0
      %837 = vmatmul.mubr.f32.gmra.mrb[0].mxu0 %v717
      %v838 = vpop.f32.mrb[0].mxu0
      %v839 = vadd.f32 0.0, %v838
      %v840 = vpop.f32.mrb[0].mxu0
      %841 = vmatprep.mubr.f32.mxu0 0.0
      %842 = vmatmul.mubr.f32.gmra.mrb[0].mxu0 %v720
      %v843 = vpop.f32.mrb[0].mxu0
      %v844 = vadd.f32 0.0, %v843
      %v845 = vpop.f32.mrb[0].mxu0
      %846 = vmatprep.mubr.f32.mxu0 0.0
      %847 = vmatmul.mubr.f32.gmra.mrb[0].mxu0 %v723
      %v848 = vpop.f32.mrb[0].mxu0
      %v849 = vadd.f32 0.0, %v848
      %v850 = vpop.f32.mrb[0].mxu0
      %851 = vmatprep.mubr.f32.mxu0 0.0
      %852 = vmatmul.mubr.f32.gmra.mrb[0].mxu0 %v726
      %v853 = vpop.f32.mrb[0].mxu0
      %v854 = vadd.f32 0.0, %v853
      %v855 = vpop.f32.mrb[0].mxu0
      %856 = vmatprep.mubr.f32.mxu0 0.0
      %857 = vmatmul.mubr.f32.gmra.mrb[0].mxu0 %v729
      %v858 = vpop.f32.mrb[0].mxu0
      %v859 = vadd.f32 0.0, %v858
      %v860 = vpop.f32.mrb[0].mxu0
      %861 = vmatprep.mubr.f32.mxu0 0.0
      %862 = vmatmul.mubr.f32.gmra.mrb[0].mxu0 %v732
      %v863 = vpop.f32.mrb[0].mxu0
      %v864 = vadd.f32 0.0, %v863
      %v865 = vpop.f32.mrb[0].mxu0
      %866 = vmatprep.mubr.f32.mxu0 0.0
      %867 = vmatmul.mubr.f32.gmra.mrb[0].mxu0 %v735
      %v868 = vpop.f32.mrb[0].mxu0
      %v869 = vadd.f32 0.0, %v868
      %v870 = vpop.f32.mrb[0].mxu0
      %871 = vmatprep.mubr.f32.mxu0 0.0
      %872 = vmatmul.mubr.f32.gmra.mrb[0].mxu0 %v738
      %v873 = vpop.f32.mrb[0].mxu0
      %v874 = vadd.f32 0.0, %v873
      %v875 = vpop.f32.mrb[0].mxu0
      %876 = vmatprep.mubr.f32.mxu0 0.0
      %877 = vmatmul.mubr.f32.gmra.mrb[0].mxu0 %v741
      %v878 = vpop.f32.mrb[0].mxu0
      %v879 = vadd.f32 0.0, %v878
      %v880 = vpop.f32.mrb[0].mxu0
      %881 = vmatprep.mubr.f32.mxu0 0.0
      %882 = vmatmul.mubr.f32.gmra.mrb[0].mxu0 %v744
      %v883 = vpop.f32.mrb[0].mxu0
      %v884 = vadd.f32 0.0, %v883
      %v885 = vpop.f32.mrb[0].mxu0
      %886 = vmatprep.mubr.f32.mxu0 0.0
      %887 = vmatmul.mubr.f32.gmra.mrb[0].mxu0 %v747
      %v888 = vpop.f32.mrb[0].mxu0
      %v889 = vadd.f32 0.0, %v888
      %v890 = vpop.f32.mrb[0].mxu0
      %891 = vmatprep.mubr.f32.mxu0 0.0
      %892 = vmatmul.mubr.f32.gmra.mrb[0].mxu0 %v750
      %v893 = vpop.f32.mrb[0].mxu0
      %v894 = vadd.f32 0.0, %v893
      %v895 = vpop.f32.mrb[0].mxu0
      %896 = vdwg.mxu0
      %v897 = vld [vmem:[#allocation2] sm:$0xff]
      %v898 = vld [vmem:[#allocation2 + $0x8] sm:$0xff]
      %v899 = vld [vmem:[#allocation2 + $0x10] sm:$0xff]
      %v900 = vld [vmem:[#allocation2 + $0x18] sm:$0xff]
      %v901 = vld [vmem:[#allocation2 + $0x20] sm:$0xff]
      %v902 = vld [vmem:[#allocation2 + $0x28] sm:$0xff]
      %v903 = vld [vmem:[#allocation2 + $0x30] sm:$0xff]
      %v904 = vld [vmem:[#allocation2 + $0x38] sm:$0xff]
      %v905 = vld [vmem:[#allocation2 + $0x40] sm:$0xff]
      %v906 = vld [vmem:[#allocation2 + $0x48] sm:$0xff]
      %v907 = vld [vmem:[#allocation2 + $0x50] sm:$0xff]
      %v908 = vld [vmem:[#allocation2 + $0x58] sm:$0xff]
      %v909 = vld [vmem:[#allocation2 + $0x60] sm:$0xff]
      %v910 = vld [vmem:[#allocation2 + $0x68] sm:$0xff]
      %v911 = vld [vmem:[#allocation2 + $0x70] sm:$0xff]
      %v912 = vld [vmem:[#allocation2 + $0x78] sm:$0xff]
      %v913 = vadd.f32 %v897, %v819
      %v914 = vadd.f32 %v898, %v824
      %v915 = vadd.f32 %v899, %v829
      %v916 = vadd.f32 %v900, %v834
      %v917 = vadd.f32 %v901, %v839
      %v918 = vadd.f32 %v902, %v844
      %v919 = vadd.f32 %v903, %v849
      %v920 = vadd.f32 %v904, %v854
      %v921 = vadd.f32 %v905, %v859
      %v922 = vadd.f32 %v906, %v864
      %v923 = vadd.f32 %v907, %v869
      %v924 = vadd.f32 %v908, %v874
      %v925 = vadd.f32 %v909, %v879
      %v926 = vadd.f32 %v910, %v884
      %v927 = vadd.f32 %v911, %v889
      %v928 = vadd.f32 %v912, %v894
      %929 = vst [vmem:[#allocation2] sm:$0xff] %v913
      %930 = vst [vmem:[#allocation2 + $0x8] sm:$0xff] %v914
      %931 = vst [vmem:[#allocation2 + $0x10] sm:$0xff] %v915
      %932 = vst [vmem:[#allocation2 + $0x18] sm:$0xff] %v916
      %933 = vst [vmem:[#allocation2 + $0x20] sm:$0xff] %v917
      %934 = vst [vmem:[#allocation2 + $0x28] sm:$0xff] %v918
      %935 = vst [vmem:[#allocation2 + $0x30] sm:$0xff] %v919
      %936 = vst [vmem:[#allocation2 + $0x38] sm:$0xff] %v920
      %937 = vst [vmem:[#allocation2 + $0x40] sm:$0xff] %v921
      %938 = vst [vmem:[#allocation2 + $0x48] sm:$0xff] %v922
      %939 = vst [vmem:[#allocation2 + $0x50] sm:$0xff] %v923
      %940 = vst [vmem:[#allocation2 + $0x58] sm:$0xff] %v924
      %941 = vst [vmem:[#allocation2 + $0x60] sm:$0xff] %v925
      %942 = vst [vmem:[#allocation2 + $0x68] sm:$0xff] %v926
      %943 = vst [vmem:[#allocation2 + $0x70] sm:$0xff] %v927
      %944 = vst [vmem:[#allocation2 + $0x78] sm:$0xff] %v928
      %s945 = sadd.s32 %s297, 2
      %s946 = scalar_lea.vmem %s280, %s945
      %v947 = vld [vmem:[%s946] sm:$0xff]
      %v948 = vld [vmem:[%s946 + $0x8] sm:$0xff]
      %v949 = vld [vmem:[%s946 + $0x10] sm:$0xff]
      %v950 = vld [vmem:[%s946 + $0x18] sm:$0xff]
      %v951 = vld [vmem:[%s946 + $0x20] sm:$0xff]
      %v952 = vld [vmem:[%s946 + $0x28] sm:$0xff]
      %v953 = vld [vmem:[%s946 + $0x30] sm:$0xff]
      %v954 = vld [vmem:[%s946 + $0x38] sm:$0xff]
      %v955 = vld [vmem:[%s946 + $0x40] sm:$0xff]
      %v956 = vld [vmem:[%s946 + $0x48] sm:$0xff]
      %v957 = vld [vmem:[%s946 + $0x50] sm:$0xff]
      %v958 = vld [vmem:[%s946 + $0x58] sm:$0xff]
      %v959 = vld [vmem:[%s946 + $0x60] sm:$0xff]
      %v960 = vld [vmem:[%s946 + $0x68] sm:$0xff]
      %v961 = vld [vmem:[%s946 + $0x70] sm:$0xff]
      %v962 = vld [vmem:[%s946 + $0x78] sm:$0xff]
      %v963 = vsel %vm330, 1, 0
      %v964 = vsel %vm331, 1, 0
      %v965 = vsel %vm332, 1, 0
      %v966 = vsel %vm333, 1, 0
      %v967 = vsel %vm334, 1, 0
      %v968 = vsel %vm335, 1, 0
      %v969 = vsel %vm336, 1, 0
      %v970 = vsel %vm337, 1, 0
      %v971 = vsel %vm338, 1, 0
      %v972 = vsel %vm339, 1, 0
      %v973 = vsel %vm340, 1, 0
      %v974 = vsel %vm341, 1, 0
      %v975 = vsel %vm342, 1, 0
      %v976 = vsel %vm343, 1, 0
      %v977 = vsel %vm344, 1, 0
      %v978 = vsel %vm345, 1, 0
      %979 = vset.pattern.permute.xlu0 0
      %980 = vperm.xlu0 %979, %v963
      %v981 = vpop.permute.xlu0 %980
      %982 = vset.pattern.permute.xlu0 0
      %983 = vperm.xlu0 %982, %v964
      %v984 = vpop.permute.xlu0 %983
      %985 = vset.pattern.permute.xlu0 0
      %986 = vperm.xlu0 %985, %v965
      %v987 = vpop.permute.xlu0 %986
      %988 = vset.pattern.permute.xlu0 0
      %989 = vperm.xlu0 %988, %v966
      %v990 = vpop.permute.xlu0 %989
      %991 = vset.pattern.permute.xlu0 0
      %992 = vperm.xlu0 %991, %v967
      %v993 = vpop.permute.xlu0 %992
      %994 = vset.pattern.permute.xlu0 0
      %995 = vperm.xlu0 %994, %v968
      %v996 = vpop.permute.xlu0 %995
      %997 = vset.pattern.permute.xlu0 0
      %998 = vperm.xlu0 %997, %v969
      %v999 = vpop.permute.xlu0 %998
      %1000 = vset.pattern.permute.xlu0 0
      %1001 = vperm.xlu0 %1000, %v970
      %v1002 = vpop.permute.xlu0 %1001
      %1003 = vset.pattern.permute.xlu0 0
      %1004 = vperm.xlu0 %1003, %v971
      %v1005 = vpop.permute.xlu0 %1004
      %1006 = vset.pattern.permute.xlu0 0
      %1007 = vperm.xlu0 %1006, %v972
      %v1008 = vpop.permute.xlu0 %1007
      %1009 = vset.pattern.permute.xlu0 0
      %1010 = vperm.xlu0 %1009, %v973
      %v1011 = vpop.permute.xlu0 %1010
      %1012 = vset.pattern.permute.xlu0 0
      %1013 = vperm.xlu0 %1012, %v974
      %v1014 = vpop.permute.xlu0 %1013
      %1015 = vset.pattern.permute.xlu0 0
      %1016 = vperm.xlu0 %1015, %v975
      %v1017 = vpop.permute.xlu0 %1016
      %1018 = vset.pattern.permute.xlu0 0
      %1019 = vperm.xlu0 %1018, %v976
      %v1020 = vpop.permute.xlu0 %1019
      %1021 = vset.pattern.permute.xlu0 0
      %1022 = vperm.xlu0 %1021, %v977
      %v1023 = vpop.permute.xlu0 %1022
      %1024 = vset.pattern.permute.xlu0 0
      %1025 = vperm.xlu0 %1024, %v978
      %v1026 = vpop.permute.xlu0 %1025
      %vm1027 = vcmp.eq.s32.totalorder %v981, 1
      %vm1028 = vcmp.eq.s32.totalorder %v984, 1
      %vm1029 = vcmp.eq.s32.totalorder %v987, 1
      %vm1030 = vcmp.eq.s32.totalorder %v990, 1
      %vm1031 = vcmp.eq.s32.totalorder %v993, 1
      %vm1032 = vcmp.eq.s32.totalorder %v996, 1
      %vm1033 = vcmp.eq.s32.totalorder %v999, 1
      %vm1034 = vcmp.eq.s32.totalorder %v1002, 1
      %vm1035 = vcmp.eq.s32.totalorder %v1005, 1
      %vm1036 = vcmp.eq.s32.totalorder %v1008, 1
      %vm1037 = vcmp.eq.s32.totalorder %v1011, 1
      %vm1038 = vcmp.eq.s32.totalorder %v1014, 1
      %vm1039 = vcmp.eq.s32.totalorder %v1017, 1
      %vm1040 = vcmp.eq.s32.totalorder %v1020, 1
      %vm1041 = vcmp.eq.s32.totalorder %v1023, 1
      %vm1042 = vcmp.eq.s32.totalorder %v1026, 1
      %v1043 = vsel %vm1027, 0.0, %v947
      %v1044 = vsel %vm1028, 0.0, %v948
      %v1045 = vsel %vm1029, 0.0, %v949
      %v1046 = vsel %vm1030, 0.0, %v950
      %v1047 = vsel %vm1031, 0.0, %v951
      %v1048 = vsel %vm1032, 0.0, %v952
      %v1049 = vsel %vm1033, 0.0, %v953
      %v1050 = vsel %vm1034, 0.0, %v954
      %v1051 = vsel %vm1035, 0.0, %v955
      %v1052 = vsel %vm1036, 0.0, %v956
      %v1053 = vsel %vm1037, 0.0, %v957
      %v1054 = vsel %vm1038, 0.0, %v958
      %v1055 = vsel %vm1039, 0.0, %v959
      %v1056 = vsel %vm1040, 0.0, %v960
      %v1057 = vsel %vm1041, 0.0, %v961
      %v1058 = vsel %vm1042, 0.0, %v962
      %s1059 = scalar_lea.vmem %s2, 128
      %v1060 = vld [vmem:[%s1059] sm:$0xff]
      %v1061 = vld [vmem:[%s1059 + $0x8] sm:$0xff]
      %v1062 = vld [vmem:[%s1059 + $0x10] sm:$0xff]
      %v1063 = vld [vmem:[%s1059 + $0x18] sm:$0xff]
      %v1064 = vld [vmem:[%s1059 + $0x20] sm:$0xff]
      %v1065 = vld [vmem:[%s1059 + $0x28] sm:$0xff]
      %v1066 = vld [vmem:[%s1059 + $0x30] sm:$0xff]
      %v1067 = vld [vmem:[%s1059 + $0x38] sm:$0xff]
      %v1069 = vsel %vm467, %v1043, 0
      %v1072 = vsel %vm467, %v1044, 0
      %v1075 = vsel %vm467, %v1045, 0
      %v1078 = vsel %vm467, %v1046, 0
      %v1081 = vsel %vm467, %v1047, 0
      %v1084 = vsel %vm467, %v1048, 0
      %v1087 = vsel %vm467, %v1049, 0
      %v1090 = vsel %vm467, %v1050, 0
      %v1093 = vsel %vm467, %v1051, 0
      %v1096 = vsel %vm467, %v1052, 0
      %v1099 = vsel %vm467, %v1053, 0
      %v1102 = vsel %vm467, %v1054, 0
      %v1105 = vsel %vm467, %v1055, 0
      %v1108 = vsel %vm467, %v1056, 0
      %v1111 = vsel %vm467, %v1057, 0
      %v1114 = vsel %vm467, %v1058, 0
      %1116 = vmatprep.subr.mxu0 0.0
      %1117 = vmatpush1.msra.mxu0 %v1060
      %1118 = vmatprep.subr.mxu0 0.0
      %1119 = vmatpush1.msra.mxu0 %v1061
      %1120 = vmatprep.subr.mxu0 0.0
      %1121 = vmatpush1.msra.mxu0 %v1062
      %1122 = vmatprep.subr.mxu0 0.0
      %1123 = vmatpush1.msra.mxu0 %v1063
      %1124 = vmatprep.subr.mxu0 0.0
      %1125 = vmatpush1.msra.mxu0 %v1064
      %1126 = vmatprep.subr.mxu0 0.0
      %1127 = vmatpush1.msra.mxu0 %v1065
      %1128 = vmatprep.subr.mxu0 0.0
      %1129 = vmatpush1.msra.mxu0 %v1066
      %1130 = vmatprep.subr.mxu0 0.0
      %1131 = vmatpush1.msra.mxu0 %v1067
      %1132 = vmatprep.subr.mxu0 0.0
      %1133 = vmatpush1.msra.mxu0 0.0
      %1134 = vmatprep.subr.mxu0 0.0
      %1135 = vmatpush1.msra.mxu0 0.0
      %1136 = vmatprep.subr.mxu0 0.0
      %1137 = vmatpush1.msra.mxu0 0.0
      %1138 = vmatprep.subr.mxu0 0.0
      %1139 = vmatpush1.msra.mxu0 0.0
      %1140 = vmatprep.subr.mxu0 0.0
      %1141 = vmatpush1.msra.mxu0 0.0
      %1142 = vmatprep.subr.mxu0 0.0
      %1143 = vmatpush1.msra.mxu0 0.0
      %1144 = vmatprep.subr.mxu0 0.0
      %1145 = vmatpush1.msra.mxu0 0.0
      %1146 = vmatprep.subr.mxu0 0.0
      %1147 = vmatpush1.msra.mxu0 0.0
      %1148 = vmatprep.subr.mxu0 0.0
      %1149 = vmatpush1.msra.mxu0 0.0
      %1150 = vmatprep.subr.mxu0 0.0
      %1151 = vmatpush1.msra.mxu0 0.0
      %1152 = vmatprep.subr.mxu0 0.0
      %1153 = vmatpush1.msra.mxu0 0.0
      %1154 = vmatprep.subr.mxu0 0.0
      %1155 = vmatpush1.msra.mxu0 0.0
      %1156 = vmatprep.subr.mxu0 0.0
      %1157 = vmatpush1.msra.mxu0 0.0
      %1158 = vmatprep.subr.mxu0 0.0
      %1159 = vmatpush1.msra.mxu0 0.0
      %1160 = vmatprep.subr.mxu0 0.0
      %1161 = vmatpush1.msra.mxu0 0.0
      %1162 = vmatprep.subr.mxu0 0.0
      %1163 = vmatpush1.msra.mxu0 0.0
      %1164 = vmatprep.subr.mxu0 0.0
      %1165 = vmatpush1.msra.mxu0 0.0
      %1166 = vmatprep.subr.mxu0 0.0
      %1167 = vmatpush1.msra.mxu0 0.0
      %1168 = vmatprep.subr.mxu0 0.0
      %1169 = vmatpush1.msra.mxu0 0.0
      %1170 = vmatprep.subr.mxu0 0.0
      %1171 = vmatpush1.msra.mxu0 0.0
      %1172 = vmatprep.subr.mxu0 0.0
      %1173 = vmatpush1.msra.mxu0 0.0
      %1174 = vmatprep.subr.mxu0 0.0
      %1175 = vmatpush1.msra.mxu0 0.0
      %1176 = vmatprep.subr.mxu0 0.0
      %1177 = vmatpush1.msra.mxu0 0.0
      %1178 = vmatprep.subr.mxu0 0.0
      %1179 = vmatpush1.msra.mxu0 0.0
      %1180 = vmatprep.mubr.f32.mxu0 0.0
      %1181 = vmatmul.mubr.f32.gmra.mrb[0].mxu0 %v1069
      %v1182 = vpop.f32.mrb[0].mxu0
      %v1183 = vadd.f32 0.0, %v1182
      %v1184 = vpop.f32.mrb[0].mxu0
      %1185 = vmatprep.mubr.f32.mxu0 0.0
      %1186 = vmatmul.mubr.f32.gmra.mrb[0].mxu0 %v1072
      %v1187 = vpop.f32.mrb[0].mxu0
      %v1188 = vadd.f32 0.0, %v1187
      %v1189 = vpop.f32.mrb[0].mxu0
      %1190 = vmatprep.mubr.f32.mxu0 0.0
      %1191 = vmatmul.mubr.f32.gmra.mrb[0].mxu0 %v1075
      %v1192 = vpop.f32.mrb[0].mxu0
      %v1193 = vadd.f32 0.0, %v1192
      %v1194 = vpop.f32.mrb[0].mxu0
      %1195 = vmatprep.mubr.f32.mxu0 0.0
      %1196 = vmatmul.mubr.f32.gmra.mrb[0].mxu0 %v1078
      %v1197 = vpop.f32.mrb[0].mxu0
      %v1198 = vadd.f32 0.0, %v1197
      %v1199 = vpop.f32.mrb[0].mxu0
      %1200 = vmatprep.mubr.f32.mxu0 0.0
      %1201 = vmatmul.mubr.f32.gmra.mrb[0].mxu0 %v1081
      %v1202 = vpop.f32.mrb[0].mxu0
      %v1203 = vadd.f32 0.0, %v1202
      %v1204 = vpop.f32.mrb[0].mxu0
      %1205 = vmatprep.mubr.f32.mxu0 0.0
      %1206 = vmatmul.mubr.f32.gmra.mrb[0].mxu0 %v1084
      %v1207 = vpop.f32.mrb[0].mxu0
      %v1208 = vadd.f32 0.0, %v1207
      %v1209 = vpop.f32.mrb[0].mxu0
      %1210 = vmatprep.mubr.f32.mxu0 0.0
      %1211 = vmatmul.mubr.f32.gmra.mrb[0].mxu0 %v1087
      %v1212 = vpop.f32.mrb[0].mxu0
      %v1213 = vadd.f32 0.0, %v1212
      %v1214 = vpop.f32.mrb[0].mxu0
      %1215 = vmatprep.mubr.f32.mxu0 0.0
      %1216 = vmatmul.mubr.f32.gmra.mrb[0].mxu0 %v1090
      %v1217 = vpop.f32.mrb[0].mxu0
      %v1218 = vadd.f32 0.0, %v1217
      %v1219 = vpop.f32.mrb[0].mxu0
      %1220 = vmatprep.mubr.f32.mxu0 0.0
      %1221 = vmatmul.mubr.f32.gmra.mrb[0].mxu0 %v1093
      %v1222 = vpop.f32.mrb[0].mxu0
      %v1223 = vadd.f32 0.0, %v1222
      %v1224 = vpop.f32.mrb[0].mxu0
      %1225 = vmatprep.mubr.f32.mxu0 0.0
      %1226 = vmatmul.mubr.f32.gmra.mrb[0].mxu0 %v1096
      %v1227 = vpop.f32.mrb[0].mxu0
      %v1228 = vadd.f32 0.0, %v1227
      %v1229 = vpop.f32.mrb[0].mxu0
      %1230 = vmatprep.mubr.f32.mxu0 0.0
      %1231 = vmatmul.mubr.f32.gmra.mrb[0].mxu0 %v1099
      %v1232 = vpop.f32.mrb[0].mxu0
      %v1233 = vadd.f32 0.0, %v1232
      %v1234 = vpop.f32.mrb[0].mxu0
      %1235 = vmatprep.mubr.f32.mxu0 0.0
      %1236 = vmatmul.mubr.f32.gmra.mrb[0].mxu0 %v1102
      %v1237 = vpop.f32.mrb[0].mxu0
      %v1238 = vadd.f32 0.0, %v1237
      %v1239 = vpop.f32.mrb[0].mxu0
      %1240 = vmatprep.mubr.f32.mxu0 0.0
      %1241 = vmatmul.mubr.f32.gmra.mrb[0].mxu0 %v1105
      %v1242 = vpop.f32.mrb[0].mxu0
      %v1243 = vadd.f32 0.0, %v1242
      %v1244 = vpop.f32.mrb[0].mxu0
      %1245 = vmatprep.mubr.f32.mxu0 0.0
      %1246 = vmatmul.mubr.f32.gmra.mrb[0].mxu0 %v1108
      %v1247 = vpop.f32.mrb[0].mxu0
      %v1248 = vadd.f32 0.0, %v1247
      %v1249 = vpop.f32.mrb[0].mxu0
      %1250 = vmatprep.mubr.f32.mxu0 0.0
      %1251 = vmatmul.mubr.f32.gmra.mrb[0].mxu0 %v1111
      %v1252 = vpop.f32.mrb[0].mxu0
      %v1253 = vadd.f32 0.0, %v1252
      %v1254 = vpop.f32.mrb[0].mxu0
      %1255 = vmatprep.mubr.f32.mxu0 0.0
      %1256 = vmatmul.mubr.f32.gmra.mrb[0].mxu0 %v1114
      %v1257 = vpop.f32.mrb[0].mxu0
      %v1258 = vadd.f32 0.0, %v1257
      %v1259 = vpop.f32.mrb[0].mxu0
      %1260 = vdwg.mxu0
      %v1261 = vld [vmem:[#allocation2] sm:$0xff]
      %v1262 = vld [vmem:[#allocation2 + $0x8] sm:$0xff]
      %v1263 = vld [vmem:[#allocation2 + $0x10] sm:$0xff]
      %v1264 = vld [vmem:[#allocation2 + $0x18] sm:$0xff]
      %v1265 = vld [vmem:[#allocation2 + $0x20] sm:$0xff]
      %v1266 = vld [vmem:[#allocation2 + $0x28] sm:$0xff]
      %v1267 = vld [vmem:[#allocation2 + $0x30] sm:$0xff]
      %v1268 = vld [vmem:[#allocation2 + $0x38] sm:$0xff]
      %v1269 = vld [vmem:[#allocation2 + $0x40] sm:$0xff]
      %v1270 = vld [vmem:[#allocation2 + $0x48] sm:$0xff]
      %v1271 = vld [vmem:[#allocation2 + $0x50] sm:$0xff]
      %v1272 = vld [vmem:[#allocation2 + $0x58] sm:$0xff]
      %v1273 = vld [vmem:[#allocation2 + $0x60] sm:$0xff]
      %v1274 = vld [vmem:[#allocation2 + $0x68] sm:$0xff]
      %v1275 = vld [vmem:[#allocation2 + $0x70] sm:$0xff]
      %v1276 = vld [vmem:[#allocation2 + $0x78] sm:$0xff]
      %v1277 = vadd.f32 %v1261, %v1183
      %v1278 = vadd.f32 %v1262, %v1188
      %v1279 = vadd.f32 %v1263, %v1193
      %v1280 = vadd.f32 %v1264, %v1198
      %v1281 = vadd.f32 %v1265, %v1203
      %v1282 = vadd.f32 %v1266, %v1208
      %v1283 = vadd.f32 %v1267, %v1213
      %v1284 = vadd.f32 %v1268, %v1218
      %v1285 = vadd.f32 %v1269, %v1223
      %v1286 = vadd.f32 %v1270, %v1228
      %v1287 = vadd.f32 %v1271, %v1233
      %v1288 = vadd.f32 %v1272, %v1238
      %v1289 = vadd.f32 %v1273, %v1243
      %v1290 = vadd.f32 %v1274, %v1248
      %v1291 = vadd.f32 %v1275, %v1253
      %v1292 = vadd.f32 %v1276, %v1258
      %1293 = vst [vmem:[#allocation2] sm:$0xff] %v1277
      %1294 = vst [vmem:[#allocation2 + $0x8] sm:$0xff] %v1278
      %1295 = vst [vmem:[#allocation2 + $0x10] sm:$0xff] %v1279
      %1296 = vst [vmem:[#allocation2 + $0x18] sm:$0xff] %v1280
      %1297 = vst [vmem:[#allocation2 + $0x20] sm:$0xff] %v1281
      %1298 = vst [vmem:[#allocation2 + $0x28] sm:$0xff] %v1282
      %1299 = vst [vmem:[#allocation2 + $0x30] sm:$0xff] %v1283
      %1300 = vst [vmem:[#allocation2 + $0x38] sm:$0xff] %v1284
      %1301 = vst [vmem:[#allocation2 + $0x40] sm:$0xff] %v1285
      %1302 = vst [vmem:[#allocation2 + $0x48] sm:$0xff] %v1286
      %1303 = vst [vmem:[#allocation2 + $0x50] sm:$0xff] %v1287
      %1304 = vst [vmem:[#allocation2 + $0x58] sm:$0xff] %v1288
      %1305 = vst [vmem:[#allocation2 + $0x60] sm:$0xff] %v1289
      %1306 = vst [vmem:[#allocation2 + $0x68] sm:$0xff] %v1290
      %1307 = vst [vmem:[#allocation2 + $0x70] sm:$0xff] %v1291
      %1308 = vst [vmem:[#allocation2 + $0x78] sm:$0xff] %v1292
      %s1309 = sadd.s32 %s297, 16
      %s1310 = scalar_lea.vmem %s280, %s1309
      %v1311 = vld [vmem:[%s1310] sm:$0xff]
      %v1312 = vld [vmem:[%s1310 + $0x8] sm:$0xff]
      %v1313 = vld [vmem:[%s1310 + $0x10] sm:$0xff]
      %v1314 = vld [vmem:[%s1310 + $0x18] sm:$0xff]
      %v1315 = vld [vmem:[%s1310 + $0x20] sm:$0xff]
      %v1316 = vld [vmem:[%s1310 + $0x28] sm:$0xff]
      %v1317 = vld [vmem:[%s1310 + $0x30] sm:$0xff]
      %v1318 = vld [vmem:[%s1310 + $0x38] sm:$0xff]
      %v1319 = vld [vmem:[%s1310 + $0x40] sm:$0xff]
      %v1320 = vld [vmem:[%s1310 + $0x48] sm:$0xff]
      %v1321 = vld [vmem:[%s1310 + $0x50] sm:$0xff]
      %v1322 = vld [vmem:[%s1310 + $0x58] sm:$0xff]
      %v1323 = vld [vmem:[%s1310 + $0x60] sm:$0xff]
      %v1324 = vld [vmem:[%s1310 + $0x68] sm:$0xff]
      %v1325 = vld [vmem:[%s1310 + $0x70] sm:$0xff]
      %v1326 = vld [vmem:[%s1310 + $0x78] sm:$0xff]
      %v1327 = vsel %vm427, 0.0, %v1311
      %v1328 = vsel %vm428, 0.0, %v1312
      %v1329 = vsel %vm429, 0.0, %v1313
      %v1330 = vsel %vm430, 0.0, %v1314
      %v1331 = vsel %vm431, 0.0, %v1315
      %v1332 = vsel %vm432, 0.0, %v1316
      %v1333 = vsel %vm433, 0.0, %v1317
      %v1334 = vsel %vm434, 0.0, %v1318
      %v1335 = vsel %vm435, 0.0, %v1319
      %v1336 = vsel %vm436, 0.0, %v1320
      %v1337 = vsel %vm437, 0.0, %v1321
      %v1338 = vsel %vm438, 0.0, %v1322
      %v1339 = vsel %vm439, 0.0, %v1323
      %v1340 = vsel %vm440, 0.0, %v1324
      %v1341 = vsel %vm441, 0.0, %v1325
      %v1342 = vsel %vm442, 0.0, %v1326
      %s1343 = scalar_lea.vmem %s2, 192
      %v1344 = vld [vmem:[%s1343] sm:$0xff]
      %v1345 = vld [vmem:[%s1343 + $0x8] sm:$0xff]
      %v1346 = vld [vmem:[%s1343 + $0x10] sm:$0xff]
      %v1347 = vld [vmem:[%s1343 + $0x18] sm:$0xff]
      %v1348 = vld [vmem:[%s1343 + $0x20] sm:$0xff]
      %v1349 = vld [vmem:[%s1343 + $0x28] sm:$0xff]
      %v1350 = vld [vmem:[%s1343 + $0x30] sm:$0xff]
      %v1351 = vld [vmem:[%s1343 + $0x38] sm:$0xff]
      %v1353 = vsel %vm467, %v1327, 0
      %v1356 = vsel %vm467, %v1328, 0
      %v1359 = vsel %vm467, %v1329, 0
      %v1362 = vsel %vm467, %v1330, 0
      %v1365 = vsel %vm467, %v1331, 0
      %v1368 = vsel %vm467, %v1332, 0
      %v1371 = vsel %vm467, %v1333, 0
      %v1374 = vsel %vm467, %v1334, 0
      %v1377 = vsel %vm467, %v1335, 0
      %v1380 = vsel %vm467, %v1336, 0
      %v1383 = vsel %vm467, %v1337, 0
      %v1386 = vsel %vm467, %v1338, 0
      %v1389 = vsel %vm467, %v1339, 0
      %v1392 = vsel %vm467, %v1340, 0
      %v1395 = vsel %vm467, %v1341, 0
      %v1398 = vsel %vm467, %v1342, 0
      %1400 = vmatprep.subr.mxu0 0.0
      %1401 = vmatpush1.msra.mxu0 %v1344
      %1402 = vmatprep.subr.mxu0 0.0
      %1403 = vmatpush1.msra.mxu0 %v1345
      %1404 = vmatprep.subr.mxu0 0.0
      %1405 = vmatpush1.msra.mxu0 %v1346
      %1406 = vmatprep.subr.mxu0 0.0
      %1407 = vmatpush1.msra.mxu0 %v1347
      %1408 = vmatprep.subr.mxu0 0.0
      %1409 = vmatpush1.msra.mxu0 %v1348
      %1410 = vmatprep.subr.mxu0 0.0
      %1411 = vmatpush1.msra.mxu0 %v1349
      %1412 = vmatprep.subr.mxu0 0.0
      %1413 = vmatpush1.msra.mxu0 %v1350
      %1414 = vmatprep.subr.mxu0 0.0
      %1415 = vmatpush1.msra.mxu0 %v1351
      %1416 = vmatprep.subr.mxu0 0.0
      %1417 = vmatpush1.msra.mxu0 0.0
      %1418 = vmatprep.subr.mxu0 0.0
      %1419 = vmatpush1.msra.mxu0 0.0
      %1420 = vmatprep.subr.mxu0 0.0
      %1421 = vmatpush1.msra.mxu0 0.0
      %1422 = vmatprep.subr.mxu0 0.0
      %1423 = vmatpush1.msra.mxu0 0.0
      %1424 = vmatprep.subr.mxu0 0.0
      %1425 = vmatpush1.msra.mxu0 0.0
      %1426 = vmatprep.subr.mxu0 0.0
      %1427 = vmatpush1.msra.mxu0 0.0
      %1428 = vmatprep.subr.mxu0 0.0
      %1429 = vmatpush1.msra.mxu0 0.0
      %1430 = vmatprep.subr.mxu0 0.0
      %1431 = vmatpush1.msra.mxu0 0.0
      %1432 = vmatprep.subr.mxu0 0.0
      %1433 = vmatpush1.msra.mxu0 0.0
      %1434 = vmatprep.subr.mxu0 0.0
      %1435 = vmatpush1.msra.mxu0 0.0
      %1436 = vmatprep.subr.mxu0 0.0
      %1437 = vmatpush1.msra.mxu0 0.0
      %1438 = vmatprep.subr.mxu0 0.0
      %1439 = vmatpush1.msra.mxu0 0.0
      %1440 = vmatprep.subr.mxu0 0.0
      %1441 = vmatpush1.msra.mxu0 0.0
      %1442 = vmatprep.subr.mxu0 0.0
      %1443 = vmatpush1.msra.mxu0 0.0
      %1444 = vmatprep.subr.mxu0 0.0
      %1445 = vmatpush1.msra.mxu0 0.0
      %1446 = vmatprep.subr.mxu0 0.0
      %1447 = vmatpush1.msra.mxu0 0.0
      %1448 = vmatprep.subr.mxu0 0.0
      %1449 = vmatpush1.msra.mxu0 0.0
      %1450 = vmatprep.subr.mxu0 0.0
      %1451 = vmatpush1.msra.mxu0 0.0
      %1452 = vmatprep.subr.mxu0 0.0
      %1453 = vmatpush1.msra.mxu0 0.0
      %1454 = vmatprep.subr.mxu0 0.0
      %1455 = vmatpush1.msra.mxu0 0.0
      %1456 = vmatprep.subr.mxu0 0.0
      %1457 = vmatpush1.msra.mxu0 0.0
      %1458 = vmatprep.subr.mxu0 0.0
      %1459 = vmatpush1.msra.mxu0 0.0
      %1460 = vmatprep.subr.mxu0 0.0
      %1461 = vmatpush1.msra.mxu0 0.0
      %1462 = vmatprep.subr.mxu0 0.0
      %1463 = vmatpush1.msra.mxu0 0.0
      %1464 = vmatprep.mubr.f32.mxu0 0.0
      %1465 = vmatmul.mubr.f32.gmra.mrb[0].mxu0 %v1353
      %v1466 = vpop.f32.mrb[0].mxu0
      %v1467 = vadd.f32 0.0, %v1466
      %v1468 = vpop.f32.mrb[0].mxu0
      %1469 = vmatprep.mubr.f32.mxu0 0.0
      %1470 = vmatmul.mubr.f32.gmra.mrb[0].mxu0 %v1356
      %v1471 = vpop.f32.mrb[0].mxu0
      %v1472 = vadd.f32 0.0, %v1471
      %v1473 = vpop.f32.mrb[0].mxu0
      %1474 = vmatprep.mubr.f32.mxu0 0.0
      %1475 = vmatmul.mubr.f32.gmra.mrb[0].mxu0 %v1359
      %v1476 = vpop.f32.mrb[0].mxu0
      %v1477 = vadd.f32 0.0, %v1476
      %v1478 = vpop.f32.mrb[0].mxu0
      %1479 = vmatprep.mubr.f32.mxu0 0.0
      %1480 = vmatmul.mubr.f32.gmra.mrb[0].mxu0 %v1362
      %v1481 = vpop.f32.mrb[0].mxu0
      %v1482 = vadd.f32 0.0, %v1481
      %v1483 = vpop.f32.mrb[0].mxu0
      %1484 = vmatprep.mubr.f32.mxu0 0.0
      %1485 = vmatmul.mubr.f32.gmra.mrb[0].mxu0 %v1365
      %v1486 = vpop.f32.mrb[0].mxu0
      %v1487 = vadd.f32 0.0, %v1486
      %v1488 = vpop.f32.mrb[0].mxu0
      %1489 = vmatprep.mubr.f32.mxu0 0.0
      %1490 = vmatmul.mubr.f32.gmra.mrb[0].mxu0 %v1368
      %v1491 = vpop.f32.mrb[0].mxu0
      %v1492 = vadd.f32 0.0, %v1491
      %v1493 = vpop.f32.mrb[0].mxu0
      %1494 = vmatprep.mubr.f32.mxu0 0.0
      %1495 = vmatmul.mubr.f32.gmra.mrb[0].mxu0 %v1371
      %v1496 = vpop.f32.mrb[0].mxu0
      %v1497 = vadd.f32 0.0, %v1496
      %v1498 = vpop.f32.mrb[0].mxu0
      %1499 = vmatprep.mubr.f32.mxu0 0.0
      %1500 = vmatmul.mubr.f32.gmra.mrb[0].mxu0 %v1374
      %v1501 = vpop.f32.mrb[0].mxu0
      %v1502 = vadd.f32 0.0, %v1501
      %v1503 = vpop.f32.mrb[0].mxu0
      %1504 = vmatprep.mubr.f32.mxu0 0.0
      %1505 = vmatmul.mubr.f32.gmra.mrb[0].mxu0 %v1377
      %v1506 = vpop.f32.mrb[0].mxu0
      %v1507 = vadd.f32 0.0, %v1506
      %v1508 = vpop.f32.mrb[0].mxu0
      %1509 = vmatprep.mubr.f32.mxu0 0.0
      %1510 = vmatmul.mubr.f32.gmra.mrb[0].mxu0 %v1380
      %v1511 = vpop.f32.mrb[0].mxu0
      %v1512 = vadd.f32 0.0, %v1511
      %v1513 = vpop.f32.mrb[0].mxu0
      %1514 = vmatprep.mubr.f32.mxu0 0.0
      %1515 = vmatmul.mubr.f32.gmra.mrb[0].mxu0 %v1383
      %v1516 = vpop.f32.mrb[0].mxu0
      %v1517 = vadd.f32 0.0, %v1516
      %v1518 = vpop.f32.mrb[0].mxu0
      %1519 = vmatprep.mubr.f32.mxu0 0.0
      %1520 = vmatmul.mubr.f32.gmra.mrb[0].mxu0 %v1386
      %v1521 = vpop.f32.mrb[0].mxu0
      %v1522 = vadd.f32 0.0, %v1521
      %v1523 = vpop.f32.mrb[0].mxu0
      %1524 = vmatprep.mubr.f32.mxu0 0.0
      %1525 = vmatmul.mubr.f32.gmra.mrb[0].mxu0 %v1389
      %v1526 = vpop.f32.mrb[0].mxu0
      %v1527 = vadd.f32 0.0, %v1526
      %v1528 = vpop.f32.mrb[0].mxu0
      %1529 = vmatprep.mubr.f32.mxu0 0.0
      %1530 = vmatmul.mubr.f32.gmra.mrb[0].mxu0 %v1392
      %v1531 = vpop.f32.mrb[0].mxu0
      %v1532 = vadd.f32 0.0, %v1531
      %v1533 = vpop.f32.mrb[0].mxu0
      %1534 = vmatprep.mubr.f32.mxu0 0.0
      %1535 = vmatmul.mubr.f32.gmra.mrb[0].mxu0 %v1395
      %v1536 = vpop.f32.mrb[0].mxu0
      %v1537 = vadd.f32 0.0, %v1536
      %v1538 = vpop.f32.mrb[0].mxu0
      %1539 = vmatprep.mubr.f32.mxu0 0.0
      %1540 = vmatmul.mubr.f32.gmra.mrb[0].mxu0 %v1398
      %v1541 = vpop.f32.mrb[0].mxu0
      %v1542 = vadd.f32 0.0, %v1541
      %v1543 = vpop.f32.mrb[0].mxu0
      %1544 = vdwg.mxu0
      %v1545 = vld [vmem:[#allocation2] sm:$0xff]
      %v1546 = vld [vmem:[#allocation2 + $0x8] sm:$0xff]
      %v1547 = vld [vmem:[#allocation2 + $0x10] sm:$0xff]
      %v1548 = vld [vmem:[#allocation2 + $0x18] sm:$0xff]
      %v1549 = vld [vmem:[#allocation2 + $0x20] sm:$0xff]
      %v1550 = vld [vmem:[#allocation2 + $0x28] sm:$0xff]
      %v1551 = vld [vmem:[#allocation2 + $0x30] sm:$0xff]
      %v1552 = vld [vmem:[#allocation2 + $0x38] sm:$0xff]
      %v1553 = vld [vmem:[#allocation2 + $0x40] sm:$0xff]
      %v1554 = vld [vmem:[#allocation2 + $0x48] sm:$0xff]
      %v1555 = vld [vmem:[#allocation2 + $0x50] sm:$0xff]
      %v1556 = vld [vmem:[#allocation2 + $0x58] sm:$0xff]
      %v1557 = vld [vmem:[#allocation2 + $0x60] sm:$0xff]
      %v1558 = vld [vmem:[#allocation2 + $0x68] sm:$0xff]
      %v1559 = vld [vmem:[#allocation2 + $0x70] sm:$0xff]
      %v1560 = vld [vmem:[#allocation2 + $0x78] sm:$0xff]
      %v1561 = vadd.f32 %v1545, %v1467
      %v1562 = vadd.f32 %v1546, %v1472
      %v1563 = vadd.f32 %v1547, %v1477
      %v1564 = vadd.f32 %v1548, %v1482
      %v1565 = vadd.f32 %v1549, %v1487
      %v1566 = vadd.f32 %v1550, %v1492
      %v1567 = vadd.f32 %v1551, %v1497
      %v1568 = vadd.f32 %v1552, %v1502
      %v1569 = vadd.f32 %v1553, %v1507
      %v1570 = vadd.f32 %v1554, %v1512
      %v1571 = vadd.f32 %v1555, %v1517
      %v1572 = vadd.f32 %v1556, %v1522
      %v1573 = vadd.f32 %v1557, %v1527
      %v1574 = vadd.f32 %v1558, %v1532
      %v1575 = vadd.f32 %v1559, %v1537
      %v1576 = vadd.f32 %v1560, %v1542
      %1577 = vst [vmem:[#allocation2] sm:$0xff] %v1561
      %1578 = vst [vmem:[#allocation2 + $0x8] sm:$0xff] %v1562
      %1579 = vst [vmem:[#allocation2 + $0x10] sm:$0xff] %v1563
      %1580 = vst [vmem:[#allocation2 + $0x18] sm:$0xff] %v1564
      %1581 = vst [vmem:[#allocation2 + $0x20] sm:$0xff] %v1565
      %1582 = vst [vmem:[#allocation2 + $0x28] sm:$0xff] %v1566
      %1583 = vst [vmem:[#allocation2 + $0x30] sm:$0xff] %v1567
      %1584 = vst [vmem:[#allocation2 + $0x38] sm:$0xff] %v1568
      %1585 = vst [vmem:[#allocation2 + $0x40] sm:$0xff] %v1569
      %1586 = vst [vmem:[#allocation2 + $0x48] sm:$0xff] %v1570
      %1587 = vst [vmem:[#allocation2 + $0x50] sm:$0xff] %v1571
      %1588 = vst [vmem:[#allocation2 + $0x58] sm:$0xff] %v1572
      %1589 = vst [vmem:[#allocation2 + $0x60] sm:$0xff] %v1573
      %1590 = vst [vmem:[#allocation2 + $0x68] sm:$0xff] %v1574
      %1591 = vst [vmem:[#allocation2 + $0x70] sm:$0xff] %v1575
      %1592 = vst [vmem:[#allocation2 + $0x78] sm:$0xff] %v1576
      %s1593 = sadd.s32 %s297, 17
      %s1594 = scalar_lea.vmem %s280, %s1593
      %v1595 = vld [vmem:[%s1594] sm:$0xff]
      %v1596 = vld [vmem:[%s1594 + $0x8] sm:$0xff]
      %v1597 = vld [vmem:[%s1594 + $0x10] sm:$0xff]
      %v1598 = vld [vmem:[%s1594 + $0x18] sm:$0xff]
      %v1599 = vld [vmem:[%s1594 + $0x20] sm:$0xff]
      %v1600 = vld [vmem:[%s1594 + $0x28] sm:$0xff]
      %v1601 = vld [vmem:[%s1594 + $0x30] sm:$0xff]
      %v1602 = vld [vmem:[%s1594 + $0x38] sm:$0xff]
      %v1603 = vld [vmem:[%s1594 + $0x40] sm:$0xff]
      %v1604 = vld [vmem:[%s1594 + $0x48] sm:$0xff]
      %v1605 = vld [vmem:[%s1594 + $0x50] sm:$0xff]
      %v1606 = vld [vmem:[%s1594 + $0x58] sm:$0xff]
      %v1607 = vld [vmem:[%s1594 + $0x60] sm:$0xff]
      %v1608 = vld [vmem:[%s1594 + $0x68] sm:$0xff]
      %v1609 = vld [vmem:[%s1594 + $0x70] sm:$0xff]
      %v1610 = vld [vmem:[%s1594 + $0x78] sm:$0xff]
      %s1611 = scalar_lea.vmem %s2, 256
      %v1612 = vld [vmem:[%s1611] sm:$0xff]
      %v1613 = vld [vmem:[%s1611 + $0x8] sm:$0xff]
      %v1614 = vld [vmem:[%s1611 + $0x10] sm:$0xff]
      %v1615 = vld [vmem:[%s1611 + $0x18] sm:$0xff]
      %v1616 = vld [vmem:[%s1611 + $0x20] sm:$0xff]
      %v1617 = vld [vmem:[%s1611 + $0x28] sm:$0xff]
      %v1618 = vld [vmem:[%s1611 + $0x30] sm:$0xff]
      %v1619 = vld [vmem:[%s1611 + $0x38] sm:$0xff]
      %v1621 = vsel %vm467, %v1595, 0
      %v1624 = vsel %vm467, %v1596, 0
      %v1627 = vsel %vm467, %v1597, 0
      %v1630 = vsel %vm467, %v1598, 0
      %v1633 = vsel %vm467, %v1599, 0
      %v1636 = vsel %vm467, %v1600, 0
      %v1639 = vsel %vm467, %v1601, 0
      %v1642 = vsel %vm467, %v1602, 0
      %v1645 = vsel %vm467, %v1603, 0
      %v1648 = vsel %vm467, %v1604, 0
      %v1651 = vsel %vm467, %v1605, 0
      %v1654 = vsel %vm467, %v1606, 0
      %v1657 = vsel %vm467, %v1607, 0
      %v1660 = vsel %vm467, %v1608, 0
      %v1663 = vsel %vm467, %v1609, 0
      %v1666 = vsel %vm467, %v1610, 0
      %1668 = vmatprep.subr.mxu0 0.0
      %1669 = vmatpush1.msra.mxu0 %v1612
      %1670 = vmatprep.subr.mxu0 0.0
      %1671 = vmatpush1.msra.mxu0 %v1613
      %1672 = vmatprep.subr.mxu0 0.0
      %1673 = vmatpush1.msra.mxu0 %v1614
      %1674 = vmatprep.subr.mxu0 0.0
      %1675 = vmatpush1.msra.mxu0 %v1615
      %1676 = vmatprep.subr.mxu0 0.0
      %1677 = vmatpush1.msra.mxu0 %v1616
      %1678 = vmatprep.subr.mxu0 0.0
      %1679 = vmatpush1.msra.mxu0 %v1617
      %1680 = vmatprep.subr.mxu0 0.0
      %1681 = vmatpush1.msra.mxu0 %v1618
      %1682 = vmatprep.subr.mxu0 0.0
      %1683 = vmatpush1.msra.mxu0 %v1619
      %1684 = vmatprep.subr.mxu0 0.0
      %1685 = vmatpush1.msra.mxu0 0.0
      %1686 = vmatprep.subr.mxu0 0.0
      %1687 = vmatpush1.msra.mxu0 0.0
      %1688 = vmatprep.subr.mxu0 0.0
      %1689 = vmatpush1.msra.mxu0 0.0
      %1690 = vmatprep.subr.mxu0 0.0
      %1691 = vmatpush1.msra.mxu0 0.0
      %1692 = vmatprep.subr.mxu0 0.0
      %1693 = vmatpush1.msra.mxu0 0.0
      %1694 = vmatprep.subr.mxu0 0.0
      %1695 = vmatpush1.msra.mxu0 0.0
      %1696 = vmatprep.subr.mxu0 0.0
      %1697 = vmatpush1.msra.mxu0 0.0
      %1698 = vmatprep.subr.mxu0 0.0
      %1699 = vmatpush1.msra.mxu0 0.0
      %1700 = vmatprep.subr.mxu0 0.0
      %1701 = vmatpush1.msra.mxu0 0.0
      %1702 = vmatprep.subr.mxu0 0.0
      %1703 = vmatpush1.msra.mxu0 0.0
      %1704 = vmatprep.subr.mxu0 0.0
      %1705 = vmatpush1.msra.mxu0 0.0
      %1706 = vmatprep.subr.mxu0 0.0
      %1707 = vmatpush1.msra.mxu0 0.0
      %1708 = vmatprep.subr.mxu0 0.0
      %1709 = vmatpush1.msra.mxu0 0.0
      %1710 = vmatprep.subr.mxu0 0.0
      %1711 = vmatpush1.msra.mxu0 0.0
      %1712 = vmatprep.subr.mxu0 0.0
      %1713 = vmatpush1.msra.mxu0 0.0
      %1714 = vmatprep.subr.mxu0 0.0
      %1715 = vmatpush1.msra.mxu0 0.0
      %1716 = vmatprep.subr.mxu0 0.0
      %1717 = vmatpush1.msra.mxu0 0.0
      %1718 = vmatprep.subr.mxu0 0.0
      %1719 = vmatpush1.msra.mxu0 0.0
      %1720 = vmatprep.subr.mxu0 0.0
      %1721 = vmatpush1.msra.mxu0 0.0
      %1722 = vmatprep.subr.mxu0 0.0
      %1723 = vmatpush1.msra.mxu0 0.0
      %1724 = vmatprep.subr.mxu0 0.0
      %1725 = vmatpush1.msra.mxu0 0.0
      %1726 = vmatprep.subr.mxu0 0.0
      %1727 = vmatpush1.msra.mxu0 0.0
      %1728 = vmatprep.subr.mxu0 0.0
      %1729 = vmatpush1.msra.mxu0 0.0
      %1730 = vmatprep.subr.mxu0 0.0
      %1731 = vmatpush1.msra.mxu0 0.0
      %1732 = vmatprep.mubr.f32.mxu0 0.0
      %1733 = vmatmul.mubr.f32.gmra.mrb[0].mxu0 %v1621
      %v1734 = vpop.f32.mrb[0].mxu0
      %v1735 = vadd.f32 0.0, %v1734
      %v1736 = vpop.f32.mrb[0].mxu0
      %1737 = vmatprep.mubr.f32.mxu0 0.0
      %1738 = vmatmul.mubr.f32.gmra.mrb[0].mxu0 %v1624
      %v1739 = vpop.f32.mrb[0].mxu0
      %v1740 = vadd.f32 0.0, %v1739
      %v1741 = vpop.f32.mrb[0].mxu0
      %1742 = vmatprep.mubr.f32.mxu0 0.0
      %1743 = vmatmul.mubr.f32.gmra.mrb[0].mxu0 %v1627
      %v1744 = vpop.f32.mrb[0].mxu0
      %v1745 = vadd.f32 0.0, %v1744
      %v1746 = vpop.f32.mrb[0].mxu0
      %1747 = vmatprep.mubr.f32.mxu0 0.0
      %1748 = vmatmul.mubr.f32.gmra.mrb[0].mxu0 %v1630
      %v1749 = vpop.f32.mrb[0].mxu0
      %v1750 = vadd.f32 0.0, %v1749
      %v1751 = vpop.f32.mrb[0].mxu0
      %1752 = vmatprep.mubr.f32.mxu0 0.0
      %1753 = vmatmul.mubr.f32.gmra.mrb[0].mxu0 %v1633
      %v1754 = vpop.f32.mrb[0].mxu0
      %v1755 = vadd.f32 0.0, %v1754
      %v1756 = vpop.f32.mrb[0].mxu0
      %1757 = vmatprep.mubr.f32.mxu0 0.0
      %1758 = vmatmul.mubr.f32.gmra.mrb[0].mxu0 %v1636
      %v1759 = vpop.f32.mrb[0].mxu0
      %v1760 = vadd.f32 0.0, %v1759
      %v1761 = vpop.f32.mrb[0].mxu0
      %1762 = vmatprep.mubr.f32.mxu0 0.0
      %1763 = vmatmul.mubr.f32.gmra.mrb[0].mxu0 %v1639
      %v1764 = vpop.f32.mrb[0].mxu0
      %v1765 = vadd.f32 0.0, %v1764
      %v1766 = vpop.f32.mrb[0].mxu0
      %1767 = vmatprep.mubr.f32.mxu0 0.0
      %1768 = vmatmul.mubr.f32.gmra.mrb[0].mxu0 %v1642
      %v1769 = vpop.f32.mrb[0].mxu0
      %v1770 = vadd.f32 0.0, %v1769
      %v1771 = vpop.f32.mrb[0].mxu0
      %1772 = vmatprep.mubr.f32.mxu0 0.0
      %1773 = vmatmul.mubr.f32.gmra.mrb[0].mxu0 %v1645
      %v1774 = vpop.f32.mrb[0].mxu0
      %v1775 = vadd.f32 0.0, %v1774
      %v1776 = vpop.f32.mrb[0].mxu0
      %1777 = vmatprep.mubr.f32.mxu0 0.0
      %1778 = vmatmul.mubr.f32.gmra.mrb[0].mxu0 %v1648
      %v1779 = vpop.f32.mrb[0].mxu0
      %v1780 = vadd.f32 0.0, %v1779
      %v1781 = vpop.f32.mrb[0].mxu0
      %1782 = vmatprep.mubr.f32.mxu0 0.0
      %1783 = vmatmul.mubr.f32.gmra.mrb[0].mxu0 %v1651
      %v1784 = vpop.f32.mrb[0].mxu0
      %v1785 = vadd.f32 0.0, %v1784
      %v1786 = vpop.f32.mrb[0].mxu0
      %1787 = vmatprep.mubr.f32.mxu0 0.0
      %1788 = vmatmul.mubr.f32.gmra.mrb[0].mxu0 %v1654
      %v1789 = vpop.f32.mrb[0].mxu0
      %v1790 = vadd.f32 0.0, %v1789
      %v1791 = vpop.f32.mrb[0].mxu0
      %1792 = vmatprep.mubr.f32.mxu0 0.0
      %1793 = vmatmul.mubr.f32.gmra.mrb[0].mxu0 %v1657
      %v1794 = vpop.f32.mrb[0].mxu0
      %v1795 = vadd.f32 0.0, %v1794
      %v1796 = vpop.f32.mrb[0].mxu0
      %1797 = vmatprep.mubr.f32.mxu0 0.0
      %1798 = vmatmul.mubr.f32.gmra.mrb[0].mxu0 %v1660
      %v1799 = vpop.f32.mrb[0].mxu0
      %v1800 = vadd.f32 0.0, %v1799
      %v1801 = vpop.f32.mrb[0].mxu0
      %1802 = vmatprep.mubr.f32.mxu0 0.0
      %1803 = vmatmul.mubr.f32.gmra.mrb[0].mxu0 %v1663
      %v1804 = vpop.f32.mrb[0].mxu0
      %v1805 = vadd.f32 0.0, %v1804
      %v1806 = vpop.f32.mrb[0].mxu0
      %1807 = vmatprep.mubr.f32.mxu0 0.0
      %1808 = vmatmul.mubr.f32.gmra.mrb[0].mxu0 %v1666
      %v1809 = vpop.f32.mrb[0].mxu0
      %v1810 = vadd.f32 0.0, %v1809
      %v1811 = vpop.f32.mrb[0].mxu0
      %1812 = vdwg.mxu0
      %v1813 = vld [vmem:[#allocation2] sm:$0xff]
      %v1814 = vld [vmem:[#allocation2 + $0x8] sm:$0xff]
      %v1815 = vld [vmem:[#allocation2 + $0x10] sm:$0xff]
      %v1816 = vld [vmem:[#allocation2 + $0x18] sm:$0xff]
      %v1817 = vld [vmem:[#allocation2 + $0x20] sm:$0xff]
      %v1818 = vld [vmem:[#allocation2 + $0x28] sm:$0xff]
      %v1819 = vld [vmem:[#allocation2 + $0x30] sm:$0xff]
      %v1820 = vld [vmem:[#allocation2 + $0x38] sm:$0xff]
      %v1821 = vld [vmem:[#allocation2 + $0x40] sm:$0xff]
      %v1822 = vld [vmem:[#allocation2 + $0x48] sm:$0xff]
      %v1823 = vld [vmem:[#allocation2 + $0x50] sm:$0xff]
      %v1824 = vld [vmem:[#allocation2 + $0x58] sm:$0xff]
      %v1825 = vld [vmem:[#allocation2 + $0x60] sm:$0xff]
      %v1826 = vld [vmem:[#allocation2 + $0x68] sm:$0xff]
      %v1827 = vld [vmem:[#allocation2 + $0x70] sm:$0xff]
      %v1828 = vld [vmem:[#allocation2 + $0x78] sm:$0xff]
      %v1829 = vadd.f32 %v1813, %v1735
      %v1830 = vadd.f32 %v1814, %v1740
      %v1831 = vadd.f32 %v1815, %v1745
      %v1832 = vadd.f32 %v1816, %v1750
      %v1833 = vadd.f32 %v1817, %v1755
      %v1834 = vadd.f32 %v1818, %v1760
      %v1835 = vadd.f32 %v1819, %v1765
      %v1836 = vadd.f32 %v1820, %v1770
      %v1837 = vadd.f32 %v1821, %v1775
      %v1838 = vadd.f32 %v1822, %v1780
      %v1839 = vadd.f32 %v1823, %v1785
      %v1840 = vadd.f32 %v1824, %v1790
      %v1841 = vadd.f32 %v1825, %v1795
      %v1842 = vadd.f32 %v1826, %v1800
      %v1843 = vadd.f32 %v1827, %v1805
      %v1844 = vadd.f32 %v1828, %v1810
      %1845 = vst [vmem:[#allocation2] sm:$0xff] %v1829
      %1846 = vst [vmem:[#allocation2 + $0x8] sm:$0xff] %v1830
      %1847 = vst [vmem:[#allocation2 + $0x10] sm:$0xff] %v1831
      %1848 = vst [vmem:[#allocation2 + $0x18] sm:$0xff] %v1832
      %1849 = vst [vmem:[#allocation2 + $0x20] sm:$0xff] %v1833
      %1850 = vst [vmem:[#allocation2 + $0x28] sm:$0xff] %v1834
      %1851 = vst [vmem:[#allocation2 + $0x30] sm:$0xff] %v1835
      %1852 = vst [vmem:[#allocation2 + $0x38] sm:$0xff] %v1836
      %1853 = vst [vmem:[#allocation2 + $0x40] sm:$0xff] %v1837
      %1854 = vst [vmem:[#allocation2 + $0x48] sm:$0xff] %v1838
      %1855 = vst [vmem:[#allocation2 + $0x50] sm:$0xff] %v1839
      %1856 = vst [vmem:[#allocation2 + $0x58] sm:$0xff] %v1840
      %1857 = vst [vmem:[#allocation2 + $0x60] sm:$0xff] %v1841
      %1858 = vst [vmem:[#allocation2 + $0x68] sm:$0xff] %v1842
      %1859 = vst [vmem:[#allocation2 + $0x70] sm:$0xff] %v1843
      %1860 = vst [vmem:[#allocation2 + $0x78] sm:$0xff] %v1844
      %s1861 = sadd.s32 %s297, 18
      %s1862 = scalar_lea.vmem %s280, %s1861
      %v1863 = vld [vmem:[%s1862] sm:$0xff]
      %v1864 = vld [vmem:[%s1862 + $0x8] sm:$0xff]
      %v1865 = vld [vmem:[%s1862 + $0x10] sm:$0xff]
      %v1866 = vld [vmem:[%s1862 + $0x18] sm:$0xff]
      %v1867 = vld [vmem:[%s1862 + $0x20] sm:$0xff]
      %v1868 = vld [vmem:[%s1862 + $0x28] sm:$0xff]
      %v1869 = vld [vmem:[%s1862 + $0x30] sm:$0xff]
      %v1870 = vld [vmem:[%s1862 + $0x38] sm:$0xff]
      %v1871 = vld [vmem:[%s1862 + $0x40] sm:$0xff]
      %v1872 = vld [vmem:[%s1862 + $0x48] sm:$0xff]
      %v1873 = vld [vmem:[%s1862 + $0x50] sm:$0xff]
      %v1874 = vld [vmem:[%s1862 + $0x58] sm:$0xff]
      %v1875 = vld [vmem:[%s1862 + $0x60] sm:$0xff]
      %v1876 = vld [vmem:[%s1862 + $0x68] sm:$0xff]
      %v1877 = vld [vmem:[%s1862 + $0x70] sm:$0xff]
      %v1878 = vld [vmem:[%s1862 + $0x78] sm:$0xff]
      %v1879 = vsel %vm1027, 0.0, %v1863
      %v1880 = vsel %vm1028, 0.0, %v1864
      %v1881 = vsel %vm1029, 0.0, %v1865
      %v1882 = vsel %vm1030, 0.0, %v1866
      %v1883 = vsel %vm1031, 0.0, %v1867
      %v1884 = vsel %vm1032, 0.0, %v1868
      %v1885 = vsel %vm1033, 0.0, %v1869
      %v1886 = vsel %vm1034, 0.0, %v1870
      %v1887 = vsel %vm1035, 0.0, %v1871
      %v1888 = vsel %vm1036, 0.0, %v1872
      %v1889 = vsel %vm1037, 0.0, %v1873
      %v1890 = vsel %vm1038, 0.0, %v1874
      %v1891 = vsel %vm1039, 0.0, %v1875
      %v1892 = vsel %vm1040, 0.0, %v1876
      %v1893 = vsel %vm1041, 0.0, %v1877
      %v1894 = vsel %vm1042, 0.0, %v1878
      %s1895 = scalar_lea.vmem %s2, 320
      %v1896 = vld [vmem:[%s1895] sm:$0xff]
      %v1897 = vld [vmem:[%s1895 + $0x8] sm:$0xff]
      %v1898 = vld [vmem:[%s1895 + $0x10] sm:$0xff]
      %v1899 = vld [vmem:[%s1895 + $0x18] sm:$0xff]
      %v1900 = vld [vmem:[%s1895 + $0x20] sm:$0xff]
      %v1901 = vld [vmem:[%s1895 + $0x28] sm:$0xff]
      %v1902 = vld [vmem:[%s1895 + $0x30] sm:$0xff]
      %v1903 = vld [vmem:[%s1895 + $0x38] sm:$0xff]
      %v1905 = vsel %vm467, %v1879, 0
      %v1908 = vsel %vm467, %v1880, 0
      %v1911 = vsel %vm467, %v1881, 0
      %v1914 = vsel %vm467, %v1882, 0
      %v1917 = vsel %vm467, %v1883, 0
      %v1920 = vsel %vm467, %v1884, 0
      %v1923 = vsel %vm467, %v1885, 0
      %v1926 = vsel %vm467, %v1886, 0
      %v1929 = vsel %vm467, %v1887, 0
      %v1932 = vsel %vm467, %v1888, 0
      %v1935 = vsel %vm467, %v1889, 0
      %v1938 = vsel %vm467, %v1890, 0
      %v1941 = vsel %vm467, %v1891, 0
      %v1944 = vsel %vm467, %v1892, 0
      %v1947 = vsel %vm467, %v1893, 0
      %v1950 = vsel %vm467, %v1894, 0
      %1952 = vmatprep.subr.mxu0 0.0
      %1953 = vmatpush1.msra.mxu0 %v1896
      %1954 = vmatprep.subr.mxu0 0.0
      %1955 = vmatpush1.msra.mxu0 %v1897
      %1956 = vmatprep.subr.mxu0 0.0
      %1957 = vmatpush1.msra.mxu0 %v1898
      %1958 = vmatprep.subr.mxu0 0.0
      %1959 = vmatpush1.msra.mxu0 %v1899
      %1960 = vmatprep.subr.mxu0 0.0
      %1961 = vmatpush1.msra.mxu0 %v1900
      %1962 = vmatprep.subr.mxu0 0.0
      %1963 = vmatpush1.msra.mxu0 %v1901
      %1964 = vmatprep.subr.mxu0 0.0
      %1965 = vmatpush1.msra.mxu0 %v1902
      %1966 = vmatprep.subr.mxu0 0.0
      %1967 = vmatpush1.msra.mxu0 %v1903
      %1968 = vmatprep.subr.mxu0 0.0
      %1969 = vmatpush1.msra.mxu0 0.0
      %1970 = vmatprep.subr.mxu0 0.0
      %1971 = vmatpush1.msra.mxu0 0.0
      %1972 = vmatprep.subr.mxu0 0.0
      %1973 = vmatpush1.msra.mxu0 0.0
      %1974 = vmatprep.subr.mxu0 0.0
      %1975 = vmatpush1.msra.mxu0 0.0
      %1976 = vmatprep.subr.mxu0 0.0
      %1977 = vmatpush1.msra.mxu0 0.0
      %1978 = vmatprep.subr.mxu0 0.0
      %1979 = vmatpush1.msra.mxu0 0.0
      %1980 = vmatprep.subr.mxu0 0.0
      %1981 = vmatpush1.msra.mxu0 0.0
      %1982 = vmatprep.subr.mxu0 0.0
      %1983 = vmatpush1.msra.mxu0 0.0
      %1984 = vmatprep.subr.mxu0 0.0
      %1985 = vmatpush1.msra.mxu0 0.0
      %1986 = vmatprep.subr.mxu0 0.0
      %1987 = vmatpush1.msra.mxu0 0.0
      %1988 = vmatprep.subr.mxu0 0.0
      %1989 = vmatpush1.msra.mxu0 0.0
      %1990 = vmatprep.subr.mxu0 0.0
      %1991 = vmatpush1.msra.mxu0 0.0
      %1992 = vmatprep.subr.mxu0 0.0
      %1993 = vmatpush1.msra.mxu0 0.0
      %1994 = vmatprep.subr.mxu0 0.0
      %1995 = vmatpush1.msra.mxu0 0.0
      %1996 = vmatprep.subr.mxu0 0.0
      %1997 = vmatpush1.msra.mxu0 0.0
      %1998 = vmatprep.subr.mxu0 0.0
      %1999 = vmatpush1.msra.mxu0 0.0
      %2000 = vmatprep.subr.mxu0 0.0
      %2001 = vmatpush1.msra.mxu0 0.0
      %2002 = vmatprep.subr.mxu0 0.0
      %2003 = vmatpush1.msra.mxu0 0.0
      %2004 = vmatprep.subr.mxu0 0.0
      %2005 = vmatpush1.msra.mxu0 0.0
      %2006 = vmatprep.subr.mxu0 0.0
      %2007 = vmatpush1.msra.mxu0 0.0
      %2008 = vmatprep.subr.mxu0 0.0
      %2009 = vmatpush1.msra.mxu0 0.0
      %2010 = vmatprep.subr.mxu0 0.0
      %2011 = vmatpush1.msra.mxu0 0.0
      %2012 = vmatprep.subr.mxu0 0.0
      %2013 = vmatpush1.msra.mxu0 0.0
      %2014 = vmatprep.subr.mxu0 0.0
      %2015 = vmatpush1.msra.mxu0 0.0
      %2016 = vmatprep.mubr.f32.mxu0 0.0
      %2017 = vmatmul.mubr.f32.gmra.mrb[0].mxu0 %v1905
      %v2018 = vpop.f32.mrb[0].mxu0
      %v2019 = vadd.f32 0.0, %v2018
      %v2020 = vpop.f32.mrb[0].mxu0
      %2021 = vmatprep.mubr.f32.mxu0 0.0
      %2022 = vmatmul.mubr.f32.gmra.mrb[0].mxu0 %v1908
      %v2023 = vpop.f32.mrb[0].mxu0
      %v2024 = vadd.f32 0.0, %v2023
      %v2025 = vpop.f32.mrb[0].mxu0
      %2026 = vmatprep.mubr.f32.mxu0 0.0
      %2027 = vmatmul.mubr.f32.gmra.mrb[0].mxu0 %v1911
      %v2028 = vpop.f32.mrb[0].mxu0
      %v2029 = vadd.f32 0.0, %v2028
      %v2030 = vpop.f32.mrb[0].mxu0
      %2031 = vmatprep.mubr.f32.mxu0 0.0
      %2032 = vmatmul.mubr.f32.gmra.mrb[0].mxu0 %v1914
      %v2033 = vpop.f32.mrb[0].mxu0
      %v2034 = vadd.f32 0.0, %v2033
      %v2035 = vpop.f32.mrb[0].mxu0
      %2036 = vmatprep.mubr.f32.mxu0 0.0
      %2037 = vmatmul.mubr.f32.gmra.mrb[0].mxu0 %v1917
      %v2038 = vpop.f32.mrb[0].mxu0
      %v2039 = vadd.f32 0.0, %v2038
      %v2040 = vpop.f32.mrb[0].mxu0
      %2041 = vmatprep.mubr.f32.mxu0 0.0
      %2042 = vmatmul.mubr.f32.gmra.mrb[0].mxu0 %v1920
      %v2043 = vpop.f32.mrb[0].mxu0
      %v2044 = vadd.f32 0.0, %v2043
      %v2045 = vpop.f32.mrb[0].mxu0
      %2046 = vmatprep.mubr.f32.mxu0 0.0
      %2047 = vmatmul.mubr.f32.gmra.mrb[0].mxu0 %v1923
      %v2048 = vpop.f32.mrb[0].mxu0
      %v2049 = vadd.f32 0.0, %v2048
      %v2050 = vpop.f32.mrb[0].mxu0
      %2051 = vmatprep.mubr.f32.mxu0 0.0
      %2052 = vmatmul.mubr.f32.gmra.mrb[0].mxu0 %v1926
      %v2053 = vpop.f32.mrb[0].mxu0
      %v2054 = vadd.f32 0.0, %v2053
      %v2055 = vpop.f32.mrb[0].mxu0
      %2056 = vmatprep.mubr.f32.mxu0 0.0
      %2057 = vmatmul.mubr.f32.gmra.mrb[0].mxu0 %v1929
      %v2058 = vpop.f32.mrb[0].mxu0
      %v2059 = vadd.f32 0.0, %v2058
      %v2060 = vpop.f32.mrb[0].mxu0
      %2061 = vmatprep.mubr.f32.mxu0 0.0
      %2062 = vmatmul.mubr.f32.gmra.mrb[0].mxu0 %v1932
      %v2063 = vpop.f32.mrb[0].mxu0
      %v2064 = vadd.f32 0.0, %v2063
      %v2065 = vpop.f32.mrb[0].mxu0
      %2066 = vmatprep.mubr.f32.mxu0 0.0
      %2067 = vmatmul.mubr.f32.gmra.mrb[0].mxu0 %v1935
      %v2068 = vpop.f32.mrb[0].mxu0
      %v2069 = vadd.f32 0.0, %v2068
      %v2070 = vpop.f32.mrb[0].mxu0
      %2071 = vmatprep.mubr.f32.mxu0 0.0
      %2072 = vmatmul.mubr.f32.gmra.mrb[0].mxu0 %v1938
      %v2073 = vpop.f32.mrb[0].mxu0
      %v2074 = vadd.f32 0.0, %v2073
      %v2075 = vpop.f32.mrb[0].mxu0
      %2076 = vmatprep.mubr.f32.mxu0 0.0
      %2077 = vmatmul.mubr.f32.gmra.mrb[0].mxu0 %v1941
      %v2078 = vpop.f32.mrb[0].mxu0
      %v2079 = vadd.f32 0.0, %v2078
      %v2080 = vpop.f32.mrb[0].mxu0
      %2081 = vmatprep.mubr.f32.mxu0 0.0
      %2082 = vmatmul.mubr.f32.gmra.mrb[0].mxu0 %v1944
      %v2083 = vpop.f32.mrb[0].mxu0
      %v2084 = vadd.f32 0.0, %v2083
      %v2085 = vpop.f32.mrb[0].mxu0
      %2086 = vmatprep.mubr.f32.mxu0 0.0
      %2087 = vmatmul.mubr.f32.gmra.mrb[0].mxu0 %v1947
      %v2088 = vpop.f32.mrb[0].mxu0
      %v2089 = vadd.f32 0.0, %v2088
      %v2090 = vpop.f32.mrb[0].mxu0
      %2091 = vmatprep.mubr.f32.mxu0 0.0
      %2092 = vmatmul.mubr.f32.gmra.mrb[0].mxu0 %v1950
      %v2093 = vpop.f32.mrb[0].mxu0
      %v2094 = vadd.f32 0.0, %v2093
      %v2095 = vpop.f32.mrb[0].mxu0
      %2096 = vdwg.mxu0
      %v2097 = vld [vmem:[#allocation2] sm:$0xff]
      %v2098 = vld [vmem:[#allocation2 + $0x8] sm:$0xff]
      %v2099 = vld [vmem:[#allocation2 + $0x10] sm:$0xff]
      %v2100 = vld [vmem:[#allocation2 + $0x18] sm:$0xff]
      %v2101 = vld [vmem:[#allocation2 + $0x20] sm:$0xff]
      %v2102 = vld [vmem:[#allocation2 + $0x28] sm:$0xff]
      %v2103 = vld [vmem:[#allocation2 + $0x30] sm:$0xff]
      %v2104 = vld [vmem:[#allocation2 + $0x38] sm:$0xff]
      %v2105 = vld [vmem:[#allocation2 + $0x40] sm:$0xff]
      %v2106 = vld [vmem:[#allocation2 + $0x48] sm:$0xff]
      %v2107 = vld [vmem:[#allocation2 + $0x50] sm:$0xff]
      %v2108 = vld [vmem:[#allocation2 + $0x58] sm:$0xff]
      %v2109 = vld [vmem:[#allocation2 + $0x60] sm:$0xff]
      %v2110 = vld [vmem:[#allocation2 + $0x68] sm:$0xff]
      %v2111 = vld [vmem:[#allocation2 + $0x70] sm:$0xff]
      %v2112 = vld [vmem:[#allocation2 + $0x78] sm:$0xff]
      %v2113 = vadd.f32 %v2097, %v2019
      %v2114 = vadd.f32 %v2098, %v2024
      %v2115 = vadd.f32 %v2099, %v2029
      %v2116 = vadd.f32 %v2100, %v2034
      %v2117 = vadd.f32 %v2101, %v2039
      %v2118 = vadd.f32 %v2102, %v2044
      %v2119 = vadd.f32 %v2103, %v2049
      %v2120 = vadd.f32 %v2104, %v2054
      %v2121 = vadd.f32 %v2105, %v2059
      %v2122 = vadd.f32 %v2106, %v2064
      %v2123 = vadd.f32 %v2107, %v2069
      %v2124 = vadd.f32 %v2108, %v2074
      %v2125 = vadd.f32 %v2109, %v2079
      %v2126 = vadd.f32 %v2110, %v2084
      %v2127 = vadd.f32 %v2111, %v2089
      %v2128 = vadd.f32 %v2112, %v2094
      %2129 = vst [vmem:[#allocation2] sm:$0xff] %v2113
      %2130 = vst [vmem:[#allocation2 + $0x8] sm:$0xff] %v2114
      %2131 = vst [vmem:[#allocation2 + $0x10] sm:$0xff] %v2115
      %2132 = vst [vmem:[#allocation2 + $0x18] sm:$0xff] %v2116
      %2133 = vst [vmem:[#allocation2 + $0x20] sm:$0xff] %v2117
      %2134 = vst [vmem:[#allocation2 + $0x28] sm:$0xff] %v2118
      %2135 = vst [vmem:[#allocation2 + $0x30] sm:$0xff] %v2119
      %2136 = vst [vmem:[#allocation2 + $0x38] sm:$0xff] %v2120
      %2137 = vst [vmem:[#allocation2 + $0x40] sm:$0xff] %v2121
      %2138 = vst [vmem:[#allocation2 + $0x48] sm:$0xff] %v2122
      %2139 = vst [vmem:[#allocation2 + $0x50] sm:$0xff] %v2123
      %2140 = vst [vmem:[#allocation2 + $0x58] sm:$0xff] %v2124
      %2141 = vst [vmem:[#allocation2 + $0x60] sm:$0xff] %v2125
      %2142 = vst [vmem:[#allocation2 + $0x68] sm:$0xff] %v2126
      %2143 = vst [vmem:[#allocation2 + $0x70] sm:$0xff] %v2127
      %2144 = vst [vmem:[#allocation2 + $0x78] sm:$0xff] %v2128
      %s2145 = sadd.s32 %s297, 32
      %s2146 = scalar_lea.vmem %s280, %s2145
      %v2147 = vld [vmem:[%s2146] sm:$0xff]
      %v2148 = vld [vmem:[%s2146 + $0x8] sm:$0xff]
      %v2149 = vld [vmem:[%s2146 + $0x10] sm:$0xff]
      %v2150 = vld [vmem:[%s2146 + $0x18] sm:$0xff]
      %v2151 = vld [vmem:[%s2146 + $0x20] sm:$0xff]
      %v2152 = vld [vmem:[%s2146 + $0x28] sm:$0xff]
      %v2153 = vld [vmem:[%s2146 + $0x30] sm:$0xff]
      %v2154 = vld [vmem:[%s2146 + $0x38] sm:$0xff]
      %v2155 = vld [vmem:[%s2146 + $0x40] sm:$0xff]
      %v2156 = vld [vmem:[%s2146 + $0x48] sm:$0xff]
      %v2157 = vld [vmem:[%s2146 + $0x50] sm:$0xff]
      %v2158 = vld [vmem:[%s2146 + $0x58] sm:$0xff]
      %v2159 = vld [vmem:[%s2146 + $0x60] sm:$0xff]
      %v2160 = vld [vmem:[%s2146 + $0x68] sm:$0xff]
      %v2161 = vld [vmem:[%s2146 + $0x70] sm:$0xff]
      %v2162 = vld [vmem:[%s2146 + $0x78] sm:$0xff]
      %v2163 = vsel %vm427, 0.0, %v2147
      %v2164 = vsel %vm428, 0.0, %v2148
      %v2165 = vsel %vm429, 0.0, %v2149
      %v2166 = vsel %vm430, 0.0, %v2150
      %v2167 = vsel %vm431, 0.0, %v2151
      %v2168 = vsel %vm432, 0.0, %v2152
      %v2169 = vsel %vm433, 0.0, %v2153
      %v2170 = vsel %vm434, 0.0, %v2154
      %v2171 = vsel %vm435, 0.0, %v2155
      %v2172 = vsel %vm436, 0.0, %v2156
      %v2173 = vsel %vm437, 0.0, %v2157
      %v2174 = vsel %vm438, 0.0, %v2158
      %v2175 = vsel %vm439, 0.0, %v2159
      %v2176 = vsel %vm440, 0.0, %v2160
      %v2177 = vsel %vm441, 0.0, %v2161
      %v2178 = vsel %vm442, 0.0, %v2162
      %s2179 = scalar_lea.vmem %s2, 384
      %v2180 = vld [vmem:[%s2179] sm:$0xff]
      %v2181 = vld [vmem:[%s2179 + $0x8] sm:$0xff]
      %v2182 = vld [vmem:[%s2179 + $0x10] sm:$0xff]
      %v2183 = vld [vmem:[%s2179 + $0x18] sm:$0xff]
      %v2184 = vld [vmem:[%s2179 + $0x20] sm:$0xff]
      %v2185 = vld [vmem:[%s2179 + $0x28] sm:$0xff]
      %v2186 = vld [vmem:[%s2179 + $0x30] sm:$0xff]
      %v2187 = vld [vmem:[%s2179 + $0x38] sm:$0xff]
      %v2189 = vsel %vm467, %v2163, 0
      %v2192 = vsel %vm467, %v2164, 0
      %v2195 = vsel %vm467, %v2165, 0
      %v2198 = vsel %vm467, %v2166, 0
      %v2201 = vsel %vm467, %v2167, 0
      %v2204 = vsel %vm467, %v2168, 0
      %v2207 = vsel %vm467, %v2169, 0
      %v2210 = vsel %vm467, %v2170, 0
      %v2213 = vsel %vm467, %v2171, 0
      %v2216 = vsel %vm467, %v2172, 0
      %v2219 = vsel %vm467, %v2173, 0
      %v2222 = vsel %vm467, %v2174, 0
      %v2225 = vsel %vm467, %v2175, 0
      %v2228 = vsel %vm467, %v2176, 0
      %v2231 = vsel %vm467, %v2177, 0
      %v2234 = vsel %vm467, %v2178, 0
      %2236 = vmatprep.subr.mxu0 0.0
      %2237 = vmatpush1.msra.mxu0 %v2180
      %2238 = vmatprep.subr.mxu0 0.0
      %2239 = vmatpush1.msra.mxu0 %v2181
      %2240 = vmatprep.subr.mxu0 0.0
      %2241 = vmatpush1.msra.mxu0 %v2182
      %2242 = vmatprep.subr.mxu0 0.0
      %2243 = vmatpush1.msra.mxu0 %v2183
      %2244 = vmatprep.subr.mxu0 0.0
      %2245 = vmatpush1.msra.mxu0 %v2184
      %2246 = vmatprep.subr.mxu0 0.0
      %2247 = vmatpush1.msra.mxu0 %v2185
      %2248 = vmatprep.subr.mxu0 0.0
      %2249 = vmatpush1.msra.mxu0 %v2186
      %2250 = vmatprep.subr.mxu0 0.0
      %2251 = vmatpush1.msra.mxu0 %v2187
      %2252 = vmatprep.subr.mxu0 0.0
      %2253 = vmatpush1.msra.mxu0 0.0
      %2254 = vmatprep.subr.mxu0 0.0
      %2255 = vmatpush1.msra.mxu0 0.0
      %2256 = vmatprep.subr.mxu0 0.0
      %2257 = vmatpush1.msra.mxu0 0.0
      %2258 = vmatprep.subr.mxu0 0.0
      %2259 = vmatpush1.msra.mxu0 0.0
      %2260 = vmatprep.subr.mxu0 0.0
      %2261 = vmatpush1.msra.mxu0 0.0
      %2262 = vmatprep.subr.mxu0 0.0
      %2263 = vmatpush1.msra.mxu0 0.0
      %2264 = vmatprep.subr.mxu0 0.0
      %2265 = vmatpush1.msra.mxu0 0.0
      %2266 = vmatprep.subr.mxu0 0.0
      %2267 = vmatpush1.msra.mxu0 0.0
      %2268 = vmatprep.subr.mxu0 0.0
      %2269 = vmatpush1.msra.mxu0 0.0
      %2270 = vmatprep.subr.mxu0 0.0
      %2271 = vmatpush1.msra.mxu0 0.0
      %2272 = vmatprep.subr.mxu0 0.0
      %2273 = vmatpush1.msra.mxu0 0.0
      %2274 = vmatprep.subr.mxu0 0.0
      %2275 = vmatpush1.msra.mxu0 0.0
      %2276 = vmatprep.subr.mxu0 0.0
      %2277 = vmatpush1.msra.mxu0 0.0
      %2278 = vmatprep.subr.mxu0 0.0
      %2279 = vmatpush1.msra.mxu0 0.0
      %2280 = vmatprep.subr.mxu0 0.0
      %2281 = vmatpush1.msra.mxu0 0.0
      %2282 = vmatprep.subr.mxu0 0.0
      %2283 = vmatpush1.msra.mxu0 0.0
      %2284 = vmatprep.subr.mxu0 0.0
      %2285 = vmatpush1.msra.mxu0 0.0
      %2286 = vmatprep.subr.mxu0 0.0
      %2287 = vmatpush1.msra.mxu0 0.0
      %2288 = vmatprep.subr.mxu0 0.0
      %2289 = vmatpush1.msra.mxu0 0.0
      %2290 = vmatprep.subr.mxu0 0.0
      %2291 = vmatpush1.msra.mxu0 0.0
      %2292 = vmatprep.subr.mxu0 0.0
      %2293 = vmatpush1.msra.mxu0 0.0
      %2294 = vmatprep.subr.mxu0 0.0
      %2295 = vmatpush1.msra.mxu0 0.0
      %2296 = vmatprep.subr.mxu0 0.0
      %2297 = vmatpush1.msra.mxu0 0.0
      %2298 = vmatprep.subr.mxu0 0.0
      %2299 = vmatpush1.msra.mxu0 0.0
      %2300 = vmatprep.mubr.f32.mxu0 0.0
      %2301 = vmatmul.mubr.f32.gmra.mrb[0].mxu0 %v2189
      %v2302 = vpop.f32.mrb[0].mxu0
      %v2303 = vadd.f32 0.0, %v2302
      %v2304 = vpop.f32.mrb[0].mxu0
      %2305 = vmatprep.mubr.f32.mxu0 0.0
      %2306 = vmatmul.mubr.f32.gmra.mrb[0].mxu0 %v2192
      %v2307 = vpop.f32.mrb[0].mxu0
      %v2308 = vadd.f32 0.0, %v2307
      %v2309 = vpop.f32.mrb[0].mxu0
      %2310 = vmatprep.mubr.f32.mxu0 0.0
      %2311 = vmatmul.mubr.f32.gmra.mrb[0].mxu0 %v2195
      %v2312 = vpop.f32.mrb[0].mxu0
      %v2313 = vadd.f32 0.0, %v2312
      %v2314 = vpop.f32.mrb[0].mxu0
      %2315 = vmatprep.mubr.f32.mxu0 0.0
      %2316 = vmatmul.mubr.f32.gmra.mrb[0].mxu0 %v2198
      %v2317 = vpop.f32.mrb[0].mxu0
      %v2318 = vadd.f32 0.0, %v2317
      %v2319 = vpop.f32.mrb[0].mxu0
      %2320 = vmatprep.mubr.f32.mxu0 0.0
      %2321 = vmatmul.mubr.f32.gmra.mrb[0].mxu0 %v2201
      %v2322 = vpop.f32.mrb[0].mxu0
      %v2323 = vadd.f32 0.0, %v2322
      %v2324 = vpop.f32.mrb[0].mxu0
      %2325 = vmatprep.mubr.f32.mxu0 0.0
      %2326 = vmatmul.mubr.f32.gmra.mrb[0].mxu0 %v2204
      %v2327 = vpop.f32.mrb[0].mxu0
      %v2328 = vadd.f32 0.0, %v2327
      %v2329 = vpop.f32.mrb[0].mxu0
      %2330 = vmatprep.mubr.f32.mxu0 0.0
      %2331 = vmatmul.mubr.f32.gmra.mrb[0].mxu0 %v2207
      %v2332 = vpop.f32.mrb[0].mxu0
      %v2333 = vadd.f32 0.0, %v2332
      %v2334 = vpop.f32.mrb[0].mxu0
      %2335 = vmatprep.mubr.f32.mxu0 0.0
      %2336 = vmatmul.mubr.f32.gmra.mrb[0].mxu0 %v2210
      %v2337 = vpop.f32.mrb[0].mxu0
      %v2338 = vadd.f32 0.0, %v2337
      %v2339 = vpop.f32.mrb[0].mxu0
      %2340 = vmatprep.mubr.f32.mxu0 0.0
      %2341 = vmatmul.mubr.f32.gmra.mrb[0].mxu0 %v2213
      %v2342 = vpop.f32.mrb[0].mxu0
      %v2343 = vadd.f32 0.0, %v2342
      %v2344 = vpop.f32.mrb[0].mxu0
      %2345 = vmatprep.mubr.f32.mxu0 0.0
      %2346 = vmatmul.mubr.f32.gmra.mrb[0].mxu0 %v2216
      %v2347 = vpop.f32.mrb[0].mxu0
      %v2348 = vadd.f32 0.0, %v2347
      %v2349 = vpop.f32.mrb[0].mxu0
      %2350 = vmatprep.mubr.f32.mxu0 0.0
      %2351 = vmatmul.mubr.f32.gmra.mrb[0].mxu0 %v2219
      %v2352 = vpop.f32.mrb[0].mxu0
      %v2353 = vadd.f32 0.0, %v2352
      %v2354 = vpop.f32.mrb[0].mxu0
      %2355 = vmatprep.mubr.f32.mxu0 0.0
      %2356 = vmatmul.mubr.f32.gmra.mrb[0].mxu0 %v2222
      %v2357 = vpop.f32.mrb[0].mxu0
      %v2358 = vadd.f32 0.0, %v2357
      %v2359 = vpop.f32.mrb[0].mxu0
      %2360 = vmatprep.mubr.f32.mxu0 0.0
      %2361 = vmatmul.mubr.f32.gmra.mrb[0].mxu0 %v2225
      %v2362 = vpop.f32.mrb[0].mxu0
      %v2363 = vadd.f32 0.0, %v2362
      %v2364 = vpop.f32.mrb[0].mxu0
      %2365 = vmatprep.mubr.f32.mxu0 0.0
      %2366 = vmatmul.mubr.f32.gmra.mrb[0].mxu0 %v2228
      %v2367 = vpop.f32.mrb[0].mxu0
      %v2368 = vadd.f32 0.0, %v2367
      %v2369 = vpop.f32.mrb[0].mxu0
      %2370 = vmatprep.mubr.f32.mxu0 0.0
      %2371 = vmatmul.mubr.f32.gmra.mrb[0].mxu0 %v2231
      %v2372 = vpop.f32.mrb[0].mxu0
      %v2373 = vadd.f32 0.0, %v2372
      %v2374 = vpop.f32.mrb[0].mxu0
      %2375 = vmatprep.mubr.f32.mxu0 0.0
      %2376 = vmatmul.mubr.f32.gmra.mrb[0].mxu0 %v2234
      %v2377 = vpop.f32.mrb[0].mxu0
      %v2378 = vadd.f32 0.0, %v2377
      %v2379 = vpop.f32.mrb[0].mxu0
      %2380 = vdwg.mxu0
      %v2381 = vld [vmem:[#allocation2] sm:$0xff]
      %v2382 = vld [vmem:[#allocation2 + $0x8] sm:$0xff]
      %v2383 = vld [vmem:[#allocation2 + $0x10] sm:$0xff]
      %v2384 = vld [vmem:[#allocation2 + $0x18] sm:$0xff]
      %v2385 = vld [vmem:[#allocation2 + $0x20] sm:$0xff]
      %v2386 = vld [vmem:[#allocation2 + $0x28] sm:$0xff]
      %v2387 = vld [vmem:[#allocation2 + $0x30] sm:$0xff]
      %v2388 = vld [vmem:[#allocation2 + $0x38] sm:$0xff]
      %v2389 = vld [vmem:[#allocation2 + $0x40] sm:$0xff]
      %v2390 = vld [vmem:[#allocation2 + $0x48] sm:$0xff]
      %v2391 = vld [vmem:[#allocation2 + $0x50] sm:$0xff]
      %v2392 = vld [vmem:[#allocation2 + $0x58] sm:$0xff]
      %v2393 = vld [vmem:[#allocation2 + $0x60] sm:$0xff]
      %v2394 = vld [vmem:[#allocation2 + $0x68] sm:$0xff]
      %v2395 = vld [vmem:[#allocation2 + $0x70] sm:$0xff]
      %v2396 = vld [vmem:[#allocation2 + $0x78] sm:$0xff]
      %v2397 = vadd.f32 %v2381, %v2303
      %v2398 = vadd.f32 %v2382, %v2308
      %v2399 = vadd.f32 %v2383, %v2313
      %v2400 = vadd.f32 %v2384, %v2318
      %v2401 = vadd.f32 %v2385, %v2323
      %v2402 = vadd.f32 %v2386, %v2328
      %v2403 = vadd.f32 %v2387, %v2333
      %v2404 = vadd.f32 %v2388, %v2338
      %v2405 = vadd.f32 %v2389, %v2343
      %v2406 = vadd.f32 %v2390, %v2348
      %v2407 = vadd.f32 %v2391, %v2353
      %v2408 = vadd.f32 %v2392, %v2358
      %v2409 = vadd.f32 %v2393, %v2363
      %v2410 = vadd.f32 %v2394, %v2368
      %v2411 = vadd.f32 %v2395, %v2373
      %v2412 = vadd.f32 %v2396, %v2378
      %2413 = vst [vmem:[#allocation2] sm:$0xff] %v2397
      %2414 = vst [vmem:[#allocation2 + $0x8] sm:$0xff] %v2398
      %2415 = vst [vmem:[#allocation2 + $0x10] sm:$0xff] %v2399
      %2416 = vst [vmem:[#allocation2 + $0x18] sm:$0xff] %v2400
      %2417 = vst [vmem:[#allocation2 + $0x20] sm:$0xff] %v2401
      %2418 = vst [vmem:[#allocation2 + $0x28] sm:$0xff] %v2402
      %2419 = vst [vmem:[#allocation2 + $0x30] sm:$0xff] %v2403
      %2420 = vst [vmem:[#allocation2 + $0x38] sm:$0xff] %v2404
      %2421 = vst [vmem:[#allocation2 + $0x40] sm:$0xff] %v2405
      %2422 = vst [vmem:[#allocation2 + $0x48] sm:$0xff] %v2406
      %2423 = vst [vmem:[#allocation2 + $0x50] sm:$0xff] %v2407
      %2424 = vst [vmem:[#allocation2 + $0x58] sm:$0xff] %v2408
      %2425 = vst [vmem:[#allocation2 + $0x60] sm:$0xff] %v2409
      %2426 = vst [vmem:[#allocation2 + $0x68] sm:$0xff] %v2410
      %2427 = vst [vmem:[#allocation2 + $0x70] sm:$0xff] %v2411
      %2428 = vst [vmem:[#allocation2 + $0x78] sm:$0xff] %v2412
      %s2429 = sadd.s32 %s297, 33
      %s2430 = scalar_lea.vmem %s280, %s2429
      %v2431 = vld [vmem:[%s2430] sm:$0xff]
      %v2432 = vld [vmem:[%s2430 + $0x8] sm:$0xff]
      %v2433 = vld [vmem:[%s2430 + $0x10] sm:$0xff]
      %v2434 = vld [vmem:[%s2430 + $0x18] sm:$0xff]
      %v2435 = vld [vmem:[%s2430 + $0x20] sm:$0xff]
      %v2436 = vld [vmem:[%s2430 + $0x28] sm:$0xff]
      %v2437 = vld [vmem:[%s2430 + $0x30] sm:$0xff]
      %v2438 = vld [vmem:[%s2430 + $0x38] sm:$0xff]
      %v2439 = vld [vmem:[%s2430 + $0x40] sm:$0xff]
      %v2440 = vld [vmem:[%s2430 + $0x48] sm:$0xff]
      %v2441 = vld [vmem:[%s2430 + $0x50] sm:$0xff]
      %v2442 = vld [vmem:[%s2430 + $0x58] sm:$0xff]
      %v2443 = vld [vmem:[%s2430 + $0x60] sm:$0xff]
      %v2444 = vld [vmem:[%s2430 + $0x68] sm:$0xff]
      %v2445 = vld [vmem:[%s2430 + $0x70] sm:$0xff]
      %v2446 = vld [vmem:[%s2430 + $0x78] sm:$0xff]
      %s2447 = scalar_lea.vmem %s2, 448
      %v2448 = vld [vmem:[%s2447] sm:$0xff]
      %v2449 = vld [vmem:[%s2447 + $0x8] sm:$0xff]
      %v2450 = vld [vmem:[%s2447 + $0x10] sm:$0xff]
      %v2451 = vld [vmem:[%s2447 + $0x18] sm:$0xff]
      %v2452 = vld [vmem:[%s2447 + $0x20] sm:$0xff]
      %v2453 = vld [vmem:[%s2447 + $0x28] sm:$0xff]
      %v2454 = vld [vmem:[%s2447 + $0x30] sm:$0xff]
      %v2455 = vld [vmem:[%s2447 + $0x38] sm:$0xff]
      %v2457 = vsel %vm467, %v2431, 0
      %v2460 = vsel %vm467, %v2432, 0
      %v2463 = vsel %vm467, %v2433, 0
      %v2466 = vsel %vm467, %v2434, 0
      %v2469 = vsel %vm467, %v2435, 0
      %v2472 = vsel %vm467, %v2436, 0
      %v2475 = vsel %vm467, %v2437, 0
      %v2478 = vsel %vm467, %v2438, 0
      %v2481 = vsel %vm467, %v2439, 0
      %v2484 = vsel %vm467, %v2440, 0
      %v2487 = vsel %vm467, %v2441, 0
      %v2490 = vsel %vm467, %v2442, 0
      %v2493 = vsel %vm467, %v2443, 0
      %v2496 = vsel %vm467, %v2444, 0
      %v2499 = vsel %vm467, %v2445, 0
      %v2502 = vsel %vm467, %v2446, 0
      %2504 = vmatprep.subr.mxu0 0.0
      %2505 = vmatpush1.msra.mxu0 %v2448
      %2506 = vmatprep.subr.mxu0 0.0
      %2507 = vmatpush1.msra.mxu0 %v2449
      %2508 = vmatprep.subr.mxu0 0.0
      %2509 = vmatpush1.msra.mxu0 %v2450
      %2510 = vmatprep.subr.mxu0 0.0
      %2511 = vmatpush1.msra.mxu0 %v2451
      %2512 = vmatprep.subr.mxu0 0.0
      %2513 = vmatpush1.msra.mxu0 %v2452
      %2514 = vmatprep.subr.mxu0 0.0
      %2515 = vmatpush1.msra.mxu0 %v2453
      %2516 = vmatprep.subr.mxu0 0.0
      %2517 = vmatpush1.msra.mxu0 %v2454
      %2518 = vmatprep.subr.mxu0 0.0
      %2519 = vmatpush1.msra.mxu0 %v2455
      %2520 = vmatprep.subr.mxu0 0.0
      %2521 = vmatpush1.msra.mxu0 0.0
      %2522 = vmatprep.subr.mxu0 0.0
      %2523 = vmatpush1.msra.mxu0 0.0
      %2524 = vmatprep.subr.mxu0 0.0
      %2525 = vmatpush1.msra.mxu0 0.0
      %2526 = vmatprep.subr.mxu0 0.0
      %2527 = vmatpush1.msra.mxu0 0.0
      %2528 = vmatprep.subr.mxu0 0.0
      %2529 = vmatpush1.msra.mxu0 0.0
      %2530 = vmatprep.subr.mxu0 0.0
      %2531 = vmatpush1.msra.mxu0 0.0
      %2532 = vmatprep.subr.mxu0 0.0
      %2533 = vmatpush1.msra.mxu0 0.0
      %2534 = vmatprep.subr.mxu0 0.0
      %2535 = vmatpush1.msra.mxu0 0.0
      %2536 = vmatprep.subr.mxu0 0.0
      %2537 = vmatpush1.msra.mxu0 0.0
      %2538 = vmatprep.subr.mxu0 0.0
      %2539 = vmatpush1.msra.mxu0 0.0
      %2540 = vmatprep.subr.mxu0 0.0
      %2541 = vmatpush1.msra.mxu0 0.0
      %2542 = vmatprep.subr.mxu0 0.0
      %2543 = vmatpush1.msra.mxu0 0.0
      %2544 = vmatprep.subr.mxu0 0.0
      %2545 = vmatpush1.msra.mxu0 0.0
      %2546 = vmatprep.subr.mxu0 0.0
      %2547 = vmatpush1.msra.mxu0 0.0
      %2548 = vmatprep.subr.mxu0 0.0
      %2549 = vmatpush1.msra.mxu0 0.0
      %2550 = vmatprep.subr.mxu0 0.0
      %2551 = vmatpush1.msra.mxu0 0.0
      %2552 = vmatprep.subr.mxu0 0.0
      %2553 = vmatpush1.msra.mxu0 0.0
      %2554 = vmatprep.subr.mxu0 0.0
      %2555 = vmatpush1.msra.mxu0 0.0
      %2556 = vmatprep.subr.mxu0 0.0
      %2557 = vmatpush1.msra.mxu0 0.0
      %2558 = vmatprep.subr.mxu0 0.0
      %2559 = vmatpush1.msra.mxu0 0.0
      %2560 = vmatprep.subr.mxu0 0.0
      %2561 = vmatpush1.msra.mxu0 0.0
      %2562 = vmatprep.subr.mxu0 0.0
      %2563 = vmatpush1.msra.mxu0 0.0
      %2564 = vmatprep.subr.mxu0 0.0
      %2565 = vmatpush1.msra.mxu0 0.0
      %2566 = vmatprep.subr.mxu0 0.0
      %2567 = vmatpush1.msra.mxu0 0.0
      %2568 = vmatprep.mubr.f32.mxu0 0.0
      %2569 = vmatmul.mubr.f32.gmra.mrb[0].mxu0 %v2457
      %v2570 = vpop.f32.mrb[0].mxu0
      %v2571 = vadd.f32 0.0, %v2570
      %v2572 = vpop.f32.mrb[0].mxu0
      %2573 = vmatprep.mubr.f32.mxu0 0.0
      %2574 = vmatmul.mubr.f32.gmra.mrb[0].mxu0 %v2460
      %v2575 = vpop.f32.mrb[0].mxu0
      %v2576 = vadd.f32 0.0, %v2575
      %v2577 = vpop.f32.mrb[0].mxu0
      %2578 = vmatprep.mubr.f32.mxu0 0.0
      %2579 = vmatmul.mubr.f32.gmra.mrb[0].mxu0 %v2463
      %v2580 = vpop.f32.mrb[0].mxu0
      %v2581 = vadd.f32 0.0, %v2580
      %v2582 = vpop.f32.mrb[0].mxu0
      %2583 = vmatprep.mubr.f32.mxu0 0.0
      %2584 = vmatmul.mubr.f32.gmra.mrb[0].mxu0 %v2466
      %v2585 = vpop.f32.mrb[0].mxu0
      %v2586 = vadd.f32 0.0, %v2585
      %v2587 = vpop.f32.mrb[0].mxu0
      %2588 = vmatprep.mubr.f32.mxu0 0.0
      %2589 = vmatmul.mubr.f32.gmra.mrb[0].mxu0 %v2469
      %v2590 = vpop.f32.mrb[0].mxu0
      %v2591 = vadd.f32 0.0, %v2590
      %v2592 = vpop.f32.mrb[0].mxu0
      %2593 = vmatprep.mubr.f32.mxu0 0.0
      %2594 = vmatmul.mubr.f32.gmra.mrb[0].mxu0 %v2472
      %v2595 = vpop.f32.mrb[0].mxu0
      %v2596 = vadd.f32 0.0, %v2595
      %v2597 = vpop.f32.mrb[0].mxu0
      %2598 = vmatprep.mubr.f32.mxu0 0.0
      %2599 = vmatmul.mubr.f32.gmra.mrb[0].mxu0 %v2475
      %v2600 = vpop.f32.mrb[0].mxu0
      %v2601 = vadd.f32 0.0, %v2600
      %v2602 = vpop.f32.mrb[0].mxu0
      %2603 = vmatprep.mubr.f32.mxu0 0.0
      %2604 = vmatmul.mubr.f32.gmra.mrb[0].mxu0 %v2478
      %v2605 = vpop.f32.mrb[0].mxu0
      %v2606 = vadd.f32 0.0, %v2605
      %v2607 = vpop.f32.mrb[0].mxu0
      %2608 = vmatprep.mubr.f32.mxu0 0.0
      %2609 = vmatmul.mubr.f32.gmra.mrb[0].mxu0 %v2481
      %v2610 = vpop.f32.mrb[0].mxu0
      %v2611 = vadd.f32 0.0, %v2610
      %v2612 = vpop.f32.mrb[0].mxu0
      %2613 = vmatprep.mubr.f32.mxu0 0.0
      %2614 = vmatmul.mubr.f32.gmra.mrb[0].mxu0 %v2484
      %v2615 = vpop.f32.mrb[0].mxu0
      %v2616 = vadd.f32 0.0, %v2615
      %v2617 = vpop.f32.mrb[0].mxu0
      %2618 = vmatprep.mubr.f32.mxu0 0.0
      %2619 = vmatmul.mubr.f32.gmra.mrb[0].mxu0 %v2487
      %v2620 = vpop.f32.mrb[0].mxu0
      %v2621 = vadd.f32 0.0, %v2620
      %v2622 = vpop.f32.mrb[0].mxu0
      %2623 = vmatprep.mubr.f32.mxu0 0.0
      %2624 = vmatmul.mubr.f32.gmra.mrb[0].mxu0 %v2490
      %v2625 = vpop.f32.mrb[0].mxu0
      %v2626 = vadd.f32 0.0, %v2625
      %v2627 = vpop.f32.mrb[0].mxu0
      %2628 = vmatprep.mubr.f32.mxu0 0.0
      %2629 = vmatmul.mubr.f32.gmra.mrb[0].mxu0 %v2493
      %v2630 = vpop.f32.mrb[0].mxu0
      %v2631 = vadd.f32 0.0, %v2630
      %v2632 = vpop.f32.mrb[0].mxu0
      %2633 = vmatprep.mubr.f32.mxu0 0.0
      %2634 = vmatmul.mubr.f32.gmra.mrb[0].mxu0 %v2496
      %v2635 = vpop.f32.mrb[0].mxu0
      %v2636 = vadd.f32 0.0, %v2635
      %v2637 = vpop.f32.mrb[0].mxu0
      %2638 = vmatprep.mubr.f32.mxu0 0.0
      %2639 = vmatmul.mubr.f32.gmra.mrb[0].mxu0 %v2499
      %v2640 = vpop.f32.mrb[0].mxu0
      %v2641 = vadd.f32 0.0, %v2640
      %v2642 = vpop.f32.mrb[0].mxu0
      %2643 = vmatprep.mubr.f32.mxu0 0.0
      %2644 = vmatmul.mubr.f32.gmra.mrb[0].mxu0 %v2502
      %v2645 = vpop.f32.mrb[0].mxu0
      %v2646 = vadd.f32 0.0, %v2645
      %v2647 = vpop.f32.mrb[0].mxu0
      %2648 = vdwg.mxu0
      %v2649 = vld [vmem:[#allocation2] sm:$0xff]
      %v2650 = vld [vmem:[#allocation2 + $0x8] sm:$0xff]
      %v2651 = vld [vmem:[#allocation2 + $0x10] sm:$0xff]
      %v2652 = vld [vmem:[#allocation2 + $0x18] sm:$0xff]
      %v2653 = vld [vmem:[#allocation2 + $0x20] sm:$0xff]
      %v2654 = vld [vmem:[#allocation2 + $0x28] sm:$0xff]
      %v2655 = vld [vmem:[#allocation2 + $0x30] sm:$0xff]
      %v2656 = vld [vmem:[#allocation2 + $0x38] sm:$0xff]
      %v2657 = vld [vmem:[#allocation2 + $0x40] sm:$0xff]
      %v2658 = vld [vmem:[#allocation2 + $0x48] sm:$0xff]
      %v2659 = vld [vmem:[#allocation2 + $0x50] sm:$0xff]
      %v2660 = vld [vmem:[#allocation2 + $0x58] sm:$0xff]
      %v2661 = vld [vmem:[#allocation2 + $0x60] sm:$0xff]
      %v2662 = vld [vmem:[#allocation2 + $0x68] sm:$0xff]
      %v2663 = vld [vmem:[#allocation2 + $0x70] sm:$0xff]
      %v2664 = vld [vmem:[#allocation2 + $0x78] sm:$0xff]
      %v2665 = vadd.f32 %v2649, %v2571
      %v2666 = vadd.f32 %v2650, %v2576
      %v2667 = vadd.f32 %v2651, %v2581
      %v2668 = vadd.f32 %v2652, %v2586
      %v2669 = vadd.f32 %v2653, %v2591
      %v2670 = vadd.f32 %v2654, %v2596
      %v2671 = vadd.f32 %v2655, %v2601
      %v2672 = vadd.f32 %v2656, %v2606
      %v2673 = vadd.f32 %v2657, %v2611
      %v2674 = vadd.f32 %v2658, %v2616
      %v2675 = vadd.f32 %v2659, %v2621
      %v2676 = vadd.f32 %v2660, %v2626
      %v2677 = vadd.f32 %v2661, %v2631
      %v2678 = vadd.f32 %v2662, %v2636
      %v2679 = vadd.f32 %v2663, %v2641
      %v2680 = vadd.f32 %v2664, %v2646
      %2681 = vst [vmem:[#allocation2] sm:$0xff] %v2665
      %2682 = vst [vmem:[#allocation2 + $0x8] sm:$0xff] %v2666
      %2683 = vst [vmem:[#allocation2 + $0x10] sm:$0xff] %v2667
      %2684 = vst [vmem:[#allocation2 + $0x18] sm:$0xff] %v2668
      %2685 = vst [vmem:[#allocation2 + $0x20] sm:$0xff] %v2669
      %2686 = vst [vmem:[#allocation2 + $0x28] sm:$0xff] %v2670
      %2687 = vst [vmem:[#allocation2 + $0x30] sm:$0xff] %v2671
      %2688 = vst [vmem:[#allocation2 + $0x38] sm:$0xff] %v2672
      %2689 = vst [vmem:[#allocation2 + $0x40] sm:$0xff] %v2673
      %2690 = vst [vmem:[#allocation2 + $0x48] sm:$0xff] %v2674
      %2691 = vst [vmem:[#allocation2 + $0x50] sm:$0xff] %v2675
      %2692 = vst [vmem:[#allocation2 + $0x58] sm:$0xff] %v2676
      %2693 = vst [vmem:[#allocation2 + $0x60] sm:$0xff] %v2677
      %2694 = vst [vmem:[#allocation2 + $0x68] sm:$0xff] %v2678
      %2695 = vst [vmem:[#allocation2 + $0x70] sm:$0xff] %v2679
      %2696 = vst [vmem:[#allocation2 + $0x78] sm:$0xff] %v2680
      %s2697 = sadd.s32 %s297, 34
      %s2698 = scalar_lea.vmem %s280, %s2697
      %v2699 = vld [vmem:[%s2698] sm:$0xff]
      %v2700 = vld [vmem:[%s2698 + $0x8] sm:$0xff]
      %v2701 = vld [vmem:[%s2698 + $0x10] sm:$0xff]
      %v2702 = vld [vmem:[%s2698 + $0x18] sm:$0xff]
      %v2703 = vld [vmem:[%s2698 + $0x20] sm:$0xff]
      %v2704 = vld [vmem:[%s2698 + $0x28] sm:$0xff]
      %v2705 = vld [vmem:[%s2698 + $0x30] sm:$0xff]
      %v2706 = vld [vmem:[%s2698 + $0x38] sm:$0xff]
      %v2707 = vld [vmem:[%s2698 + $0x40] sm:$0xff]
      %v2708 = vld [vmem:[%s2698 + $0x48] sm:$0xff]
      %v2709 = vld [vmem:[%s2698 + $0x50] sm:$0xff]
      %v2710 = vld [vmem:[%s2698 + $0x58] sm:$0xff]
      %v2711 = vld [vmem:[%s2698 + $0x60] sm:$0xff]
      %v2712 = vld [vmem:[%s2698 + $0x68] sm:$0xff]
      %v2713 = vld [vmem:[%s2698 + $0x70] sm:$0xff]
      %v2714 = vld [vmem:[%s2698 + $0x78] sm:$0xff]
      %v2715 = vsel %vm1027, 0.0, %v2699
      %v2716 = vsel %vm1028, 0.0, %v2700
      %v2717 = vsel %vm1029, 0.0, %v2701
      %v2718 = vsel %vm1030, 0.0, %v2702
      %v2719 = vsel %vm1031, 0.0, %v2703
      %v2720 = vsel %vm1032, 0.0, %v2704
      %v2721 = vsel %vm1033, 0.0, %v2705
      %v2722 = vsel %vm1034, 0.0, %v2706
      %v2723 = vsel %vm1035, 0.0, %v2707
      %v2724 = vsel %vm1036, 0.0, %v2708
      %v2725 = vsel %vm1037, 0.0, %v2709
      %v2726 = vsel %vm1038, 0.0, %v2710
      %v2727 = vsel %vm1039, 0.0, %v2711
      %v2728 = vsel %vm1040, 0.0, %v2712
      %v2729 = vsel %vm1041, 0.0, %v2713
      %v2730 = vsel %vm1042, 0.0, %v2714
      %s2731 = scalar_lea.vmem %s2, 512
      %v2732 = vld [vmem:[%s2731] sm:$0xff]
      %v2733 = vld [vmem:[%s2731 + $0x8] sm:$0xff]
      %v2734 = vld [vmem:[%s2731 + $0x10] sm:$0xff]
      %v2735 = vld [vmem:[%s2731 + $0x18] sm:$0xff]
      %v2736 = vld [vmem:[%s2731 + $0x20] sm:$0xff]
      %v2737 = vld [vmem:[%s2731 + $0x28] sm:$0xff]
      %v2738 = vld [vmem:[%s2731 + $0x30] sm:$0xff]
      %v2739 = vld [vmem:[%s2731 + $0x38] sm:$0xff]
      %v2741 = vsel %vm467, %v2715, 0
      %v2744 = vsel %vm467, %v2716, 0
      %v2747 = vsel %vm467, %v2717, 0
      %v2750 = vsel %vm467, %v2718, 0
      %v2753 = vsel %vm467, %v2719, 0
      %v2756 = vsel %vm467, %v2720, 0
      %v2759 = vsel %vm467, %v2721, 0
      %v2762 = vsel %vm467, %v2722, 0
      %v2765 = vsel %vm467, %v2723, 0
      %v2768 = vsel %vm467, %v2724, 0
      %v2771 = vsel %vm467, %v2725, 0
      %v2774 = vsel %vm467, %v2726, 0
      %v2777 = vsel %vm467, %v2727, 0
      %v2780 = vsel %vm467, %v2728, 0
      %v2783 = vsel %vm467, %v2729, 0
      %v2786 = vsel %vm467, %v2730, 0
      %2788 = vmatprep.subr.mxu0 0.0
      %2789 = vmatpush1.msra.mxu0 %v2732
      %2790 = vmatprep.subr.mxu0 0.0
      %2791 = vmatpush1.msra.mxu0 %v2733
      %2792 = vmatprep.subr.mxu0 0.0
      %2793 = vmatpush1.msra.mxu0 %v2734
      %2794 = vmatprep.subr.mxu0 0.0
      %2795 = vmatpush1.msra.mxu0 %v2735
      %2796 = vmatprep.subr.mxu0 0.0
      %2797 = vmatpush1.msra.mxu0 %v2736
      %2798 = vmatprep.subr.mxu0 0.0
      %2799 = vmatpush1.msra.mxu0 %v2737
      %2800 = vmatprep.subr.mxu0 0.0
      %2801 = vmatpush1.msra.mxu0 %v2738
      %2802 = vmatprep.subr.mxu0 0.0
      %2803 = vmatpush1.msra.mxu0 %v2739
      %2804 = vmatprep.subr.mxu0 0.0
      %2805 = vmatpush1.msra.mxu0 0.0
      %2806 = vmatprep.subr.mxu0 0.0
      %2807 = vmatpush1.msra.mxu0 0.0
      %2808 = vmatprep.subr.mxu0 0.0
      %2809 = vmatpush1.msra.mxu0 0.0
      %2810 = vmatprep.subr.mxu0 0.0
      %2811 = vmatpush1.msra.mxu0 0.0
      %2812 = vmatprep.subr.mxu0 0.0
      %2813 = vmatpush1.msra.mxu0 0.0
      %2814 = vmatprep.subr.mxu0 0.0
      %2815 = vmatpush1.msra.mxu0 0.0
      %2816 = vmatprep.subr.mxu0 0.0
      %2817 = vmatpush1.msra.mxu0 0.0
      %2818 = vmatprep.subr.mxu0 0.0
      %2819 = vmatpush1.msra.mxu0 0.0
      %2820 = vmatprep.subr.mxu0 0.0
      %2821 = vmatpush1.msra.mxu0 0.0
      %2822 = vmatprep.subr.mxu0 0.0
      %2823 = vmatpush1.msra.mxu0 0.0
      %2824 = vmatprep.subr.mxu0 0.0
      %2825 = vmatpush1.msra.mxu0 0.0
      %2826 = vmatprep.subr.mxu0 0.0
      %2827 = vmatpush1.msra.mxu0 0.0
      %2828 = vmatprep.subr.mxu0 0.0
      %2829 = vmatpush1.msra.mxu0 0.0
      %2830 = vmatprep.subr.mxu0 0.0
      %2831 = vmatpush1.msra.mxu0 0.0
      %2832 = vmatprep.subr.mxu0 0.0
      %2833 = vmatpush1.msra.mxu0 0.0
      %2834 = vmatprep.subr.mxu0 0.0
      %2835 = vmatpush1.msra.mxu0 0.0
      %2836 = vmatprep.subr.mxu0 0.0
      %2837 = vmatpush1.msra.mxu0 0.0
      %2838 = vmatprep.subr.mxu0 0.0
      %2839 = vmatpush1.msra.mxu0 0.0
      %2840 = vmatprep.subr.mxu0 0.0
      %2841 = vmatpush1.msra.mxu0 0.0
      %2842 = vmatprep.subr.mxu0 0.0
      %2843 = vmatpush1.msra.mxu0 0.0
      %2844 = vmatprep.subr.mxu0 0.0
      %2845 = vmatpush1.msra.mxu0 0.0
      %2846 = vmatprep.subr.mxu0 0.0
      %2847 = vmatpush1.msra.mxu0 0.0
      %2848 = vmatprep.subr.mxu0 0.0
      %2849 = vmatpush1.msra.mxu0 0.0
      %2850 = vmatprep.subr.mxu0 0.0
      %2851 = vmatpush1.msra.mxu0 0.0
      %2852 = vmatprep.mubr.f32.mxu0 0.0
      %2853 = vmatmul.mubr.f32.gmra.mrb[0].mxu0 %v2741
      %v2854 = vpop.f32.mrb[0].mxu0
      %v2855 = vadd.f32 0.0, %v2854
      %v2856 = vpop.f32.mrb[0].mxu0
      %2857 = vmatprep.mubr.f32.mxu0 0.0
      %2858 = vmatmul.mubr.f32.gmra.mrb[0].mxu0 %v2744
      %v2859 = vpop.f32.mrb[0].mxu0
      %v2860 = vadd.f32 0.0, %v2859
      %v2861 = vpop.f32.mrb[0].mxu0
      %2862 = vmatprep.mubr.f32.mxu0 0.0
      %2863 = vmatmul.mubr.f32.gmra.mrb[0].mxu0 %v2747
      %v2864 = vpop.f32.mrb[0].mxu0
      %v2865 = vadd.f32 0.0, %v2864
      %v2866 = vpop.f32.mrb[0].mxu0
      %2867 = vmatprep.mubr.f32.mxu0 0.0
      %2868 = vmatmul.mubr.f32.gmra.mrb[0].mxu0 %v2750
      %v2869 = vpop.f32.mrb[0].mxu0
      %v2870 = vadd.f32 0.0, %v2869
      %v2871 = vpop.f32.mrb[0].mxu0
      %2872 = vmatprep.mubr.f32.mxu0 0.0
      %2873 = vmatmul.mubr.f32.gmra.mrb[0].mxu0 %v2753
      %v2874 = vpop.f32.mrb[0].mxu0
      %v2875 = vadd.f32 0.0, %v2874
      %v2876 = vpop.f32.mrb[0].mxu0
      %2877 = vmatprep.mubr.f32.mxu0 0.0
      %2878 = vmatmul.mubr.f32.gmra.mrb[0].mxu0 %v2756
      %v2879 = vpop.f32.mrb[0].mxu0
      %v2880 = vadd.f32 0.0, %v2879
      %v2881 = vpop.f32.mrb[0].mxu0
      %2882 = vmatprep.mubr.f32.mxu0 0.0
      %2883 = vmatmul.mubr.f32.gmra.mrb[0].mxu0 %v2759
      %v2884 = vpop.f32.mrb[0].mxu0
      %v2885 = vadd.f32 0.0, %v2884
      %v2886 = vpop.f32.mrb[0].mxu0
      %2887 = vmatprep.mubr.f32.mxu0 0.0
      %2888 = vmatmul.mubr.f32.gmra.mrb[0].mxu0 %v2762
      %v2889 = vpop.f32.mrb[0].mxu0
      %v2890 = vadd.f32 0.0, %v2889
      %v2891 = vpop.f32.mrb[0].mxu0
      %2892 = vmatprep.mubr.f32.mxu0 0.0
      %2893 = vmatmul.mubr.f32.gmra.mrb[0].mxu0 %v2765
      %v2894 = vpop.f32.mrb[0].mxu0
      %v2895 = vadd.f32 0.0, %v2894
      %v2896 = vpop.f32.mrb[0].mxu0
      %2897 = vmatprep.mubr.f32.mxu0 0.0
      %2898 = vmatmul.mubr.f32.gmra.mrb[0].mxu0 %v2768
      %v2899 = vpop.f32.mrb[0].mxu0
      %v2900 = vadd.f32 0.0, %v2899
      %v2901 = vpop.f32.mrb[0].mxu0
      %2902 = vmatprep.mubr.f32.mxu0 0.0
      %2903 = vmatmul.mubr.f32.gmra.mrb[0].mxu0 %v2771
      %v2904 = vpop.f32.mrb[0].mxu0
      %v2905 = vadd.f32 0.0, %v2904
      %v2906 = vpop.f32.mrb[0].mxu0
      %2907 = vmatprep.mubr.f32.mxu0 0.0
      %2908 = vmatmul.mubr.f32.gmra.mrb[0].mxu0 %v2774
      %v2909 = vpop.f32.mrb[0].mxu0
      %v2910 = vadd.f32 0.0, %v2909
      %v2911 = vpop.f32.mrb[0].mxu0
      %2912 = vmatprep.mubr.f32.mxu0 0.0
      %2913 = vmatmul.mubr.f32.gmra.mrb[0].mxu0 %v2777
      %v2914 = vpop.f32.mrb[0].mxu0
      %v2915 = vadd.f32 0.0, %v2914
      %v2916 = vpop.f32.mrb[0].mxu0
      %2917 = vmatprep.mubr.f32.mxu0 0.0
      %2918 = vmatmul.mubr.f32.gmra.mrb[0].mxu0 %v2780
      %v2919 = vpop.f32.mrb[0].mxu0
      %v2920 = vadd.f32 0.0, %v2919
      %v2921 = vpop.f32.mrb[0].mxu0
      %2922 = vmatprep.mubr.f32.mxu0 0.0
      %2923 = vmatmul.mubr.f32.gmra.mrb[0].mxu0 %v2783
      %v2924 = vpop.f32.mrb[0].mxu0
      %v2925 = vadd.f32 0.0, %v2924
      %v2926 = vpop.f32.mrb[0].mxu0
      %2927 = vmatprep.mubr.f32.mxu0 0.0
      %2928 = vmatmul.mubr.f32.gmra.mrb[0].mxu0 %v2786
      %v2929 = vpop.f32.mrb[0].mxu0
      %v2930 = vadd.f32 0.0, %v2929
      %v2931 = vpop.f32.mrb[0].mxu0
      %2932 = vdwg.mxu0
      %v2933 = vld [vmem:[#allocation2] sm:$0xff]
      %v2934 = vld [vmem:[#allocation2 + $0x8] sm:$0xff]
      %v2935 = vld [vmem:[#allocation2 + $0x10] sm:$0xff]
      %v2936 = vld [vmem:[#allocation2 + $0x18] sm:$0xff]
      %v2937 = vld [vmem:[#allocation2 + $0x20] sm:$0xff]
      %v2938 = vld [vmem:[#allocation2 + $0x28] sm:$0xff]
      %v2939 = vld [vmem:[#allocation2 + $0x30] sm:$0xff]
      %v2940 = vld [vmem:[#allocation2 + $0x38] sm:$0xff]
      %v2941 = vld [vmem:[#allocation2 + $0x40] sm:$0xff]
      %v2942 = vld [vmem:[#allocation2 + $0x48] sm:$0xff]
      %v2943 = vld [vmem:[#allocation2 + $0x50] sm:$0xff]
      %v2944 = vld [vmem:[#allocation2 + $0x58] sm:$0xff]
      %v2945 = vld [vmem:[#allocation2 + $0x60] sm:$0xff]
      %v2946 = vld [vmem:[#allocation2 + $0x68] sm:$0xff]
      %v2947 = vld [vmem:[#allocation2 + $0x70] sm:$0xff]
      %v2948 = vld [vmem:[#allocation2 + $0x78] sm:$0xff]
      %v2949 = vadd.f32 %v2933, %v2855
      %v2950 = vadd.f32 %v2934, %v2860
      %v2951 = vadd.f32 %v2935, %v2865
      %v2952 = vadd.f32 %v2936, %v2870
      %v2953 = vadd.f32 %v2937, %v2875
      %v2954 = vadd.f32 %v2938, %v2880
      %v2955 = vadd.f32 %v2939, %v2885
      %v2956 = vadd.f32 %v2940, %v2890
      %v2957 = vadd.f32 %v2941, %v2895
      %v2958 = vadd.f32 %v2942, %v2900
      %v2959 = vadd.f32 %v2943, %v2905
      %v2960 = vadd.f32 %v2944, %v2910
      %v2961 = vadd.f32 %v2945, %v2915
      %v2962 = vadd.f32 %v2946, %v2920
      %v2963 = vadd.f32 %v2947, %v2925
      %v2964 = vadd.f32 %v2948, %v2930
      %2965 = vst [vmem:[#allocation2] sm:$0xff] %v2949
      %2966 = vst [vmem:[#allocation2 + $0x8] sm:$0xff] %v2950
      %2967 = vst [vmem:[#allocation2 + $0x10] sm:$0xff] %v2951
      %2968 = vst [vmem:[#allocation2 + $0x18] sm:$0xff] %v2952
      %2969 = vst [vmem:[#allocation2 + $0x20] sm:$0xff] %v2953
      %2970 = vst [vmem:[#allocation2 + $0x28] sm:$0xff] %v2954
      %2971 = vst [vmem:[#allocation2 + $0x30] sm:$0xff] %v2955
      %2972 = vst [vmem:[#allocation2 + $0x38] sm:$0xff] %v2956
      %2973 = vst [vmem:[#allocation2 + $0x40] sm:$0xff] %v2957
      %2974 = vst [vmem:[#allocation2 + $0x48] sm:$0xff] %v2958
      %2975 = vst [vmem:[#allocation2 + $0x50] sm:$0xff] %v2959
      %2976 = vst [vmem:[#allocation2 + $0x58] sm:$0xff] %v2960
      %2977 = vst [vmem:[#allocation2 + $0x60] sm:$0xff] %v2961
      %2978 = vst [vmem:[#allocation2 + $0x68] sm:$0xff] %v2962
      %2979 = vst [vmem:[#allocation2 + $0x70] sm:$0xff] %v2963
      %2980 = vst [vmem:[#allocation2 + $0x78] sm:$0xff] %v2964
      %v2981 = vld [vmem:[#allocation2] sm:$0xff]
      %v2982 = vld [vmem:[#allocation2 + $0x8] sm:$0xff]
      %v2983 = vld [vmem:[#allocation2 + $0x10] sm:$0xff]
      %v2984 = vld [vmem:[#allocation2 + $0x18] sm:$0xff]
      %v2985 = vld [vmem:[#allocation2 + $0x20] sm:$0xff]
      %v2986 = vld [vmem:[#allocation2 + $0x28] sm:$0xff]
      %v2987 = vld [vmem:[#allocation2 + $0x30] sm:$0xff]
      %v2988 = vld [vmem:[#allocation2 + $0x38] sm:$0xff]
      %v2989 = vld [vmem:[#allocation2 + $0x40] sm:$0xff]
      %v2990 = vld [vmem:[#allocation2 + $0x48] sm:$0xff]
      %v2991 = vld [vmem:[#allocation2 + $0x50] sm:$0xff]
      %v2992 = vld [vmem:[#allocation2 + $0x58] sm:$0xff]
      %v2993 = vld [vmem:[#allocation2 + $0x60] sm:$0xff]
      %v2994 = vld [vmem:[#allocation2 + $0x68] sm:$0xff]
      %v2995 = vld [vmem:[#allocation2 + $0x70] sm:$0xff]
      %v2996 = vld [vmem:[#allocation2 + $0x78] sm:$0xff]
      %v2997 = vld [vmem:[%s3] sm:$0x1]
      %v2999 = vlaneseq
      %v3000 = vshrl.u32 %v2999, 7
      %v3001 = vsub.s32 0, %v3000
      %v3002 = vrot.slane %v2997, %v3001
      %v3004 = vadd.f32 %v2981, %v3002
      %v3005 = vadd.f32 %v2982, %v3002
      %v3006 = vadd.f32 %v2983, %v3002
      %v3007 = vadd.f32 %v2984, %v3002
      %v3008 = vadd.f32 %v2985, %v3002
      %v3009 = vadd.f32 %v2986, %v3002
      %v3010 = vadd.f32 %v2987, %v3002
      %v3011 = vadd.f32 %v2988, %v3002
      %v3012 = vadd.f32 %v2989, %v3002
      %v3013 = vadd.f32 %v2990, %v3002
      %v3014 = vadd.f32 %v2991, %v3002
      %v3015 = vadd.f32 %v2992, %v3002
      %v3016 = vadd.f32 %v2993, %v3002
      %v3017 = vadd.f32 %v2994, %v3002
      %v3018 = vadd.f32 %v2995, %v3002
      %v3019 = vadd.f32 %v2996, %v3002
      %v3020 = vmax.f32 %v3004, 0.0
      %v3021 = vmax.f32 %v3005, 0.0
      %v3022 = vmax.f32 %v3006, 0.0
      %v3023 = vmax.f32 %v3007, 0.0
      %v3024 = vmax.f32 %v3008, 0.0
      %v3025 = vmax.f32 %v3009, 0.0
      %v3026 = vmax.f32 %v3010, 0.0
      %v3027 = vmax.f32 %v3011, 0.0
      %v3028 = vmax.f32 %v3012, 0.0
      %v3029 = vmax.f32 %v3013, 0.0
      %v3030 = vmax.f32 %v3014, 0.0
      %v3031 = vmax.f32 %v3015, 0.0
      %v3032 = vmax.f32 %v3016, 0.0
      %v3033 = vmax.f32 %v3017, 0.0
      %v3034 = vmax.f32 %v3018, 0.0
      %v3035 = vmax.f32 %v3019, 0.0
      %v3036 = vld [vmem:[%s4] sm:$0xff]
      %v3037 = vld [vmem:[%s4 + $0x8] sm:$0xff]
      %v3038 = vld [vmem:[%s4 + $0x10] sm:$0xff]
      %v3039 = vld [vmem:[%s4 + $0x18] sm:$0xff]
      %v3040 = vld [vmem:[%s4 + $0x20] sm:$0xff]
      %v3041 = vld [vmem:[%s4 + $0x28] sm:$0xff]
      %v3042 = vld [vmem:[%s4 + $0x30] sm:$0xff]
      %v3043 = vld [vmem:[%s4 + $0x38] sm:$0xff]
      %v3044 = vld [vmem:[%s4 + $0x40] sm:$0xff]
      %v3045 = vld [vmem:[%s4 + $0x48] sm:$0xff]
      %v3046 = vld [vmem:[%s4 + $0x50] sm:$0xff]
      %v3047 = vld [vmem:[%s4 + $0x58] sm:$0xff]
      %v3048 = vld [vmem:[%s4 + $0x60] sm:$0xff]
      %v3049 = vld [vmem:[%s4 + $0x68] sm:$0xff]
      %v3050 = vld [vmem:[%s4 + $0x70] sm:$0xff]
      %v3051 = vld [vmem:[%s4 + $0x78] sm:$0xff]
      %v3052 = vld [vmem:[%s5] sm:$0x1]
      %v3054 = vlaneseq
      %v3055 = vshrl.u32 %v3054, 7
      %v3056 = vsub.s32 0, %v3055
      %v3057 = vrot.slane %v3052, %v3056
      %3059 = vmatprep.subr.mxu0 0.0
      %3060 = vmatpush1.msra.mxu0 %v3036
      %3061 = vmatprep.subr.mxu0 0.0
      %3062 = vmatpush1.msra.mxu0 %v3037
      %3063 = vmatprep.subr.mxu0 0.0
      %3064 = vmatpush1.msra.mxu0 %v3038
      %3065 = vmatprep.subr.mxu0 0.0
      %3066 = vmatpush1.msra.mxu0 %v3039
      %3067 = vmatprep.subr.mxu0 0.0
      %3068 = vmatpush1.msra.mxu0 %v3040
      %3069 = vmatprep.subr.mxu0 0.0
      %3070 = vmatpush1.msra.mxu0 %v3041
      %3071 = vmatprep.subr.mxu0 0.0
      %3072 = vmatpush1.msra.mxu0 %v3042
      %3073 = vmatprep.subr.mxu0 0.0
      %3074 = vmatpush1.msra.mxu0 %v3043
      %3075 = vmatprep.subr.mxu0 0.0
      %3076 = vmatpush1.msra.mxu0 %v3044
      %3077 = vmatprep.subr.mxu0 0.0
      %3078 = vmatpush1.msra.mxu0 %v3045
      %3079 = vmatprep.subr.mxu0 0.0
      %3080 = vmatpush1.msra.mxu0 %v3046
      %3081 = vmatprep.subr.mxu0 0.0
      %3082 = vmatpush1.msra.mxu0 %v3047
      %3083 = vmatprep.subr.mxu0 0.0
      %3084 = vmatpush1.msra.mxu0 %v3048
      %3085 = vmatprep.subr.mxu0 0.0
      %3086 = vmatpush1.msra.mxu0 %v3049
      %3087 = vmatprep.subr.mxu0 0.0
      %3088 = vmatpush1.msra.mxu0 %v3050
      %3089 = vmatprep.subr.mxu0 0.0
      %3090 = vmatpush1.msra.mxu0 %v3051
      %3091 = vmatprep.subr.mxu0 0.0
      %3092 = vmatpush1.msra.mxu0 0.0
      %3093 = vmatprep.subr.mxu0 0.0
      %3094 = vmatpush1.msra.mxu0 0.0
      %3095 = vmatprep.subr.mxu0 0.0
      %3096 = vmatpush1.msra.mxu0 0.0
      %3097 = vmatprep.subr.mxu0 0.0
      %3098 = vmatpush1.msra.mxu0 0.0
      %3099 = vmatprep.subr.mxu0 0.0
      %3100 = vmatpush1.msra.mxu0 0.0
      %3101 = vmatprep.subr.mxu0 0.0
      %3102 = vmatpush1.msra.mxu0 0.0
      %3103 = vmatprep.subr.mxu0 0.0
      %3104 = vmatpush1.msra.mxu0 0.0
      %3105 = vmatprep.subr.mxu0 0.0
      %3106 = vmatpush1.msra.mxu0 0.0
      %3107 = vmatprep.subr.mxu0 0.0
      %3108 = vmatpush1.msra.mxu0 0.0
      %3109 = vmatprep.subr.mxu0 0.0
      %3110 = vmatpush1.msra.mxu0 0.0
      %3111 = vmatprep.subr.mxu0 0.0
      %3112 = vmatpush1.msra.mxu0 0.0
      %3113 = vmatprep.subr.mxu0 0.0
      %3114 = vmatpush1.msra.mxu0 0.0
      %3115 = vmatprep.subr.mxu0 0.0
      %3116 = vmatpush1.msra.mxu0 0.0
      %3117 = vmatprep.subr.mxu0 0.0
      %3118 = vmatpush1.msra.mxu0 0.0
      %3119 = vmatprep.subr.mxu0 0.0
      %3120 = vmatpush1.msra.mxu0 0.0
      %3121 = vmatprep.subr.mxu0 0.0
      %3122 = vmatpush1.msra.mxu0 0.0
      %3123 = vmatprep.mubr.f32.mxu0 0.0
      %3124 = vmatmul.mubr.f32.gmra.mrb[0].mxu0 %v3020
      %v3125 = vpop.f32.mrb[0].mxu0
      %v3126 = vadd.f32 %v3057, %v3125
      %v3127 = vpop.f32.mrb[0].mxu0
      %3128 = vmatprep.mubr.f32.mxu0 0.0
      %3129 = vmatmul.mubr.f32.gmra.mrb[0].mxu0 %v3021
      %v3130 = vpop.f32.mrb[0].mxu0
      %v3131 = vadd.f32 %v3057, %v3130
      %v3132 = vpop.f32.mrb[0].mxu0
      %3133 = vmatprep.mubr.f32.mxu0 0.0
      %3134 = vmatmul.mubr.f32.gmra.mrb[0].mxu0 %v3022
      %v3135 = vpop.f32.mrb[0].mxu0
      %v3136 = vadd.f32 %v3057, %v3135
      %v3137 = vpop.f32.mrb[0].mxu0
      %3138 = vmatprep.mubr.f32.mxu0 0.0
      %3139 = vmatmul.mubr.f32.gmra.mrb[0].mxu0 %v3023
      %v3140 = vpop.f32.mrb[0].mxu0
      %v3141 = vadd.f32 %v3057, %v3140
      %v3142 = vpop.f32.mrb[0].mxu0
      %3143 = vmatprep.mubr.f32.mxu0 0.0
      %3144 = vmatmul.mubr.f32.gmra.mrb[0].mxu0 %v3024
      %v3145 = vpop.f32.mrb[0].mxu0
      %v3146 = vadd.f32 %v3057, %v3145
      %v3147 = vpop.f32.mrb[0].mxu0
      %3148 = vmatprep.mubr.f32.mxu0 0.0
      %3149 = vmatmul.mubr.f32.gmra.mrb[0].mxu0 %v3025
      %v3150 = vpop.f32.mrb[0].mxu0
      %v3151 = vadd.f32 %v3057, %v3150
      %v3152 = vpop.f32.mrb[0].mxu0
      %3153 = vmatprep.mubr.f32.mxu0 0.0
      %3154 = vmatmul.mubr.f32.gmra.mrb[0].mxu0 %v3026
      %v3155 = vpop.f32.mrb[0].mxu0
      %v3156 = vadd.f32 %v3057, %v3155
      %v3157 = vpop.f32.mrb[0].mxu0
      %3158 = vmatprep.mubr.f32.mxu0 0.0
      %3159 = vmatmul.mubr.f32.gmra.mrb[0].mxu0 %v3027
      %v3160 = vpop.f32.mrb[0].mxu0
      %v3161 = vadd.f32 %v3057, %v3160
      %v3162 = vpop.f32.mrb[0].mxu0
      %3163 = vmatprep.mubr.f32.mxu0 0.0
      %3164 = vmatmul.mubr.f32.gmra.mrb[0].mxu0 %v3028
      %v3165 = vpop.f32.mrb[0].mxu0
      %v3166 = vadd.f32 %v3057, %v3165
      %v3167 = vpop.f32.mrb[0].mxu0
      %3168 = vmatprep.mubr.f32.mxu0 0.0
      %3169 = vmatmul.mubr.f32.gmra.mrb[0].mxu0 %v3029
      %v3170 = vpop.f32.mrb[0].mxu0
      %v3171 = vadd.f32 %v3057, %v3170
      %v3172 = vpop.f32.mrb[0].mxu0
      %3173 = vmatprep.mubr.f32.mxu0 0.0
      %3174 = vmatmul.mubr.f32.gmra.mrb[0].mxu0 %v3030
      %v3175 = vpop.f32.mrb[0].mxu0
      %v3176 = vadd.f32 %v3057, %v3175
      %v3177 = vpop.f32.mrb[0].mxu0
      %3178 = vmatprep.mubr.f32.mxu0 0.0
      %3179 = vmatmul.mubr.f32.gmra.mrb[0].mxu0 %v3031
      %v3180 = vpop.f32.mrb[0].mxu0
      %v3181 = vadd.f32 %v3057, %v3180
      %v3182 = vpop.f32.mrb[0].mxu0
      %3183 = vmatprep.mubr.f32.mxu0 0.0
      %3184 = vmatmul.mubr.f32.gmra.mrb[0].mxu0 %v3032
      %v3185 = vpop.f32.mrb[0].mxu0
      %v3186 = vadd.f32 %v3057, %v3185
      %v3187 = vpop.f32.mrb[0].mxu0
      %3188 = vmatprep.mubr.f32.mxu0 0.0
      %3189 = vmatmul.mubr.f32.gmra.mrb[0].mxu0 %v3033
      %v3190 = vpop.f32.mrb[0].mxu0
      %v3191 = vadd.f32 %v3057, %v3190
      %v3192 = vpop.f32.mrb[0].mxu0
      %3193 = vmatprep.mubr.f32.mxu0 0.0
      %3194 = vmatmul.mubr.f32.gmra.mrb[0].mxu0 %v3034
      %v3195 = vpop.f32.mrb[0].mxu0
      %v3196 = vadd.f32 %v3057, %v3195
      %v3197 = vpop.f32.mrb[0].mxu0
      %3198 = vmatprep.mubr.f32.mxu0 0.0
      %3199 = vmatmul.mubr.f32.gmra.mrb[0].mxu0 %v3035
      %v3200 = vpop.f32.mrb[0].mxu0
      %v3201 = vadd.f32 %v3057, %v3200
      %v3202 = vpop.f32.mrb[0].mxu0
      %3203 = vdwg.mxu0
      %v3204 = vlaneseq
      %v3205 = vand.u32 %v3204, 127
      %vm3206 = vcmp.eq.s32.totalorder %v3205, 0
      %v3207 = vxor.u32 %v3126, 2147483648
      %v3208 = vxor.u32 %v3131, 2147483648
      %v3209 = vxor.u32 %v3136, 2147483648
      %v3210 = vxor.u32 %v3141, 2147483648
      %v3211 = vxor.u32 %v3146, 2147483648
      %v3212 = vxor.u32 %v3151, 2147483648
      %v3213 = vxor.u32 %v3156, 2147483648
      %v3214 = vxor.u32 %v3161, 2147483648
      %v3215 = vxor.u32 %v3166, 2147483648
      %v3216 = vxor.u32 %v3171, 2147483648
      %v3217 = vxor.u32 %v3176, 2147483648
      %v3218 = vxor.u32 %v3181, 2147483648
      %v3219 = vxor.u32 %v3186, 2147483648
      %v3220 = vxor.u32 %v3191, 2147483648
      %v3221 = vxor.u32 %v3196, 2147483648
      %v3222 = vxor.u32 %v3201, 2147483648
      %v3223 = vmul.f32 %v3207, 1.442695
      %v3224 = vpow.pop %v3223
      %v3225 = vmul.f32 %v3208, 1.442695
      %v3226 = vpow.pop %v3225
      %v3227 = vmul.f32 %v3209, 1.442695
      %v3228 = vpow.pop %v3227
      %v3229 = vmul.f32 %v3210, 1.442695
      %v3230 = vpow.pop %v3229
      %v3231 = vmul.f32 %v3211, 1.442695
      %v3232 = vpow.pop %v3231
      %v3233 = vmul.f32 %v3212, 1.442695
      %v3234 = vpow.pop %v3233
      %v3235 = vmul.f32 %v3213, 1.442695
      %v3236 = vpow.pop %v3235
      %v3237 = vmul.f32 %v3214, 1.442695
      %v3238 = vpow.pop %v3237
      %v3239 = vmul.f32 %v3215, 1.442695
      %v3240 = vpow.pop %v3239
      %v3241 = vmul.f32 %v3216, 1.442695
      %v3242 = vpow.pop %v3241
      %v3243 = vmul.f32 %v3217, 1.442695
      %v3244 = vpow.pop %v3243
      %v3245 = vmul.f32 %v3218, 1.442695
      %v3246 = vpow.pop %v3245
      %v3247 = vmul.f32 %v3219, 1.442695
      %v3248 = vpow.pop %v3247
      %v3249 = vmul.f32 %v3220, 1.442695
      %v3250 = vpow.pop %v3249
      %v3251 = vmul.f32 %v3221, 1.442695
      %v3252 = vpow.pop %v3251
      %v3253 = vmul.f32 %v3222, 1.442695
      %v3254 = vpow.pop %v3253
      %v3255 = vadd.f32 %v3224, 1.0
      %v3256 = vadd.f32 %v3226, 1.0
      %v3257 = vadd.f32 %v3228, 1.0
      %v3258 = vadd.f32 %v3230, 1.0
      %v3259 = vadd.f32 %v3232, 1.0
      %v3260 = vadd.f32 %v3234, 1.0
      %v3261 = vadd.f32 %v3236, 1.0
      %v3262 = vadd.f32 %v3238, 1.0
      %v3263 = vadd.f32 %v3240, 1.0
      %v3264 = vadd.f32 %v3242, 1.0
      %v3265 = vadd.f32 %v3244, 1.0
      %v3266 = vadd.f32 %v3246, 1.0
      %v3267 = vadd.f32 %v3248, 1.0
      %v3268 = vadd.f32 %v3250, 1.0
      %v3269 = vadd.f32 %v3252, 1.0
      %v3270 = vadd.f32 %v3254, 1.0
      %v3271 = vrcp.pop %v3255
      %v3272 = vmul.f32 1.0, %v3271
      %v3273 = vrcp.pop %v3256
      %v3274 = vmul.f32 1.0, %v3273
      %v3275 = vrcp.pop %v3257
      %v3276 = vmul.f32 1.0, %v3275
      %v3277 = vrcp.pop %v3258
      %v3278 = vmul.f32 1.0, %v3277
      %v3279 = vrcp.pop %v3259
      %v3280 = vmul.f32 1.0, %v3279
      %v3281 = vrcp.pop %v3260
      %v3282 = vmul.f32 1.0, %v3281
      %v3283 = vrcp.pop %v3261
      %v3284 = vmul.f32 1.0, %v3283
      %v3285 = vrcp.pop %v3262
      %v3286 = vmul.f32 1.0, %v3285
      %v3287 = vrcp.pop %v3263
      %v3288 = vmul.f32 1.0, %v3287
      %v3289 = vrcp.pop %v3264
      %v3290 = vmul.f32 1.0, %v3289
      %v3291 = vrcp.pop %v3265
      %v3292 = vmul.f32 1.0, %v3291
      %v3293 = vrcp.pop %v3266
      %v3294 = vmul.f32 1.0, %v3293
      %v3295 = vrcp.pop %v3267
      %v3296 = vmul.f32 1.0, %v3295
      %v3297 = vrcp.pop %v3268
      %v3298 = vmul.f32 1.0, %v3297
      %v3299 = vrcp.pop %v3269
      %v3300 = vmul.f32 1.0, %v3299
      %v3301 = vrcp.pop %v3270
      %v3302 = vmul.f32 1.0, %v3301
      %v3303 = vsel %vm3206, %v3272, %v3126
      %v3304 = vsel %vm3206, %v3274, %v3131
      %v3305 = vsel %vm3206, %v3276, %v3136
      %v3306 = vsel %vm3206, %v3278, %v3141
      %v3307 = vsel %vm3206, %v3280, %v3146
      %v3308 = vsel %vm3206, %v3282, %v3151
      %v3309 = vsel %vm3206, %v3284, %v3156
      %v3310 = vsel %vm3206, %v3286, %v3161
      %v3311 = vsel %vm3206, %v3288, %v3166
      %v3312 = vsel %vm3206, %v3290, %v3171
      %v3313 = vsel %vm3206, %v3292, %v3176
      %v3314 = vsel %vm3206, %v3294, %v3181
      %v3315 = vsel %vm3206, %v3296, %v3186
      %v3316 = vsel %vm3206, %v3298, %v3191
      %v3317 = vsel %vm3206, %v3300, %v3196
      %v3318 = vsel %vm3206, %v3302, %v3201
      %vm3319 = vcmask 23552
      %3320 = vst.msk [vmem:[%s295] sm:$0xff] %vm3319, %v3303
      %3321 = vst.msk [vmem:[%s295 + $0x8] sm:$0xff] %vm3319, %v3304
      %3322 = vst.msk [vmem:[%s295 + $0x10] sm:$0xff] %vm3319, %v3305
      %3323 = vst.msk [vmem:[%s295 + $0x18] sm:$0xff] %vm3319, %v3306
      %3324 = vst.msk [vmem:[%s295 + $0x20] sm:$0xff] %vm3319, %v3307
      %3325 = vst.msk [vmem:[%s295 + $0x28] sm:$0xff] %vm3319, %v3308
      %3326 = vst.msk [vmem:[%s295 + $0x30] sm:$0xff] %vm3319, %v3309
      %3327 = vst.msk [vmem:[%s295 + $0x38] sm:$0xff] %vm3319, %v3310
      %3328 = vst.msk [vmem:[%s295 + $0x40] sm:$0xff] %vm3319, %v3311
      %3329 = vst.msk [vmem:[%s295 + $0x48] sm:$0xff] %vm3319, %v3312
      %3330 = vst.msk [vmem:[%s295 + $0x50] sm:$0xff] %vm3319, %v3313
      %3331 = vst.msk [vmem:[%s295 + $0x58] sm:$0xff] %vm3319, %v3314
      %3332 = vst.msk [vmem:[%s295 + $0x60] sm:$0xff] %vm3319, %v3315
      %3333 = vst.msk [vmem:[%s295 + $0x68] sm:$0xff] %vm3319, %v3316
      %3334 = vst.msk [vmem:[%s295 + $0x70] sm:$0xff] %vm3319, %v3317
      %3335 = vst.msk [vmem:[%s295 + $0x78] sm:$0xff] %vm3319, %v3318
      %s3336 = smul.u32 16, %s22
      %p3337 = scmp.lt.s32.totalorder %s21, 1
      %s3338 = scalar_select %p3337, %s21, 1
      %p3339 = scmp.lt.s32.totalorder %s3336, 31
      %s3340 = scalar_select %p3339, %s3336, 31
      %s3341 = smul.addr %s3338, 32
      %s3342 = sadd.s32 %s3340, %s3341
      %s3343 = smul.addr %s3342, 8
      %s3344 = scalar_lea.vmem %s6, %s3343
      // Predicated region
      $region45: #{tpu_custom_call.1} parent=43 // pred_check
        %p3345 = pneg %p185
      $region46: #{tpu_custom_call.1} parent=43 // pred_check_branch
        %3347 = sbr.rel (%p3345) target = $region48
      $region47: #{tpu_custom_call.1} parent=43 // pred_region
        %s3348 = smul.u32 16, %s22
      $region48: #{tpu_custom_call.1} parent=43 // pred_fallthru
        _
    $region44: #{tpu_custom_call.1} parent=5 // pred_fallthru
      _
    %p3349 = scmp.le.s32.totalorder 2, %s12
    // Predicated region
    $region49: #{tpu_custom_call.1} parent=5 // pred_check
      %p3350 = pneg %p3349
    $region50: #{tpu_custom_call.1} parent=5 // pred_check_branch
      %3352 = sbr.rel (%p3350) target = $region52
    $region51: #{tpu_custom_call.1} parent=5 // pred_region
      %s3353 = ssub.s32 %s12, 2
      // Predicated region
      $region53: #{tpu_custom_call.1} parent=51 // pred_check
        %p3354 = pneg %p191
      $region54: #{tpu_custom_call.1} parent=51 // pred_check_branch
        %3356 = sbr.rel (%p3354) target = $region56
      $region55: #{tpu_custom_call.1} parent=51 // pred_region
        %s3357 = smul.u32 16, %s24
        %p3358 = scmp.lt.s32.totalorder %s23, 1
        %s3359 = scalar_select %p3358, %s23, 1
        %p3360 = scmp.lt.s32.totalorder %s3357, 31
        %s3361 = scalar_select %p3360, %s3357, 31
        %s3362 = smul.addr %s3359, 32
        %s3363 = sadd.s32 %s3361, %s3362
        %s3364 = smul.addr %s3363, 8
        %s3365 = scalar_lea.vmem %s6, %s3364
      $region56: #{tpu_custom_call.1} parent=51 // pred_fallthru
        _
    $region52: #{tpu_custom_call.1} parent=5 // pred_fallthru
      _
  $region6: #{tpu_custom_call.1} parent=0 // loop_footer
    %s16 = sadd.s32 1, %s12
  $region7: #{tpu_custom_call.1} parent=0 // loop_footer_branch
    %11 = sbr.rel target = $region3
  $region8: #{tpu_custom_call.1} parent=0 // loop_exit
    _

</llo_original>
